<compile_context>
chip_gen: v7x
topology: tpu7x:2x2x1
jax: 0.10.0
libtpu: 0.0.40
codegen_flags: <defaults>
</compile_context>

<pallas_src>
import jax
import jax.numpy as jnp
from jax.experimental import pallas as pl
from jax.experimental.pallas import tpu as pltpu

# ----------------------------- problem sizes ---------------------------------
B = 2             # batch
FEAT = 16         # feat
NCLASSES = 10
NLOGIT_PAD = 128  # lane-dense padded logits block
NV4 = 128         # "icosphere_4" vertices (synthetic small size)
NV3 = 32          # "icosphere_3" vertices
NV2 = 8           # "icosphere_2" vertices
BN_EPS = 1e-5
NEG_INF = -1e30   # pad bias so padded logits vanish under softmax


# ------------------------------ fused kernel ---------------------------------
def _fused_model_kernel(
        x_ref,                                    # (1, NV4, 1)   input [V, Cin=1]
        ops4_ref, ops3_ref, ops2_ref,             # (3V, V)       stacked operators
        w_in_ref, b_in_ref,                       # (4, F), (1, F)  in_block (BN folded)
        w1a_ref, b1a_ref, wma_ref, bma_ref,       # block1: conv1 / MeshConv (stacked-K)
        w3a_ref, b3a_ref, wsa_ref, bsa_ref,       # block1: conv3 / skip conv_
        w1b_ref, b1b_ref, wmb_ref, bmb_ref,       # block2: conv1 / MeshConv (stacked-K)
        w3b_ref, b3b_ref, wsb_ref, bsb_ref,       # block2: conv3 / skip conv_
        wout_ref, bout_ref,                       # head Linear (1/V folded, lane-padded)
        o_ref):                                   # (1, 1, NLOGIT_PAD)
    dot = lambda a, b: jnp.dot(a, b, preferred_element_type=jnp.float32)

    # ---------------- in_block: MeshConv(1 -> feat) @ level 4 ----------------
    # Activations are vertex-major [V, C] so the channel axis sits in lanes at
    # the coarse levels.
    x_col = x_ref[0]                              # [V4, 1]
    der = dot(ops4_ref[...], x_col)               # ONE MXU push: [3*V4, 1]
    lap = der[0:NV4]
    gew = der[NV4:2 * NV4]
    gns = der[2 * NV4:3 * NV4]
    w_in = w_in_ref[...]                          # [4, feat]  (BN already folded)
    # Cin == 1: keep the K=1 coefficient contraction on the VPU (broadcasted
    # outer products) instead of issuing K=1 MXU pushes.
    h = (x_col * w_in[0:1, :] + lap * w_in[1:2, :]
         + gew * w_in[2:3, :] + gns * w_in[3:4, :]) + b_in_ref[...]
    h = jnp.maximum(h, 0.0)                       # [V4, feat]  (bn + relu folded)

    # ---------------- ResBlock (coarsen=True, diff_chan=True) ----------------
    def res_block(xin, nv, neck, ops_ref, w1_ref, b1_ref, wm_ref, bm_ref,
                  w3_ref, b3_ref, ws_ref, bs_ref):
        xd = xin[:nv, :]                          # DownSamp: vertex truncation
        # seq2 = conv_ -> DownSamp -> bn_   (1x1 conv commutes with the slice)
        skip = dot(xd, ws_ref[...]) + bs_ref[...]            # [nv, out]
        # seq1: conv1 + bn1 + relu
        y = jnp.maximum(dot(xd, w1_ref[...]) + b1_ref[...], 0.0)   # [nv, neck]
        # MeshConv: one stacked-operator matmul, then a sum of four dots
        # against the k-ordered weight slabs [x, lap, gew, gns] (no lane-axis
        # concat, partial sums stay in f32 accumulators).
        der = dot(ops_ref[...], y)                            # [3*nv, neck]
        lp = der[0:nv]
        ge = der[nv:2 * nv]
        gn = der[2 * nv:3 * nv]
        z = (dot(y,  wm_ref[0 * neck:1 * neck, :])
             + dot(lp, wm_ref[1 * neck:2 * neck, :])
             + dot(ge, wm_ref[2 * neck:3 * neck, :])
             + dot(gn, wm_ref[3 * neck:4 * neck, :]))
        y = jnp.maximum(z + bm_ref[...], 0.0)                 # + bn2 + relu
        y = dot(y, w3_ref[...]) + b3_ref[...]                 # conv3 + bn3
        return jnp.maximum(y + skip, 0.0)                     # relu(seq1 + seq2)

    h = res_block(h, NV3, FEAT, ops3_ref, w1a_ref, b1a_ref, wma_ref, bma_ref,
                  w3a_ref, b3a_ref, wsa_ref, bsa_ref)         # [NV3, 4*feat]
    h = res_block(h, NV2, 4 * FEAT, ops2_ref, w1b_ref, b1b_ref, wmb_ref,
                  bmb_ref, w3b_ref, b3b_ref, wsb_ref, bsb_ref)  # [NV2, 16*feat]

    # ---------------- head: AvgPool1d + Linear + log_softmax -----------------
    # TODO(synk): F.dropout is eval-mode identity (no RNG dropout).
    # Pool as a ones-vector matmul (MXU) instead of an XLU cross-sublane sum;
    # the 1/V factor is folded into wout.
    pooled = dot(jnp.ones((1, NV2), jnp.float32), h)          # [1, 16*feat]
    logits = dot(pooled, wout_ref[...]) + bout_ref[...]       # [1, 128] padded
    m = jnp.max(logits, axis=-1, keepdims=True)
    s = logits - m
    lse = jnp.log(jnp.sum(jnp.exp(s), axis=-1, keepdims=True))
    o_ref[0] = s - lse


def _zero_index_map(ndim):
    return lambda b: (0,) * ndim


@jax.jit
def model_forward(x, kp):
    """x: [B, 1, NV4] (PyTorch NCW layout).  Returns log-probs [B, NCLASSES]."""
    bn = x.shape[0]
    # Cin == 1, so [B, 1, V] -> [B, V, 1] is a pure reshape (vertex-major layout).
    x_vc = x.reshape(bn, NV4, 1)
    consts = (kp['ops4_st'], kp['ops3_st'], kp['ops2_st'], kp['w_in'], kp['b_in'],
              *kp['block1'], *kp['block2'], kp['w_out_pad'], kp['b_out_pad'])
    in_specs = [pl.BlockSpec((1, NV4, 1), lambda b: (b, 0, 0))]
    in_specs += [pl.BlockSpec(c.shape, _zero_index_map(c.ndim)) for c in consts]
    out = pl.pallas_call(
        _fused_model_kernel,
        out_shape=jax.ShapeDtypeStruct((bn, 1, NLOGIT_PAD), jnp.float32),
        grid=(bn,),                    # batch only; everything else fused inside
        in_specs=in_specs,
        out_specs=pl.BlockSpec((1, 1, NLOGIT_PAD), lambda b: (b, 0, 0)),
        compiler_params=pltpu.CompilerParams(
            dimension_semantics=("parallel",)),   # v7x: 2 TCs split the batch
    )(x_vc, *consts)
    return out.reshape(bn, NLOGIT_PAD)[:, :NCLASSES]


# --------------------- parameter init (raw, torch-like) ----------------------
def init_raw_params(key):
    keys = iter(jax.random.split(key, 64))
    nk = lambda: next(keys)

    def winit(shape, s=0.2):
        return s * jax.random.normal(nk(), shape, jnp.float32)

    def bn_params(c):
        return dict(
            gamma=1.0 + 0.1 * jax.random.normal(nk(), (c,), jnp.float32),
            beta=0.1 * jax.random.normal(nk(), (c,), jnp.float32),
            mean=0.1 * jax.random.normal(nk(), (c,), jnp.float32),
            var=jax.random.uniform(nk(), (c,), jnp.float32, 0.5, 1.5))

    def conv_params(cin, cout):
        return dict(w=winit((cout, cin)), b=winit((cout,)))

    def block_params(in_c, neck_c, out_c):
        return dict(conv1=conv_params(in_c, neck_c), bn1=bn_params(neck_c),
                    coeffs=winit((neck_c, neck_c, 4)), mesh_b=winit((neck_c,)),
                    bn2=bn_params(neck_c),
                    conv3=conv_params(neck_c, out_c), bn3=bn_params(out_c),
                    conv_=conv_params(in_c, out_c), bn_=bn_params(out_c))

    return dict(
        # TODO(synk): synthetic dense stand-ins for the sparse icosphere
        #             Laplacian / gradient operators loaded from icosphere_*.pkl.
        ops4=winit((3, NV4, NV4), 0.08),
        ops3=winit((3, NV3, NV3), 0.08),
        ops2=winit((3, NV2, NV2), 0.08),
        in_coeffs=winit((FEAT, 1, 4)), in_mesh_b=winit((FEAT,)),
        in_bn=bn_params(FEAT),
        block1=block_params(FEAT, FEAT, 4 * FEAT),
        block2=block_params(4 * FEAT, 4 * FEAT, 16 * FEAT),
        out_w=winit((NCLASSES, 16 * FEAT)), out_b=winit((NCLASSES,)))


# ------------------- fold BN/bias into kernel-layout weights -----------------
def _bn_scale_shift(bn):
    scale = bn['gamma'] / jnp.sqrt(bn['var'] + BN_EPS)
    shift = bn['beta'] - bn['mean'] * scale
    return scale, shift


def _fold_conv(conv, bn):
    # Conv1d(k=1) -> BatchNorm1d(eval) folded; laid out for  y_vc = x_vc @ Wt + b.
    scale, shift = _bn_scale_shift(bn)
    return conv['w'].T * scale[None, :], (scale * conv['b'] + shift)[None, :]


def _fold_mesh(coeffs, mesh_b, bn):
    # MeshConv coeffs [Cout, Cin, 4] -> stacked-K weight [4*Cin, Cout]; rows
    # k*Cin:(k+1)*Cin act on feature k of [x | lap | gew | gns].  The kernel
    # contracts the four slabs as a SUM of dots (same k-ordering).  Eval-mode
    # BatchNorm affine is folded in.
    scale, shift = _bn_scale_shift(bn)
    wt = jnp.concatenate([coeffs[:, :, k].T for k in range(4)], axis=0)
    return wt * scale[None, :], (scale * mesh_b + shift)[None, :]


def prepare_kernel_params(raw):
    def block(bp):
        w1t, b1 = _fold_conv(bp['conv1'], bp['bn1'])
        wmt, bm = _fold_mesh(bp['coeffs'], bp['mesh_b'], bp['bn2'])
        w3t, b3 = _fold_conv(bp['conv3'], bp['bn3'])
        wst, bs = _fold_conv(bp['conv_'], bp['bn_'])
        return (w1t, b1, wmt, bm, w3t, b3, wst, bs)

    scale, shift = _bn_scale_shift(raw['in_bn'])

    # Head: AvgPool1d(V) folded into the Linear weight (1/V), then lane-padded
    # to 128 output columns; padded bias is -1e30 so padded logits contribute
    # nothing to the softmax.
    w_out_t = raw['out_w'].T / float(NV2)                       # [256, 10]
    w_out_pad = jnp.zeros((16 * FEAT, NLOGIT_PAD), jnp.float32)
    w_out_pad = w_out_pad.at[:, :NCLASSES].set(w_out_t)
    b_out_pad = jnp.full((1, NLOGIT_PAD), NEG_INF, jnp.float32)
    b_out_pad = b_out_pad.at[0, :NCLASSES].set(raw['out_b'])

    return dict(
        # Operators stacked [lap; gew; gns] along rows -> one matmul per level.
        ops4_st=raw['ops4'].reshape(3 * NV4, NV4),
        ops3_st=raw['ops3'].reshape(3 * NV3, NV3),
        ops2_st=raw['ops2'].reshape(3 * NV2, NV2),
        # in_block has Cin == 1: the 4 coefficients per output channel become a
        # [4, feat] table used by the in-kernel VPU broadcast combine.
        w_in=raw['in_coeffs'][:, 0, :].T * scale[None, :],
        b_in=(scale * raw['in_mesh_b'] + shift)[None, :],
        block1=block(raw['block1']),
        block2=block(raw['block2']),
        w_out_pad=w_out_pad,
        b_out_pad=b_out_pad)


# -------------------------- pure-JAX reference -------------------------------
def _bn_eval_ref(x_bcv, bn):
    scale, shift = _bn_scale_shift(bn)
    return x_bcv * scale[None, :, None] + shift[None, :, None]


def _conv1x1_ref(x_bcv, conv):
    return jnp.einsum('oc,bcv->bov', conv['w'], x_bcv) + conv['b'][None, :, None]


def _meshconv_ref(x_bcv, ops, coeffs, mesh_b):
    lap = jnp.einsum('uv,bcv->bcu', ops[0], x_bcv)
    gew = jnp.einsum('uv,bcv->bcu', ops[1], x_bcv)
    gns = jnp.einsum('uv,bcv->bcu', ops[2], x_bcv)
    feats = jnp.stack([x_bcv, lap, gew, gns], axis=-1)        # [B, Cin, V, 4]
    return jnp.einsum('oik,bivk->bov', coeffs, feats) + mesh_b[None, :, None]


def _res_block_ref(x, bp, ops, nv_prev):
    # seq2 = conv_ -> DownSamp -> bn_ ; the pointwise conv commutes with the
    # vertex slice, so slice first (same result).
    xd = x[..., :nv_prev]
    x2 = _bn_eval_ref(_conv1x1_ref(xd, bp['conv_']), bp['bn_'])
    h = jax.nn.relu(_bn_eval_ref(_conv1x1_ref(xd, bp['conv1']), bp['bn1']))
    h = jax.nn.relu(_bn_eval_ref(
        _meshconv_ref(h, ops, bp['coeffs'], bp['mesh_b']), bp['bn2']))
    h = _bn_eval_ref(_conv1x1_ref(h, bp['conv3']), bp['bn3'])
    return jax.nn.relu(h + x2)


def model_forward_ref(x, raw):
    h = jax.nn.relu(_bn_eval_ref(
        _meshconv_ref(x, raw['ops4'], raw['in_coeffs'], raw['in_mesh_b']),
        raw['in_bn']))
    h = _res_block_ref(h, raw['block1'], raw['ops3'], NV3)
    h = _res_block_ref(h, raw['block2'], raw['ops2'], NV2)
    pooled = jnp.mean(h, axis=-1)
    logits = pooled @ raw['out_w'].T + raw['out_b'][None, :]
    return jax.nn.log_softmax(logits, axis=-1)


# ------------------------------------ main -----------------------------------
if __name__ == "__main__":
    key_p, key_x = jax.random.split(jax.random.PRNGKey(0))
    raw = init_raw_params(key_p)
    kparams = prepare_kernel_params(raw)
    x = jax.random.normal(key_x, (B, 1, NV4), jnp.float32)    # [B, C=1, V]

    out = jax.block_until_ready(model_forward(x, kparams))

    assert out.shape == (B, NCLASSES), out.shape
    assert bool(jnp.all(jnp.isfinite(out)))
    # rows of log_softmax should exp-sum to 1
    assert bool(jnp.allclose(jnp.sum(jnp.exp(out), axis=1), 1.0, atol=1e-4))

    with jax.default_matmul_precision("highest"):
        ref = model_forward_ref(x, raw)
    assert bool(jnp.allclose(out, ref, atol=3e-2, rtol=3e-2)), \
        float(jnp.max(jnp.abs(out - ref)))

    print("KERNEL_OK")
</pallas_src>

<mosaic_0001>
module attributes {stable_mosaic.version = 11 : i64} {
  func.func @_fused_model_kernel(%arg0: i32, %arg1: memref<1x128x1xf32, #tpu.memory_space<vmem>>, %arg2: memref<384x128xf32, #tpu.memory_space<vmem>>, %arg3: memref<96x32xf32, #tpu.memory_space<vmem>>, %arg4: memref<24x8xf32, #tpu.memory_space<vmem>>, %arg5: memref<4x16xf32, #tpu.memory_space<vmem>>, %arg6: memref<1x16xf32, #tpu.memory_space<vmem>>, %arg7: memref<16x16xf32, #tpu.memory_space<vmem>>, %arg8: memref<1x16xf32, #tpu.memory_space<vmem>>, %arg9: memref<64x16xf32, #tpu.memory_space<vmem>>, %arg10: memref<1x16xf32, #tpu.memory_space<vmem>>, %arg11: memref<16x64xf32, #tpu.memory_space<vmem>>, %arg12: memref<1x64xf32, #tpu.memory_space<vmem>>, %arg13: memref<16x64xf32, #tpu.memory_space<vmem>>, %arg14: memref<1x64xf32, #tpu.memory_space<vmem>>, %arg15: memref<64x64xf32, #tpu.memory_space<vmem>>, %arg16: memref<1x64xf32, #tpu.memory_space<vmem>>, %arg17: memref<256x64xf32, #tpu.memory_space<vmem>>, %arg18: memref<1x64xf32, #tpu.memory_space<vmem>>, %arg19: memref<64x256xf32, #tpu.memory_space<vmem>>, %arg20: memref<1x256xf32, #tpu.memory_space<vmem>>, %arg21: memref<64x256xf32, #tpu.memory_space<vmem>>, %arg22: memref<1x256xf32, #tpu.memory_space<vmem>>, %arg23: memref<256x128xf32, #tpu.memory_space<vmem>>, %arg24: memref<1x128xf32, #tpu.memory_space<vmem>>, %arg25: memref<1x1x128xf32, #tpu.memory_space<vmem>>) attributes {dimension_semantics = [#tpu.dimension_semantics<parallel>], iteration_bounds = array<i64: 2>, scalar_prefetch = 0 : i64, scratch_operands = 0 : i64, tpu.core_type = #tpu.core_type<tc>, window_params = [{transform_indices = @transform_0, window_bounds = array<i64: 1, 128, 1>}, {pipeline_mode = #tpu.pipeline_mode<synchronous>, transform_indices = @transform_1, window_bounds = array<i64: 384, 128>}, {pipeline_mode = #tpu.pipeline_mode<synchronous>, transform_indices = @transform_2, window_bounds = array<i64: 96, 32>}, {pipeline_mode = #tpu.pipeline_mode<synchronous>, transform_indices = @transform_3, window_bounds = array<i64: 24, 8>}, {pipeline_mode = #tpu.pipeline_mode<synchronous>, transform_indices = @transform_4, window_bounds = array<i64: 4, 16>}, {pipeline_mode = #tpu.pipeline_mode<synchronous>, transform_indices = @transform_5, window_bounds = array<i64: 1, 16>}, {pipeline_mode = #tpu.pipeline_mode<synchronous>, transform_indices = @transform_6, window_bounds = array<i64: 16, 16>}, {pipeline_mode = #tpu.pipeline_mode<synchronous>, transform_indices = @transform_7, window_bounds = array<i64: 1, 16>}, {pipeline_mode = #tpu.pipeline_mode<synchronous>, transform_indices = @transform_8, window_bounds = array<i64: 64, 16>}, {pipeline_mode = #tpu.pipeline_mode<synchronous>, transform_indices = @transform_9, window_bounds = array<i64: 1, 16>}, {pipeline_mode = #tpu.pipeline_mode<synchronous>, transform_indices = @transform_10, window_bounds = array<i64: 16, 64>}, {pipeline_mode = #tpu.pipeline_mode<synchronous>, transform_indices = @transform_11, window_bounds = array<i64: 1, 64>}, {pipeline_mode = #tpu.pipeline_mode<synchronous>, transform_indices = @transform_12, window_bounds = array<i64: 16, 64>}, {pipeline_mode = #tpu.pipeline_mode<synchronous>, transform_indices = @transform_13, window_bounds = array<i64: 1, 64>}, {pipeline_mode = #tpu.pipeline_mode<synchronous>, transform_indices = @transform_14, window_bounds = array<i64: 64, 64>}, {pipeline_mode = #tpu.pipeline_mode<synchronous>, transform_indices = @transform_15, window_bounds = array<i64: 1, 64>}, {pipeline_mode = #tpu.pipeline_mode<synchronous>, transform_indices = @transform_16, window_bounds = array<i64: 256, 64>}, {pipeline_mode = #tpu.pipeline_mode<synchronous>, transform_indices = @transform_17, window_bounds = array<i64: 1, 64>}, {pipeline_mode = #tpu.pipeline_mode<synchronous>, transform_indices = @transform_18, window_bounds = array<i64: 64, 256>}, {pipeline_mode = #tpu.pipeline_mode<synchronous>, transform_indices = @transform_19, window_bounds = array<i64: 1, 256>}, {pipeline_mode = #tpu.pipeline_mode<synchronous>, transform_indices = @transform_20, window_bounds = array<i64: 64, 256>}, {pipeline_mode = #tpu.pipeline_mode<synchronous>, transform_indices = @transform_21, window_bounds = array<i64: 1, 256>}, {pipeline_mode = #tpu.pipeline_mode<synchronous>, transform_indices = @transform_22, window_bounds = array<i64: 256, 128>}, {pipeline_mode = #tpu.pipeline_mode<synchronous>, transform_indices = @transform_23, window_bounds = array<i64: 1, 128>}, {transform_indices = @transform_24, window_bounds = array<i64: 1, 1, 128>}]} {
    %c0 = arith.constant 0 : index
    %c0_0 = arith.constant 0 : index
    %c0_1 = arith.constant 0 : index
    %0 = vector.load %arg1[%c0, %c0_0, %c0_1] : memref<1x128x1xf32, #tpu.memory_space<vmem>>, vector<1x128x1xf32>
    %1 = vector.shape_cast %0 : vector<1x128x1xf32> to vector<128x1xf32>
    %c0_2 = arith.constant 0 : index
    %c0_3 = arith.constant 0 : index
    %2 = vector.load %arg2[%c0_2, %c0_3] : memref<384x128xf32, #tpu.memory_space<vmem>>, vector<384x128xf32>
    %cst = arith.constant dense<0.000000e+00> : vector<384x1xf32>
    %3 = tpu.matmul %2, %1, %cst {dimension_numbers = #tpu.dot_dimension_numbers<[1], [0], [0], [1], [0, 0, 1, 1], [], []>} : vector<384x128xf32>, vector<128x1xf32>, vector<384x1xf32> -> vector<384x1xf32>
    %4 = vector.extract_strided_slice %3 {offsets = [0, 0], sizes = [128, 1], strides = [1, 1]} : vector<384x1xf32> to vector<128x1xf32>
    %5 = vector.extract_strided_slice %3 {offsets = [128, 0], sizes = [128, 1], strides = [1, 1]} : vector<384x1xf32> to vector<128x1xf32>
    %6 = vector.extract_strided_slice %3 {offsets = [256, 0], sizes = [128, 1], strides = [1, 1]} : vector<384x1xf32> to vector<128x1xf32>
    %c0_4 = arith.constant 0 : index
    %c0_5 = arith.constant 0 : index
    %7 = vector.load %arg5[%c0_4, %c0_5] : memref<4x16xf32, #tpu.memory_space<vmem>>, vector<4x16xf32>
    %8 = vector.extract_strided_slice %7 {offsets = [0, 0], sizes = [1, 16], strides = [1, 1]} : vector<4x16xf32> to vector<1x16xf32>
    %9 = vector.broadcast %1 : vector<128x1xf32> to vector<128x16xf32>
    %10 = vector.broadcast %8 : vector<1x16xf32> to vector<128x16xf32>
    %11 = arith.mulf %9, %10 : vector<128x16xf32>
    %12 = vector.extract_strided_slice %7 {offsets = [1, 0], sizes = [1, 16], strides = [1, 1]} : vector<4x16xf32> to vector<1x16xf32>
    %13 = vector.broadcast %4 : vector<128x1xf32> to vector<128x16xf32>
    %14 = vector.broadcast %12 : vector<1x16xf32> to vector<128x16xf32>
    %15 = arith.mulf %13, %14 : vector<128x16xf32>
    %16 = arith.addf %11, %15 : vector<128x16xf32>
    %17 = vector.extract_strided_slice %7 {offsets = [2, 0], sizes = [1, 16], strides = [1, 1]} : vector<4x16xf32> to vector<1x16xf32>
    %18 = vector.broadcast %5 : vector<128x1xf32> to vector<128x16xf32>
    %19 = vector.broadcast %17 : vector<1x16xf32> to vector<128x16xf32>
    %20 = arith.mulf %18, %19 : vector<128x16xf32>
    %21 = arith.addf %16, %20 : vector<128x16xf32>
    %22 = vector.extract_strided_slice %7 {offsets = [3, 0], sizes = [1, 16], strides = [1, 1]} : vector<4x16xf32> to vector<1x16xf32>
    %23 = vector.broadcast %6 : vector<128x1xf32> to vector<128x16xf32>
    %24 = vector.broadcast %22 : vector<1x16xf32> to vector<128x16xf32>
    %25 = arith.mulf %23, %24 : vector<128x16xf32>
    %26 = arith.addf %21, %25 : vector<128x16xf32>
    %c0_6 = arith.constant 0 : index
    %c0_7 = arith.constant 0 : index
    %27 = vector.load %arg6[%c0_6, %c0_7] : memref<1x16xf32, #tpu.memory_space<vmem>>, vector<1x16xf32>
    %28 = vector.broadcast %27 : vector<1x16xf32> to vector<128x16xf32>
    %29 = arith.addf %26, %28 : vector<128x16xf32>
    %cst_8 = arith.constant 0.000000e+00 : f32
    %30 = vector.broadcast %cst_8 : f32 to vector<128x16xf32>
    %31 = arith.maximumf %29, %30 : vector<128x16xf32>
    %32 = vector.extract_strided_slice %31 {offsets = [0, 0], sizes = [32, 16], strides = [1, 1]} : vector<128x16xf32> to vector<32x16xf32>
    %c0_9 = arith.constant 0 : index
    %c0_10 = arith.constant 0 : index
    %33 = vector.load %arg13[%c0_9, %c0_10] : memref<16x64xf32, #tpu.memory_space<vmem>>, vector<16x64xf32>
    %cst_11 = arith.constant dense<0.000000e+00> : vector<32x64xf32>
    %34 = tpu.matmul %32, %33, %cst_11 {dimension_numbers = #tpu.dot_dimension_numbers<[1], [0], [0], [1], [0, 0, 1, 1], [], []>} : vector<32x16xf32>, vector<16x64xf32>, vector<32x64xf32> -> vector<32x64xf32>
    %c0_12 = arith.constant 0 : index
    %c0_13 = arith.constant 0 : index
    %35 = vector.load %arg14[%c0_12, %c0_13] : memref<1x64xf32, #tpu.memory_space<vmem>>, vector<1x64xf32>
    %36 = vector.broadcast %35 : vector<1x64xf32> to vector<32x64xf32>
    %37 = arith.addf %34, %36 : vector<32x64xf32>
    %c0_14 = arith.constant 0 : index
    %c0_15 = arith.constant 0 : index
    %38 = vector.load %arg7[%c0_14, %c0_15] : memref<16x16xf32, #tpu.memory_space<vmem>>, vector<16x16xf32>
    %cst_16 = arith.constant dense<0.000000e+00> : vector<32x16xf32>
    %39 = tpu.matmul %32, %38, %cst_16 {dimension_numbers = #tpu.dot_dimension_numbers<[1], [0], [0], [1], [0, 0, 1, 1], [], []>} : vector<32x16xf32>, vector<16x16xf32>, vector<32x16xf32> -> vector<32x16xf32>
    %c0_17 = arith.constant 0 : index
    %c0_18 = arith.constant 0 : index
    %40 = vector.load %arg8[%c0_17, %c0_18] : memref<1x16xf32, #tpu.memory_space<vmem>>, vector<1x16xf32>
    %41 = vector.broadcast %40 : vector<1x16xf32> to vector<32x16xf32>
    %42 = arith.addf %39, %41 : vector<32x16xf32>
    %cst_19 = arith.constant 0.000000e+00 : f32
    %43 = vector.broadcast %cst_19 : f32 to vector<32x16xf32>
    %44 = arith.maximumf %42, %43 : vector<32x16xf32>
    %c0_20 = arith.constant 0 : index
    %c0_21 = arith.constant 0 : index
    %45 = vector.load %arg3[%c0_20, %c0_21] : memref<96x32xf32, #tpu.memory_space<vmem>>, vector<96x32xf32>
    %cst_22 = arith.constant dense<0.000000e+00> : vector<96x16xf32>
    %46 = tpu.matmul %45, %44, %cst_22 {dimension_numbers = #tpu.dot_dimension_numbers<[1], [0], [0], [1], [0, 0, 1, 1], [], []>} : vector<96x32xf32>, vector<32x16xf32>, vector<96x16xf32> -> vector<96x16xf32>
    %47 = vector.extract_strided_slice %46 {offsets = [0, 0], sizes = [32, 16], strides = [1, 1]} : vector<96x16xf32> to vector<32x16xf32>
    %48 = vector.extract_strided_slice %46 {offsets = [32, 0], sizes = [32, 16], strides = [1, 1]} : vector<96x16xf32> to vector<32x16xf32>
    %49 = vector.extract_strided_slice %46 {offsets = [64, 0], sizes = [32, 16], strides = [1, 1]} : vector<96x16xf32> to vector<32x16xf32>
    %c0_23 = arith.constant 0 : index
    %c0_24 = arith.constant 0 : index
    %50 = vector.load %arg9[%c0_23, %c0_24] : memref<64x16xf32, #tpu.memory_space<vmem>>, vector<16x16xf32>
    %cst_25 = arith.constant dense<0.000000e+00> : vector<32x16xf32>
    %51 = tpu.matmul %44, %50, %cst_25 {dimension_numbers = #tpu.dot_dimension_numbers<[1], [0], [0], [1], [0, 0, 1, 1], [], []>} : vector<32x16xf32>, vector<16x16xf32>, vector<32x16xf32> -> vector<32x16xf32>
    %c16 = arith.constant 16 : index
    %c0_26 = arith.constant 0 : index
    %52 = vector.load %arg9[%c16, %c0_26] : memref<64x16xf32, #tpu.memory_space<vmem>>, vector<16x16xf32>
    %cst_27 = arith.constant dense<0.000000e+00> : vector<32x16xf32>
    %53 = tpu.matmul %47, %52, %cst_27 {dimension_numbers = #tpu.dot_dimension_numbers<[1], [0], [0], [1], [0, 0, 1, 1], [], []>} : vector<32x16xf32>, vector<16x16xf32>, vector<32x16xf32> -> vector<32x16xf32>
    %54 = arith.addf %51, %53 : vector<32x16xf32>
    %c32 = arith.constant 32 : index
    %c0_28 = arith.constant 0 : index
    %55 = vector.load %arg9[%c32, %c0_28] : memref<64x16xf32, #tpu.memory_space<vmem>>, vector<16x16xf32>
    %cst_29 = arith.constant dense<0.000000e+00> : vector<32x16xf32>
    %56 = tpu.matmul %48, %55, %cst_29 {dimension_numbers = #tpu.dot_dimension_numbers<[1], [0], [0], [1], [0, 0, 1, 1], [], []>} : vector<32x16xf32>, vector<16x16xf32>, vector<32x16xf32> -> vector<32x16xf32>
    %57 = arith.addf %54, %56 : vector<32x16xf32>
    %c48 = arith.constant 48 : index
    %c0_30 = arith.constant 0 : index
    %58 = vector.load %arg9[%c48, %c0_30] : memref<64x16xf32, #tpu.memory_space<vmem>>, vector<16x16xf32>
    %cst_31 = arith.constant dense<0.000000e+00> : vector<32x16xf32>
    %59 = tpu.matmul %49, %58, %cst_31 {dimension_numbers = #tpu.dot_dimension_numbers<[1], [0], [0], [1], [0, 0, 1, 1], [], []>} : vector<32x16xf32>, vector<16x16xf32>, vector<32x16xf32> -> vector<32x16xf32>
    %60 = arith.addf %57, %59 : vector<32x16xf32>
    %c0_32 = arith.constant 0 : index
    %c0_33 = arith.constant 0 : index
    %61 = vector.load %arg10[%c0_32, %c0_33] : memref<1x16xf32, #tpu.memory_space<vmem>>, vector<1x16xf32>
    %62 = vector.broadcast %61 : vector<1x16xf32> to vector<32x16xf32>
    %63 = arith.addf %60, %62 : vector<32x16xf32>
    %cst_34 = arith.constant 0.000000e+00 : f32
    %64 = vector.broadcast %cst_34 : f32 to vector<32x16xf32>
    %65 = arith.maximumf %63, %64 : vector<32x16xf32>
    %c0_35 = arith.constant 0 : index
    %c0_36 = arith.constant 0 : index
    %66 = vector.load %arg11[%c0_35, %c0_36] : memref<16x64xf32, #tpu.memory_space<vmem>>, vector<16x64xf32>
    %cst_37 = arith.constant dense<0.000000e+00> : vector<32x64xf32>
    %67 = tpu.matmul %65, %66, %cst_37 {dimension_numbers = #tpu.dot_dimension_numbers<[1], [0], [0], [1], [0, 0, 1, 1], [], []>} : vector<32x16xf32>, vector<16x64xf32>, vector<32x64xf32> -> vector<32x64xf32>
    %c0_38 = arith.constant 0 : index
    %c0_39 = arith.constant 0 : index
    %68 = vector.load %arg12[%c0_38, %c0_39] : memref<1x64xf32, #tpu.memory_space<vmem>>, vector<1x64xf32>
    %69 = vector.broadcast %68 : vector<1x64xf32> to vector<32x64xf32>
    %70 = arith.addf %67, %69 : vector<32x64xf32>
    %71 = arith.addf %70, %37 : vector<32x64xf32>
    %cst_40 = arith.constant 0.000000e+00 : f32
    %72 = vector.broadcast %cst_40 : f32 to vector<32x64xf32>
    %73 = arith.maximumf %71, %72 : vector<32x64xf32>
    %74 = vector.extract_strided_slice %73 {offsets = [0, 0], sizes = [8, 64], strides = [1, 1]} : vector<32x64xf32> to vector<8x64xf32>
    %c0_41 = arith.constant 0 : index
    %c0_42 = arith.constant 0 : index
    %75 = vector.load %arg21[%c0_41, %c0_42] : memref<64x256xf32, #tpu.memory_space<vmem>>, vector<64x256xf32>
    %cst_43 = arith.constant dense<0.000000e+00> : vector<8x256xf32>
    %76 = tpu.matmul %74, %75, %cst_43 {dimension_numbers = #tpu.dot_dimension_numbers<[1], [0], [0], [1], [0, 0, 1, 1], [], []>} : vector<8x64xf32>, vector<64x256xf32>, vector<8x256xf32> -> vector<8x256xf32>
    %c0_44 = arith.constant 0 : index
    %c0_45 = arith.constant 0 : index
    %77 = vector.load %arg22[%c0_44, %c0_45] : memref<1x256xf32, #tpu.memory_space<vmem>>, vector<1x256xf32>
    %78 = vector.broadcast %77 : vector<1x256xf32> to vector<8x256xf32>
    %79 = arith.addf %76, %78 : vector<8x256xf32>
    %c0_46 = arith.constant 0 : index
    %c0_47 = arith.constant 0 : index
    %80 = vector.load %arg15[%c0_46, %c0_47] : memref<64x64xf32, #tpu.memory_space<vmem>>, vector<64x64xf32>
    %cst_48 = arith.constant dense<0.000000e+00> : vector<8x64xf32>
    %81 = tpu.matmul %74, %80, %cst_48 {dimension_numbers = #tpu.dot_dimension_numbers<[1], [0], [0], [1], [0, 0, 1, 1], [], []>} : vector<8x64xf32>, vector<64x64xf32>, vector<8x64xf32> -> vector<8x64xf32>
    %c0_49 = arith.constant 0 : index
    %c0_50 = arith.constant 0 : index
    %82 = vector.load %arg16[%c0_49, %c0_50] : memref<1x64xf32, #tpu.memory_space<vmem>>, vector<1x64xf32>
    %83 = vector.broadcast %82 : vector<1x64xf32> to vector<8x64xf32>
    %84 = arith.addf %81, %83 : vector<8x64xf32>
    %cst_51 = arith.constant 0.000000e+00 : f32
    %85 = vector.broadcast %cst_51 : f32 to vector<8x64xf32>
    %86 = arith.maximumf %84, %85 : vector<8x64xf32>
    %c0_52 = arith.constant 0 : index
    %c0_53 = arith.constant 0 : index
    %87 = vector.load %arg4[%c0_52, %c0_53] : memref<24x8xf32, #tpu.memory_space<vmem>>, vector<24x8xf32>
    %cst_54 = arith.constant dense<0.000000e+00> : vector<24x64xf32>
    %88 = tpu.matmul %87, %86, %cst_54 {dimension_numbers = #tpu.dot_dimension_numbers<[1], [0], [0], [1], [0, 0, 1, 1], [], []>} : vector<24x8xf32>, vector<8x64xf32>, vector<24x64xf32> -> vector<24x64xf32>
    %89 = vector.extract_strided_slice %88 {offsets = [0, 0], sizes = [8, 64], strides = [1, 1]} : vector<24x64xf32> to vector<8x64xf32>
    %90 = vector.extract_strided_slice %88 {offsets = [8, 0], sizes = [8, 64], strides = [1, 1]} : vector<24x64xf32> to vector<8x64xf32>
    %91 = vector.extract_strided_slice %88 {offsets = [16, 0], sizes = [8, 64], strides = [1, 1]} : vector<24x64xf32> to vector<8x64xf32>
    %c0_55 = arith.constant 0 : index
    %c0_56 = arith.constant 0 : index
    %92 = vector.load %arg17[%c0_55, %c0_56] : memref<256x64xf32, #tpu.memory_space<vmem>>, vector<64x64xf32>
    %cst_57 = arith.constant dense<0.000000e+00> : vector<8x64xf32>
    %93 = tpu.matmul %86, %92, %cst_57 {dimension_numbers = #tpu.dot_dimension_numbers<[1], [0], [0], [1], [0, 0, 1, 1], [], []>} : vector<8x64xf32>, vector<64x64xf32>, vector<8x64xf32> -> vector<8x64xf32>
    %c64 = arith.constant 64 : index
    %c0_58 = arith.constant 0 : index
    %94 = vector.load %arg17[%c64, %c0_58] : memref<256x64xf32, #tpu.memory_space<vmem>>, vector<64x64xf32>
    %cst_59 = arith.constant dense<0.000000e+00> : vector<8x64xf32>
    %95 = tpu.matmul %89, %94, %cst_59 {dimension_numbers = #tpu.dot_dimension_numbers<[1], [0], [0], [1], [0, 0, 1, 1], [], []>} : vector<8x64xf32>, vector<64x64xf32>, vector<8x64xf32> -> vector<8x64xf32>
    %96 = arith.addf %93, %95 : vector<8x64xf32>
    %c128 = arith.constant 128 : index
    %c0_60 = arith.constant 0 : index
    %97 = vector.load %arg17[%c128, %c0_60] : memref<256x64xf32, #tpu.memory_space<vmem>>, vector<64x64xf32>
    %cst_61 = arith.constant dense<0.000000e+00> : vector<8x64xf32>
    %98 = tpu.matmul %90, %97, %cst_61 {dimension_numbers = #tpu.dot_dimension_numbers<[1], [0], [0], [1], [0, 0, 1, 1], [], []>} : vector<8x64xf32>, vector<64x64xf32>, vector<8x64xf32> -> vector<8x64xf32>
    %99 = arith.addf %96, %98 : vector<8x64xf32>
    %c192 = arith.constant 192 : index
    %c0_62 = arith.constant 0 : index
    %100 = vector.load %arg17[%c192, %c0_62] : memref<256x64xf32, #tpu.memory_space<vmem>>, vector<64x64xf32>
    %cst_63 = arith.constant dense<0.000000e+00> : vector<8x64xf32>
    %101 = tpu.matmul %91, %100, %cst_63 {dimension_numbers = #tpu.dot_dimension_numbers<[1], [0], [0], [1], [0, 0, 1, 1], [], []>} : vector<8x64xf32>, vector<64x64xf32>, vector<8x64xf32> -> vector<8x64xf32>
    %102 = arith.addf %99, %101 : vector<8x64xf32>
    %c0_64 = arith.constant 0 : index
    %c0_65 = arith.constant 0 : index
    %103 = vector.load %arg18[%c0_64, %c0_65] : memref<1x64xf32, #tpu.memory_space<vmem>>, vector<1x64xf32>
    %104 = vector.broadcast %103 : vector<1x64xf32> to vector<8x64xf32>
    %105 = arith.addf %102, %104 : vector<8x64xf32>
    %cst_66 = arith.constant 0.000000e+00 : f32
    %106 = vector.broadcast %cst_66 : f32 to vector<8x64xf32>
    %107 = arith.maximumf %105, %106 : vector<8x64xf32>
    %c0_67 = arith.constant 0 : index
    %c0_68 = arith.constant 0 : index
    %108 = vector.load %arg19[%c0_67, %c0_68] : memref<64x256xf32, #tpu.memory_space<vmem>>, vector<64x256xf32>
    %cst_69 = arith.constant dense<0.000000e+00> : vector<8x256xf32>
    %109 = tpu.matmul %107, %108, %cst_69 {dimension_numbers = #tpu.dot_dimension_numbers<[1], [0], [0], [1], [0, 0, 1, 1], [], []>} : vector<8x64xf32>, vector<64x256xf32>, vector<8x256xf32> -> vector<8x256xf32>
    %c0_70 = arith.constant 0 : index
    %c0_71 = arith.constant 0 : index
    %110 = vector.load %arg20[%c0_70, %c0_71] : memref<1x256xf32, #tpu.memory_space<vmem>>, vector<1x256xf32>
    %111 = vector.broadcast %110 : vector<1x256xf32> to vector<8x256xf32>
    %112 = arith.addf %109, %111 : vector<8x256xf32>
    %113 = arith.addf %112, %79 : vector<8x256xf32>
    %cst_72 = arith.constant 0.000000e+00 : f32
    %114 = vector.broadcast %cst_72 : f32 to vector<8x256xf32>
    %115 = arith.maximumf %113, %114 : vector<8x256xf32>
    %cst_73 = arith.constant 1.000000e+00 : f32
    %116 = vector.broadcast %cst_73 : f32 to vector<1x8xf32>
    %cst_74 = arith.constant dense<0.000000e+00> : vector<1x256xf32>
    %117 = tpu.matmul %116, %115, %cst_74 {dimension_numbers = #tpu.dot_dimension_numbers<[1], [0], [0], [1], [0, 0, 1, 1], [], []>} : vector<1x8xf32>, vector<8x256xf32>, vector<1x256xf32> -> vector<1x256xf32>
    %c0_75 = arith.constant 0 : index
    %c0_76 = arith.constant 0 : index
    %118 = vector.load %arg23[%c0_75, %c0_76] : memref<256x128xf32, #tpu.memory_space<vmem>>, vector<256x128xf32>
    %cst_77 = arith.constant dense<0.000000e+00> : vector<1x128xf32>
    %119 = tpu.matmul %117, %118, %cst_77 {dimension_numbers = #tpu.dot_dimension_numbers<[1], [0], [0], [1], [0, 0, 1, 1], [], []>} : vector<1x256xf32>, vector<256x128xf32>, vector<1x128xf32> -> vector<1x128xf32>
    %c0_78 = arith.constant 0 : index
    %c0_79 = arith.constant 0 : index
    %120 = vector.load %arg24[%c0_78, %c0_79] : memref<1x128xf32, #tpu.memory_space<vmem>>, vector<1x128xf32>
    %121 = arith.addf %119, %120 : vector<1x128xf32>
    %cst_80 = arith.constant dense<0xFF800000> : vector<1xf32>
    %122 = vector.multi_reduction <maximumf>, %121, %cst_80 [1] : vector<1x128xf32> to vector<1xf32>
    %123 = vector.shape_cast %122 : vector<1xf32> to vector<1x1xf32>
    %124 = vector.broadcast %123 : vector<1x1xf32> to vector<1x128xf32>
    %125 = arith.subf %121, %124 : vector<1x128xf32>
    %126 = math.exp %125 : vector<1x128xf32>
    %cst_81 = arith.constant dense<0.000000e+00> : vector<1xf32>
    %127 = vector.multi_reduction <add>, %126, %cst_81 [1] : vector<1x128xf32> to vector<1xf32>
    %128 = vector.shape_cast %127 : vector<1xf32> to vector<1x1xf32>
    %129 = math.log %128 : vector<1x1xf32>
    %130 = vector.broadcast %129 : vector<1x1xf32> to vector<1x128xf32>
    %131 = arith.subf %125, %130 : vector<1x128xf32>
    %c0_82 = arith.constant 0 : index
    %c0_83 = arith.constant 0 : index
    %c0_84 = arith.constant 0 : index
    %132 = vector.load %arg25[%c0_82, %c0_83, %c0_84] : memref<1x1x128xf32, #tpu.memory_space<vmem>>, vector<1x1x128xf32>
    %133 = vector.shape_cast %132 : vector<1x1x128xf32> to vector<1x128xf32>
    %134 = vector.shape_cast %131 : vector<1x128xf32> to vector<1x1x128xf32>
    tpu.vector_store %arg25[%c0_82, %c0_83, %c0_84], %134 {strides = array<i32>} : memref<1x1x128xf32, #tpu.memory_space<vmem>>, vector<1x1x128xf32>,
    return
  }
  func.func @transform_0(%arg0: i32) -> (i32, i32, i32) {
    %c0_i32 = arith.constant 0 : i32
    %c0_i32_0 = arith.constant 0 : i32
    %c0_i32_1 = arith.constant 0 : i32
    return %arg0, %c0_i32, %c0_i32_0 : i32, i32, i32
  }
  func.func @transform_1(%arg0: i32) -> (i32, i32) {
    %c0_i32 = arith.constant 0 : i32
    %c0_i32_0 = arith.constant 0 : i32
    %c0_i32_1 = arith.constant 0 : i32
    return %c0_i32, %c0_i32_0 : i32, i32
  }
  func.func @transform_2(%arg0: i32) -> (i32, i32) {
    %c0_i32 = arith.constant 0 : i32
    %c0_i32_0 = arith.constant 0 : i32
    %c0_i32_1 = arith.constant 0 : i32
    return %c0_i32, %c0_i32_0 : i32, i32
  }
  func.func @transform_3(%arg0: i32) -> (i32, i32) {
    %c0_i32 = arith.constant 0 : i32
    %c0_i32_0 = arith.constant 0 : i32
    %c0_i32_1 = arith.constant 0 : i32
    return %c0_i32, %c0_i32_0 : i32, i32
  }
  func.func @transform_4(%arg0: i32) -> (i32, i32) {
    %c0_i32 = arith.constant 0 : i32
    %c0_i32_0 = arith.constant 0 : i32
    %c0_i32_1 = arith.constant 0 : i32
    return %c0_i32, %c0_i32_0 : i32, i32
  }
  func.func @transform_5(%arg0: i32) -> (i32, i32) {
    %c0_i32 = arith.constant 0 : i32
    %c0_i32_0 = arith.constant 0 : i32
    %c0_i32_1 = arith.constant 0 : i32
    return %c0_i32, %c0_i32_0 : i32, i32
  }
  func.func @transform_6(%arg0: i32) -> (i32, i32) {
    %c0_i32 = arith.constant 0 : i32
    %c0_i32_0 = arith.constant 0 : i32
    %c0_i32_1 = arith.constant 0 : i32
    return %c0_i32, %c0_i32_0 : i32, i32
  }
  func.func @transform_7(%arg0: i32) -> (i32, i32) {
    %c0_i32 = arith.constant 0 : i32
    %c0_i32_0 = arith.constant 0 : i32
    %c0_i32_1 = arith.constant 0 : i32
    return %c0_i32, %c0_i32_0 : i32, i32
  }
  func.func @transform_8(%arg0: i32) -> (i32, i32) {
    %c0_i32 = arith.constant 0 : i32
    %c0_i32_0 = arith.constant 0 : i32
    %c0_i32_1 = arith.constant 0 : i32
    return %c0_i32, %c0_i32_0 : i32, i32
  }
  func.func @transform_9(%arg0: i32) -> (i32, i32) {
    %c0_i32 = arith.constant 0 : i32
    %c0_i32_0 = arith.constant 0 : i32
    %c0_i32_1 = arith.constant 0 : i32
    return %c0_i32, %c0_i32_0 : i32, i32
  }
  func.func @transform_10(%arg0: i32) -> (i32, i32) {
    %c0_i32 = arith.constant 0 : i32
    %c0_i32_0 = arith.constant 0 : i32
    %c0_i32_1 = arith.constant 0 : i32
    return %c0_i32, %c0_i32_0 : i32, i32
  }
  func.func @transform_11(%arg0: i32) -> (i32, i32) {
    %c0_i32 = arith.constant 0 : i32
    %c0_i32_0 = arith.constant 0 : i32
    %c0_i32_1 = arith.constant 0 : i32
    return %c0_i32, %c0_i32_0 : i32, i32
  }
  func.func @transform_12(%arg0: i32) -> (i32, i32) {
    %c0_i32 = arith.constant 0 : i32
    %c0_i32_0 = arith.constant 0 : i32
    %c0_i32_1 = arith.constant 0 : i32
    return %c0_i32, %c0_i32_0 : i32, i32
  }
  func.func @transform_13(%arg0: i32) -> (i32, i32) {
    %c0_i32 = arith.constant 0 : i32
    %c0_i32_0 = arith.constant 0 : i32
    %c0_i32_1 = arith.constant 0 : i32
    return %c0_i32, %c0_i32_0 : i32, i32
  }
  func.func @transform_14(%arg0: i32) -> (i32, i32) {
    %c0_i32 = arith.constant 0 : i32
    %c0_i32_0 = arith.constant 0 : i32
    %c0_i32_1 = arith.constant 0 : i32
    return %c0_i32, %c0_i32_0 : i32, i32
  }
  func.func @transform_15(%arg0: i32) -> (i32, i32) {
    %c0_i32 = arith.constant 0 : i32
    %c0_i32_0 = arith.constant 0 : i32
    %c0_i32_1 = arith.constant 0 : i32
    return %c0_i32, %c0_i32_0 : i32, i32
  }
  func.func @transform_16(%arg0: i32) -> (i32, i32) {
    %c0_i32 = arith.constant 0 : i32
    %c0_i32_0 = arith.constant 0 : i32
    %c0_i32_1 = arith.constant 0 : i32
    return %c0_i32, %c0_i32_0 : i32, i32
  }
  func.func @transform_17(%arg0: i32) -> (i32, i32) {
    %c0_i32 = arith.constant 0 : i32
    %c0_i32_0 = arith.constant 0 : i32
    %c0_i32_1 = arith.constant 0 : i32
    return %c0_i32, %c0_i32_0 : i32, i32
  }
  func.func @transform_18(%arg0: i32) -> (i32, i32) {
    %c0_i32 = arith.constant 0 : i32
    %c0_i32_0 = arith.constant 0 : i32
    %c0_i32_1 = arith.constant 0 : i32
    return %c0_i32, %c0_i32_0 : i32, i32
  }
  func.func @transform_19(%arg0: i32) -> (i32, i32) {
    %c0_i32 = arith.constant 0 : i32
    %c0_i32_0 = arith.constant 0 : i32
    %c0_i32_1 = arith.constant 0 : i32
    return %c0_i32, %c0_i32_0 : i32, i32
  }
  func.func @transform_20(%arg0: i32) -> (i32, i32) {
    %c0_i32 = arith.constant 0 : i32
    %c0_i32_0 = arith.constant 0 : i32
    %c0_i32_1 = arith.constant 0 : i32
    return %c0_i32, %c0_i32_0 : i32, i32
  }
  func.func @transform_21(%arg0: i32) -> (i32, i32) {
    %c0_i32 = arith.constant 0 : i32
    %c0_i32_0 = arith.constant 0 : i32
    %c0_i32_1 = arith.constant 0 : i32
    return %c0_i32, %c0_i32_0 : i32, i32
  }
  func.func @transform_22(%arg0: i32) -> (i32, i32) {
    %c0_i32 = arith.constant 0 : i32
    %c0_i32_0 = arith.constant 0 : i32
    %c0_i32_1 = arith.constant 0 : i32
    return %c0_i32, %c0_i32_0 : i32, i32
  }
  func.func @transform_23(%arg0: i32) -> (i32, i32) {
    %c0_i32 = arith.constant 0 : i32
    %c0_i32_0 = arith.constant 0 : i32
    %c0_i32_1 = arith.constant 0 : i32
    return %c0_i32, %c0_i32_0 : i32, i32
  }
  func.func @transform_24(%arg0: i32) -> (i32, i32, i32) {
    %c0_i32 = arith.constant 0 : i32
    %c0_i32_0 = arith.constant 0 : i32
    %c0_i32_1 = arith.constant 0 : i32
    return %arg0, %c0_i32, %c0_i32_0 : i32, i32, i32
  }
}

</mosaic_0001>

<llo_original>
// kernel: model_forward.1
$region0: #{model_forward.1}
  #allocation0 [shape = 'u32[]', space=smem, size = 0x4, offset = 0x4, fixed_abs, tag = 'smem constant byte address 0x4 - core index']
  #allocation1 [shape = 'u32[144,128]{1,0:T(1,128)}', space=vmem, size = 0x12000, scoped, tag = 'internal scratch']
  %s0 = inlined_call_operand.vmem [shape: f32[2,128,1], index: 0, kind: input, shape index: {}]
  %s1 = inlined_call_operand.vmem [shape: f32[384,128], index: 1, kind: input, shape index: {}]
  %s2 = inlined_call_operand.vmem [shape: f32[96,32], index: 2, kind: input, shape index: {}]
  %s3 = inlined_call_operand.vmem [shape: f32[24,8], index: 3, kind: input, shape index: {}]
  %s4 = inlined_call_operand.vmem [shape: f32[4,16], index: 4, kind: input, shape index: {}]
  %s5 = inlined_call_operand.hbm [shape: f32[1,16], index: 5, kind: input, shape index: {}]
  %s6 = inlined_call_operand.hbm [shape: f32[16,16], index: 6, kind: input, shape index: {}]
  %s7 = inlined_call_operand.hbm [shape: f32[1,16], index: 7, kind: input, shape index: {}]
  %s8 = inlined_call_operand.vmem [shape: f32[64,16], index: 8, kind: input, shape index: {}]
  %s9 = inlined_call_operand.hbm [shape: f32[1,16], index: 9, kind: input, shape index: {}]
  %s10 = inlined_call_operand.hbm [shape: f32[16,64], index: 10, kind: input, shape index: {}]
  %s11 = inlined_call_operand.hbm [shape: f32[1,64], index: 11, kind: input, shape index: {}]
  %s12 = inlined_call_operand.hbm [shape: f32[16,64], index: 12, kind: input, shape index: {}]
  %s13 = inlined_call_operand.hbm [shape: f32[1,64], index: 13, kind: input, shape index: {}]
  %s14 = inlined_call_operand.hbm [shape: f32[64,64], index: 14, kind: input, shape index: {}]
  %s15 = inlined_call_operand.hbm [shape: f32[1,64], index: 15, kind: input, shape index: {}]
  %s16 = inlined_call_operand.vmem [shape: f32[256,64], index: 16, kind: input, shape index: {}]
  %s17 = inlined_call_operand.hbm [shape: f32[1,64], index: 17, kind: input, shape index: {}]
  %s18 = inlined_call_operand.vmem [shape: f32[64,256], index: 18, kind: input, shape index: {}]
  %s19 = inlined_call_operand.hbm [shape: f32[1,256], index: 19, kind: input, shape index: {}]
  %s20 = inlined_call_operand.hbm [shape: f32[64,256], index: 20, kind: input, shape index: {}]
  %s21 = inlined_call_operand.vmem [shape: f32[1,256], index: 21, kind: input, shape index: {}]
  %s22 = inlined_call_operand.vmem [shape: f32[256,128], index: 22, kind: input, shape index: {}]
  %s23 = inlined_call_operand.hbm [shape: f32[1,128], index: 23, kind: input, shape index: {}]
  %s24 = inlined_call_operand.hbm [shape: f32[2,1,128], index: 24, kind: output, shape index: {}]
  %s25 = sld [smem:[#allocation0]]
  $region185: #{model_forward.1} parent=0
    _
  %s27 = ssub.s32 1, %s25
  %s28 = scalar_select 0, %s27, %s25
  $region1: #{model_forward.1} parent=0
    #allocation2 [shape = 'u8[512]{0}', space=vmem, size = 0x400, scoped, tag = 'input window, operand 5, single buffered']
    #allocation3 [shape = 's32[2]{0}', space=sflag, size = 0x8, scoped, tag = 'scoped memory for model_forward.1']
    #allocation4 [shape = 's32[2]{0}', space=sflag, size = 0x8, scoped, tag = 'scoped memory for model_forward.1']
    #allocation5 [shape = 'u8[8192]{0}', space=vmem, size = 0x2000, scoped, tag = 'input window, operand 6, single buffered']
    #allocation6 [shape = 's32[1]{0}', space=sflag, size = 0x4, scoped, tag = 'scoped memory for model_forward.1']
    #allocation7 [shape = 'u8[512]{0}', space=vmem, size = 0x400, scoped, tag = 'input window, operand 7, single buffered']
    #allocation8 [shape = 'u8[512]{0}', space=vmem, size = 0x400, scoped, tag = 'input window, operand 9, single buffered']
    #allocation9 [shape = 's32[1]{0}', space=sflag, size = 0x4, scoped, tag = 'scoped memory for model_forward.1']
    #allocation10 [shape = 'u8[8192]{0}', space=vmem, size = 0x2000, scoped, tag = 'input window, operand 10, single buffered']
    #allocation11 [shape = 'u8[512]{0}', space=vmem, size = 0x400, scoped, tag = 'input window, operand 11, single buffered']
    #allocation12 [shape = 's32[1]{0}', space=sflag, size = 0x4, scoped, tag = 'scoped memory for model_forward.1']
    #allocation13 [shape = 'u8[8192]{0}', space=vmem, size = 0x2000, scoped, tag = 'input window, operand 12, single buffered']
    #allocation14 [shape = 'u8[512]{0}', space=vmem, size = 0x400, scoped, tag = 'input window, operand 13, single buffered']
    #allocation15 [shape = 's32[1]{0}', space=sflag, size = 0x4, scoped, tag = 'scoped memory for model_forward.1']
    #allocation16 [shape = 'u8[32768]{0}', space=vmem, size = 0x8000, scoped, tag = 'input window, operand 14, single buffered']
    #allocation17 [shape = 'u8[512]{0}', space=vmem, size = 0x400, scoped, tag = 'input window, operand 15, single buffered']
    #allocation18 [shape = 's32[1]{0}', space=sflag, size = 0x4, scoped, tag = 'scoped memory for model_forward.1']
    #allocation19 [shape = 'u8[512]{0}', space=vmem, size = 0x400, scoped, tag = 'input window, operand 17, single buffered']
    #allocation20 [shape = 'u8[1024]{0}', space=vmem, size = 0x400, scoped, tag = 'input window, operand 19, single buffered']
    #allocation21 [shape = 's32[1]{0}', space=sflag, size = 0x4, scoped, tag = 'scoped memory for model_forward.1']
    #allocation22 [shape = 'u8[65536]{0}', space=vmem, size = 0x10000, scoped, tag = 'input window, operand 20, single buffered']
    #allocation23 [shape = 'u8[512]{0}', space=vmem, size = 0x400, scoped, tag = 'input window, operand 23, single buffered']
    #allocation24 [shape = 's32[1]{0}', space=sflag, size = 0x4, scoped, tag = 'scoped memory for model_forward.1']
    #allocation25 [shape = 'u8[1024]{0}', space=vmem, size = 0x400, scoped, tag = 'output window, operand 0']
    %29 = vsyncpa [#allocation3], 0
    %30 = vsyncpa [#allocation6], 0
    %31 = vsyncpa [#allocation9], 0
    %32 = vsyncpa [#allocation12], 0
    %33 = vsyncpa [#allocation15], 0
    %34 = vsyncpa [#allocation18], 0
    %35 = vsyncpa [#allocation21], 0
    %36 = vsyncpa [#allocation24], 0
    %37 = vsyncpa [#allocation4], 0
    %s38 = scalar_lea.sflag [#allocation4], 1
    %39 = vsyncpa %s38, 0
    loop: start=0, step=1, limit=4
    $region2: #{model_forward.1} parent=1 // loop_pre_header
      _
    $region3: #{model_forward.1} parent=1 // loop_header
      %s41 = sphi 0, %s45
      %p42 = scmp.ge.s32.totalorder %s41, 4
      %s51 = sphi 0, %s53
      %s54 = sphi 0, %s51
      %s55 = sphi 0, %s54
      %s71 = sphi 0, %s55
      %s75 = sphi 0, %s75
      %s77 = sphi 0, %s75
      %s78 = sphi 0, %s77
      %s92 = sphi 0, %s78
      %s96 = sphi 0, %s96
      %s98 = sphi 0, %s96
      %s99 = sphi 0, %s98
      %s113 = sphi 0, %s99
      %s117 = sphi 0, %s117
      %s119 = sphi 0, %s117
      %s120 = sphi 0, %s119
      %s134 = sphi 0, %s120
      %s138 = sphi 0, %s138
      %s140 = sphi 0, %s138
      %s141 = sphi 0, %s140
      %s155 = sphi 0, %s141
      %s159 = sphi 0, %s159
      %s161 = sphi 0, %s159
      %s162 = sphi 0, %s161
      %s176 = sphi 0, %s162
      %s180 = sphi 0, %s180
      %s182 = sphi 0, %s180
      %s183 = sphi 0, %s182
      %s197 = sphi 0, %s183
      %s201 = sphi 0, %s201
      %s203 = sphi 0, %s201
      %s204 = sphi 0, %s203
      %s218 = sphi 0, %s204
      %s222 = sphi 0, %s222
      %s224 = sphi 0, %s222
      %s225 = sphi 0, %s224
      %s239 = sphi 0, %s225
      %s243 = sphi 0, %s243
      %s245 = sphi 0, %s243
      %s246 = sphi 0, %s245
      %s260 = sphi 0, %s246
      %s264 = sphi 0, %s264
      %s266 = sphi 0, %s264
      %s267 = sphi 0, %s266
      %s281 = sphi 0, %s267
      %s285 = sphi 0, %s285
      %s287 = sphi 0, %s285
      %s288 = sphi 0, %s287
      %s302 = sphi 0, %s288
      %s306 = sphi 0, %s306
      %s308 = sphi 0, %s306
      %s309 = sphi 0, %s308
      %s323 = sphi 0, %s309
      %s327 = sphi 0, %s327
      %s329 = sphi 0, %s327
      %s330 = sphi 0, %s329
      %s344 = sphi 0, %s330
      %s348 = sphi 0, %s348
      %s350 = sphi 0, %s348
      %s351 = sphi 0, %s350
      %s365 = sphi 0, %s351
      %s369 = sphi 0, %s369
      %s371 = sphi 0, %s369
      %s372 = sphi 0, %s371
      %s386 = sphi 0, %s372
      %s390 = sphi 0, %s390
      %s392 = sphi 0, %s390
      %s393 = sphi 0, %s392
      %s407 = sphi 0, %s393
      %s411 = sphi 0, %s411
      %s413 = sphi 0, %s411
      %s414 = sphi 0, %s413
      %s428 = sphi 0, %s414
      %s432 = sphi 0, %s432
      %s434 = sphi 0, %s432
      %s435 = sphi 0, %s434
      %s449 = sphi 0, %s435
      %s453 = sphi 0, %s453
      %s455 = sphi 0, %s453
      %s456 = sphi 0, %s455
      %s470 = sphi 0, %s456
      %s474 = sphi 0, %s474
      %s476 = sphi 0, %s474
      %s477 = sphi 0, %s476
      %s491 = sphi 0, %s477
      %s495 = sphi 0, %s495
      %s497 = sphi 0, %s495
      %s498 = sphi 0, %s497
      %s512 = sphi 0, %s498
      %s516 = sphi 0, %s516
      %s518 = sphi 0, %s516
      %s519 = sphi 0, %s518
      %s533 = sphi 0, %s519
      %s537 = sphi 0, %s537
      %s539 = sphi 0, %s537
      %s540 = sphi 0, %s539
      %s554 = sphi 0, %s540
      %s560 = sphi 0, %s562
      %s563 = sphi 0, %s560
      %s564 = sphi 0, %s563
      %s580 = sphi 0, %s564
    $region4: #{model_forward.1} parent=1 // loop_header_branch
      %44 = sbr.rel (%p42) target = $region8
    $region5: #{model_forward.1} parent=1 // loop_body
      %s46 = ssub.s32 %s41, 1
      %s47 = ssub.s32 %s41, 2
      %s48 = sadd.s32 %s41, 1
      %s49 = ssub.s32 %s41, %s48
      %p50 = scmp.eq.s32.totalorder %s49, 0
      %s52 = sadd.s32 %s51, 1
      %s53 = scalar_select %p50, %s51, %s52
      %p56 = pneg %p50
      %p57 = scmp.eq.s32.totalorder %s41, 1
      %p58 = por %p56, %p57
      %p59 = scmp.ne.s32.totalorder %s51, %s54
      %p60 = scmp.eq.s32.totalorder %s41, 0
      %p61 = por %p59, %p60
      %p62 = scmp.ne.s32.totalorder %s51, %s54
      %p63 = scmp.eq.s32.totalorder %s46, 1
      %p64 = por %p62, %p63
      %p65 = scmp.ne.s32.totalorder %s54, %s55
      %p66 = scmp.eq.s32.totalorder %s46, 0
      %p67 = por %p65, %p66
      %p68 = scmp.ne.s32.totalorder %s54, %s55
      %p69 = scmp.eq.s32.totalorder %s47, 1
      %p70 = por %p68, %p69
      %p72 = scmp.ne.s32.totalorder %s55, %s71
      %p73 = scmp.eq.s32.totalorder %s47, 0
      %p74 = por %p72, %p73
      %s76 = sadd.s32 %s75, 1
      %p79 = scmp.eq.s32.totalorder %s41, 1
      %p80 = scmp.ne.s32.totalorder %s75, %s77
      %p81 = scmp.eq.s32.totalorder %s41, 0
      %p82 = por %p80, %p81
      %p83 = scmp.ne.s32.totalorder %s75, %s77
      %p84 = scmp.eq.s32.totalorder %s46, 1
      %p85 = por %p83, %p84
      %p86 = scmp.ne.s32.totalorder %s77, %s78
      %p87 = scmp.eq.s32.totalorder %s46, 0
      %p88 = por %p86, %p87
      %p89 = scmp.ne.s32.totalorder %s77, %s78
      %p90 = scmp.eq.s32.totalorder %s47, 1
      %p91 = por %p89, %p90
      %p93 = scmp.ne.s32.totalorder %s78, %s92
      %p94 = scmp.eq.s32.totalorder %s47, 0
      %p95 = por %p93, %p94
      %s97 = sadd.s32 %s96, 1
      %p100 = scmp.eq.s32.totalorder %s41, 1
      %p101 = scmp.ne.s32.totalorder %s96, %s98
      %p102 = scmp.eq.s32.totalorder %s41, 0
      %p103 = por %p101, %p102
      %p104 = scmp.ne.s32.totalorder %s96, %s98
      %p105 = scmp.eq.s32.totalorder %s46, 1
      %p106 = por %p104, %p105
      %p107 = scmp.ne.s32.totalorder %s98, %s99
      %p108 = scmp.eq.s32.totalorder %s46, 0
      %p109 = por %p107, %p108
      %p110 = scmp.ne.s32.totalorder %s98, %s99
      %p111 = scmp.eq.s32.totalorder %s47, 1
      %p112 = por %p110, %p111
      %p114 = scmp.ne.s32.totalorder %s99, %s113
      %p115 = scmp.eq.s32.totalorder %s47, 0
      %p116 = por %p114, %p115
      %s118 = sadd.s32 %s117, 1
      %p121 = scmp.eq.s32.totalorder %s41, 1
      %p122 = scmp.ne.s32.totalorder %s117, %s119
      %p123 = scmp.eq.s32.totalorder %s41, 0
      %p124 = por %p122, %p123
      %p125 = scmp.ne.s32.totalorder %s117, %s119
      %p126 = scmp.eq.s32.totalorder %s46, 1
      %p127 = por %p125, %p126
      %p128 = scmp.ne.s32.totalorder %s119, %s120
      %p129 = scmp.eq.s32.totalorder %s46, 0
      %p130 = por %p128, %p129
      %p131 = scmp.ne.s32.totalorder %s119, %s120
      %p132 = scmp.eq.s32.totalorder %s47, 1
      %p133 = por %p131, %p132
      %p135 = scmp.ne.s32.totalorder %s120, %s134
      %p136 = scmp.eq.s32.totalorder %s47, 0
      %p137 = por %p135, %p136
      %s139 = sadd.s32 %s138, 1
      %p142 = scmp.eq.s32.totalorder %s41, 1
      %p143 = scmp.ne.s32.totalorder %s138, %s140
      %p144 = scmp.eq.s32.totalorder %s41, 0
      %p145 = por %p143, %p144
      %p146 = scmp.ne.s32.totalorder %s138, %s140
      %p147 = scmp.eq.s32.totalorder %s46, 1
      %p148 = por %p146, %p147
      %p149 = scmp.ne.s32.totalorder %s140, %s141
      %p150 = scmp.eq.s32.totalorder %s46, 0
      %p151 = por %p149, %p150
      %p152 = scmp.ne.s32.totalorder %s140, %s141
      %p153 = scmp.eq.s32.totalorder %s47, 1
      %p154 = por %p152, %p153
      %p156 = scmp.ne.s32.totalorder %s141, %s155
      %p157 = scmp.eq.s32.totalorder %s47, 0
      %p158 = por %p156, %p157
      %s160 = sadd.s32 %s159, 1
      %p163 = scmp.eq.s32.totalorder %s41, 1
      %p164 = scmp.ne.s32.totalorder %s159, %s161
      %p165 = scmp.eq.s32.totalorder %s41, 0
      %p166 = por %p164, %p165
      %p167 = scmp.ne.s32.totalorder %s159, %s161
      %p168 = scmp.eq.s32.totalorder %s46, 1
      %p169 = por %p167, %p168
      %p170 = scmp.ne.s32.totalorder %s161, %s162
      %p171 = scmp.eq.s32.totalorder %s46, 0
      %p172 = por %p170, %p171
      %p173 = scmp.ne.s32.totalorder %s161, %s162
      %p174 = scmp.eq.s32.totalorder %s47, 1
      %p175 = por %p173, %p174
      %p177 = scmp.ne.s32.totalorder %s162, %s176
      %p178 = scmp.eq.s32.totalorder %s47, 0
      %p179 = por %p177, %p178
      %s181 = sadd.s32 %s180, 1
      %p184 = scmp.eq.s32.totalorder %s41, 1
      %p185 = scmp.ne.s32.totalorder %s180, %s182
      %p186 = scmp.eq.s32.totalorder %s41, 0
      %p187 = por %p185, %p186
      %p188 = scmp.ne.s32.totalorder %s180, %s182
      %p189 = scmp.eq.s32.totalorder %s46, 1
      %p190 = por %p188, %p189
      %p191 = scmp.ne.s32.totalorder %s182, %s183
      %p192 = scmp.eq.s32.totalorder %s46, 0
      %p193 = por %p191, %p192
      %p194 = scmp.ne.s32.totalorder %s182, %s183
      %p195 = scmp.eq.s32.totalorder %s47, 1
      %p196 = por %p194, %p195
      %p198 = scmp.ne.s32.totalorder %s183, %s197
      %p199 = scmp.eq.s32.totalorder %s47, 0
      %p200 = por %p198, %p199
      %s202 = sadd.s32 %s201, 1
      %p205 = scmp.eq.s32.totalorder %s41, 1
      %p206 = scmp.ne.s32.totalorder %s201, %s203
      %p207 = scmp.eq.s32.totalorder %s41, 0
      %p208 = por %p206, %p207
      %p209 = scmp.ne.s32.totalorder %s201, %s203
      %p210 = scmp.eq.s32.totalorder %s46, 1
      %p211 = por %p209, %p210
      %p212 = scmp.ne.s32.totalorder %s203, %s204
      %p213 = scmp.eq.s32.totalorder %s46, 0
      %p214 = por %p212, %p213
      %p215 = scmp.ne.s32.totalorder %s203, %s204
      %p216 = scmp.eq.s32.totalorder %s47, 1
      %p217 = por %p215, %p216
      %p219 = scmp.ne.s32.totalorder %s204, %s218
      %p220 = scmp.eq.s32.totalorder %s47, 0
      %p221 = por %p219, %p220
      %s223 = sadd.s32 %s222, 1
      %p226 = scmp.eq.s32.totalorder %s41, 1
      %p227 = scmp.ne.s32.totalorder %s222, %s224
      %p228 = scmp.eq.s32.totalorder %s41, 0
      %p229 = por %p227, %p228
      %p230 = scmp.ne.s32.totalorder %s222, %s224
      %p231 = scmp.eq.s32.totalorder %s46, 1
      %p232 = por %p230, %p231
      %p233 = scmp.ne.s32.totalorder %s224, %s225
      %p234 = scmp.eq.s32.totalorder %s46, 0
      %p235 = por %p233, %p234
      %p236 = scmp.ne.s32.totalorder %s224, %s225
      %p237 = scmp.eq.s32.totalorder %s47, 1
      %p238 = por %p236, %p237
      %p240 = scmp.ne.s32.totalorder %s225, %s239
      %p241 = scmp.eq.s32.totalorder %s47, 0
      %p242 = por %p240, %p241
      %s244 = sadd.s32 %s243, 1
      %p247 = scmp.eq.s32.totalorder %s41, 1
      %p248 = scmp.ne.s32.totalorder %s243, %s245
      %p249 = scmp.eq.s32.totalorder %s41, 0
      %p250 = por %p248, %p249
      %p251 = scmp.ne.s32.totalorder %s243, %s245
      %p252 = scmp.eq.s32.totalorder %s46, 1
      %p253 = por %p251, %p252
      %p254 = scmp.ne.s32.totalorder %s245, %s246
      %p255 = scmp.eq.s32.totalorder %s46, 0
      %p256 = por %p254, %p255
      %p257 = scmp.ne.s32.totalorder %s245, %s246
      %p258 = scmp.eq.s32.totalorder %s47, 1
      %p259 = por %p257, %p258
      %p261 = scmp.ne.s32.totalorder %s246, %s260
      %p262 = scmp.eq.s32.totalorder %s47, 0
      %p263 = por %p261, %p262
      %s265 = sadd.s32 %s264, 1
      %p268 = scmp.eq.s32.totalorder %s41, 1
      %p269 = scmp.ne.s32.totalorder %s264, %s266
      %p270 = scmp.eq.s32.totalorder %s41, 0
      %p271 = por %p269, %p270
      %p272 = scmp.ne.s32.totalorder %s264, %s266
      %p273 = scmp.eq.s32.totalorder %s46, 1
      %p274 = por %p272, %p273
      %p275 = scmp.ne.s32.totalorder %s266, %s267
      %p276 = scmp.eq.s32.totalorder %s46, 0
      %p277 = por %p275, %p276
      %p278 = scmp.ne.s32.totalorder %s266, %s267
      %p279 = scmp.eq.s32.totalorder %s47, 1
      %p280 = por %p278, %p279
      %p282 = scmp.ne.s32.totalorder %s267, %s281
      %p283 = scmp.eq.s32.totalorder %s47, 0
      %p284 = por %p282, %p283
      %s286 = sadd.s32 %s285, 1
      %p289 = scmp.eq.s32.totalorder %s41, 1
      %p290 = scmp.ne.s32.totalorder %s285, %s287
      %p291 = scmp.eq.s32.totalorder %s41, 0
      %p292 = por %p290, %p291
      %p293 = scmp.ne.s32.totalorder %s285, %s287
      %p294 = scmp.eq.s32.totalorder %s46, 1
      %p295 = por %p293, %p294
      %p296 = scmp.ne.s32.totalorder %s287, %s288
      %p297 = scmp.eq.s32.totalorder %s46, 0
      %p298 = por %p296, %p297
      %p299 = scmp.ne.s32.totalorder %s287, %s288
      %p300 = scmp.eq.s32.totalorder %s47, 1
      %p301 = por %p299, %p300
      %p303 = scmp.ne.s32.totalorder %s288, %s302
      %p304 = scmp.eq.s32.totalorder %s47, 0
      %p305 = por %p303, %p304
      %s307 = sadd.s32 %s306, 1
      %p310 = scmp.eq.s32.totalorder %s41, 1
      %p311 = scmp.ne.s32.totalorder %s306, %s308
      %p312 = scmp.eq.s32.totalorder %s41, 0
      %p313 = por %p311, %p312
      %p314 = scmp.ne.s32.totalorder %s306, %s308
      %p315 = scmp.eq.s32.totalorder %s46, 1
      %p316 = por %p314, %p315
      %p317 = scmp.ne.s32.totalorder %s308, %s309
      %p318 = scmp.eq.s32.totalorder %s46, 0
      %p319 = por %p317, %p318
      %p320 = scmp.ne.s32.totalorder %s308, %s309
      %p321 = scmp.eq.s32.totalorder %s47, 1
      %p322 = por %p320, %p321
      %p324 = scmp.ne.s32.totalorder %s309, %s323
      %p325 = scmp.eq.s32.totalorder %s47, 0
      %p326 = por %p324, %p325
      %s328 = sadd.s32 %s327, 1
      %p331 = scmp.eq.s32.totalorder %s41, 1
      %p332 = scmp.ne.s32.totalorder %s327, %s329
      %p333 = scmp.eq.s32.totalorder %s41, 0
      %p334 = por %p332, %p333
      %p335 = scmp.ne.s32.totalorder %s327, %s329
      %p336 = scmp.eq.s32.totalorder %s46, 1
      %p337 = por %p335, %p336
      %p338 = scmp.ne.s32.totalorder %s329, %s330
      %p339 = scmp.eq.s32.totalorder %s46, 0
      %p340 = por %p338, %p339
      %p341 = scmp.ne.s32.totalorder %s329, %s330
      %p342 = scmp.eq.s32.totalorder %s47, 1
      %p343 = por %p341, %p342
      %p345 = scmp.ne.s32.totalorder %s330, %s344
      %p346 = scmp.eq.s32.totalorder %s47, 0
      %p347 = por %p345, %p346
      %s349 = sadd.s32 %s348, 1
      %p352 = scmp.eq.s32.totalorder %s41, 1
      %p353 = scmp.ne.s32.totalorder %s348, %s350
      %p354 = scmp.eq.s32.totalorder %s41, 0
      %p355 = por %p353, %p354
      %p356 = scmp.ne.s32.totalorder %s348, %s350
      %p357 = scmp.eq.s32.totalorder %s46, 1
      %p358 = por %p356, %p357
      %p359 = scmp.ne.s32.totalorder %s350, %s351
      %p360 = scmp.eq.s32.totalorder %s46, 0
      %p361 = por %p359, %p360
      %p362 = scmp.ne.s32.totalorder %s350, %s351
      %p363 = scmp.eq.s32.totalorder %s47, 1
      %p364 = por %p362, %p363
      %p366 = scmp.ne.s32.totalorder %s351, %s365
      %p367 = scmp.eq.s32.totalorder %s47, 0
      %p368 = por %p366, %p367
      %s370 = sadd.s32 %s369, 1
      %p373 = scmp.eq.s32.totalorder %s41, 1
      %p374 = scmp.ne.s32.totalorder %s369, %s371
      %p375 = scmp.eq.s32.totalorder %s41, 0
      %p376 = por %p374, %p375
      %p377 = scmp.ne.s32.totalorder %s369, %s371
      %p378 = scmp.eq.s32.totalorder %s46, 1
      %p379 = por %p377, %p378
      %p380 = scmp.ne.s32.totalorder %s371, %s372
      %p381 = scmp.eq.s32.totalorder %s46, 0
      %p382 = por %p380, %p381
      %p383 = scmp.ne.s32.totalorder %s371, %s372
      %p384 = scmp.eq.s32.totalorder %s47, 1
      %p385 = por %p383, %p384
      %p387 = scmp.ne.s32.totalorder %s372, %s386
      %p388 = scmp.eq.s32.totalorder %s47, 0
      %p389 = por %p387, %p388
      %s391 = sadd.s32 %s390, 1
      %p394 = scmp.eq.s32.totalorder %s41, 1
      %p395 = scmp.ne.s32.totalorder %s390, %s392
      %p396 = scmp.eq.s32.totalorder %s41, 0
      %p397 = por %p395, %p396
      %p398 = scmp.ne.s32.totalorder %s390, %s392
      %p399 = scmp.eq.s32.totalorder %s46, 1
      %p400 = por %p398, %p399
      %p401 = scmp.ne.s32.totalorder %s392, %s393
      %p402 = scmp.eq.s32.totalorder %s46, 0
      %p403 = por %p401, %p402
      %p404 = scmp.ne.s32.totalorder %s392, %s393
      %p405 = scmp.eq.s32.totalorder %s47, 1
      %p406 = por %p404, %p405
      %p408 = scmp.ne.s32.totalorder %s393, %s407
      %p409 = scmp.eq.s32.totalorder %s47, 0
      %p410 = por %p408, %p409
      %s412 = sadd.s32 %s411, 1
      %p415 = scmp.eq.s32.totalorder %s41, 1
      %p416 = scmp.ne.s32.totalorder %s411, %s413
      %p417 = scmp.eq.s32.totalorder %s41, 0
      %p418 = por %p416, %p417
      %p419 = scmp.ne.s32.totalorder %s411, %s413
      %p420 = scmp.eq.s32.totalorder %s46, 1
      %p421 = por %p419, %p420
      %p422 = scmp.ne.s32.totalorder %s413, %s414
      %p423 = scmp.eq.s32.totalorder %s46, 0
      %p424 = por %p422, %p423
      %p425 = scmp.ne.s32.totalorder %s413, %s414
      %p426 = scmp.eq.s32.totalorder %s47, 1
      %p427 = por %p425, %p426
      %p429 = scmp.ne.s32.totalorder %s414, %s428
      %p430 = scmp.eq.s32.totalorder %s47, 0
      %p431 = por %p429, %p430
      %s433 = sadd.s32 %s432, 1
      %p436 = scmp.eq.s32.totalorder %s41, 1
      %p437 = scmp.ne.s32.totalorder %s432, %s434
      %p438 = scmp.eq.s32.totalorder %s41, 0
      %p439 = por %p437, %p438
      %p440 = scmp.ne.s32.totalorder %s432, %s434
      %p441 = scmp.eq.s32.totalorder %s46, 1
      %p442 = por %p440, %p441
      %p443 = scmp.ne.s32.totalorder %s434, %s435
      %p444 = scmp.eq.s32.totalorder %s46, 0
      %p445 = por %p443, %p444
      %p446 = scmp.ne.s32.totalorder %s434, %s435
      %p447 = scmp.eq.s32.totalorder %s47, 1
      %p448 = por %p446, %p447
      %p450 = scmp.ne.s32.totalorder %s435, %s449
      %p451 = scmp.eq.s32.totalorder %s47, 0
      %p452 = por %p450, %p451
      %s454 = sadd.s32 %s453, 1
      %p457 = scmp.eq.s32.totalorder %s41, 1
      %p458 = scmp.ne.s32.totalorder %s453, %s455
      %p459 = scmp.eq.s32.totalorder %s41, 0
      %p460 = por %p458, %p459
      %p461 = scmp.ne.s32.totalorder %s453, %s455
      %p462 = scmp.eq.s32.totalorder %s46, 1
      %p463 = por %p461, %p462
      %p464 = scmp.ne.s32.totalorder %s455, %s456
      %p465 = scmp.eq.s32.totalorder %s46, 0
      %p466 = por %p464, %p465
      %p467 = scmp.ne.s32.totalorder %s455, %s456
      %p468 = scmp.eq.s32.totalorder %s47, 1
      %p469 = por %p467, %p468
      %p471 = scmp.ne.s32.totalorder %s456, %s470
      %p472 = scmp.eq.s32.totalorder %s47, 0
      %p473 = por %p471, %p472
      %s475 = sadd.s32 %s474, 1
      %p478 = scmp.eq.s32.totalorder %s41, 1
      %p479 = scmp.ne.s32.totalorder %s474, %s476
      %p480 = scmp.eq.s32.totalorder %s41, 0
      %p481 = por %p479, %p480
      %p482 = scmp.ne.s32.totalorder %s474, %s476
      %p483 = scmp.eq.s32.totalorder %s46, 1
      %p484 = por %p482, %p483
      %p485 = scmp.ne.s32.totalorder %s476, %s477
      %p486 = scmp.eq.s32.totalorder %s46, 0
      %p487 = por %p485, %p486
      %p488 = scmp.ne.s32.totalorder %s476, %s477
      %p489 = scmp.eq.s32.totalorder %s47, 1
      %p490 = por %p488, %p489
      %p492 = scmp.ne.s32.totalorder %s477, %s491
      %p493 = scmp.eq.s32.totalorder %s47, 0
      %p494 = por %p492, %p493
      %s496 = sadd.s32 %s495, 1
      %p499 = scmp.eq.s32.totalorder %s41, 1
      %p500 = scmp.ne.s32.totalorder %s495, %s497
      %p501 = scmp.eq.s32.totalorder %s41, 0
      %p502 = por %p500, %p501
      %p503 = scmp.ne.s32.totalorder %s495, %s497
      %p504 = scmp.eq.s32.totalorder %s46, 1
      %p505 = por %p503, %p504
      %p506 = scmp.ne.s32.totalorder %s497, %s498
      %p507 = scmp.eq.s32.totalorder %s46, 0
      %p508 = por %p506, %p507
      %p509 = scmp.ne.s32.totalorder %s497, %s498
      %p510 = scmp.eq.s32.totalorder %s47, 1
      %p511 = por %p509, %p510
      %p513 = scmp.ne.s32.totalorder %s498, %s512
      %p514 = scmp.eq.s32.totalorder %s47, 0
      %p515 = por %p513, %p514
      %s517 = sadd.s32 %s516, 1
      %p520 = scmp.eq.s32.totalorder %s41, 1
      %p521 = scmp.ne.s32.totalorder %s516, %s518
      %p522 = scmp.eq.s32.totalorder %s41, 0
      %p523 = por %p521, %p522
      %p524 = scmp.ne.s32.totalorder %s516, %s518
      %p525 = scmp.eq.s32.totalorder %s46, 1
      %p526 = por %p524, %p525
      %p527 = scmp.ne.s32.totalorder %s518, %s519
      %p528 = scmp.eq.s32.totalorder %s46, 0
      %p529 = por %p527, %p528
      %p530 = scmp.ne.s32.totalorder %s518, %s519
      %p531 = scmp.eq.s32.totalorder %s47, 1
      %p532 = por %p530, %p531
      %p534 = scmp.ne.s32.totalorder %s519, %s533
      %p535 = scmp.eq.s32.totalorder %s47, 0
      %p536 = por %p534, %p535
      %s538 = sadd.s32 %s537, 1
      %p541 = scmp.eq.s32.totalorder %s41, 1
      %p542 = scmp.ne.s32.totalorder %s537, %s539
      %p543 = scmp.eq.s32.totalorder %s41, 0
      %p544 = por %p542, %p543
      %p545 = scmp.ne.s32.totalorder %s537, %s539
      %p546 = scmp.eq.s32.totalorder %s46, 1
      %p547 = por %p545, %p546
      %p548 = scmp.ne.s32.totalorder %s539, %s540
      %p549 = scmp.eq.s32.totalorder %s46, 0
      %p550 = por %p548, %p549
      %p551 = scmp.ne.s32.totalorder %s539, %s540
      %p552 = scmp.eq.s32.totalorder %s47, 1
      %p553 = por %p551, %p552
      %p555 = scmp.ne.s32.totalorder %s540, %s554
      %p556 = scmp.eq.s32.totalorder %s47, 0
      %p557 = por %p555, %p556
      %s558 = ssub.s32 %s41, %s48
      %p559 = scmp.eq.s32.totalorder %s558, 0
      %s561 = sadd.s32 %s560, 1
      %s562 = scalar_select %p559, %s560, %s561
      %p565 = pneg %p559
      %p566 = scmp.eq.s32.totalorder %s41, 1
      %p567 = por %p565, %p566
      %p568 = scmp.ne.s32.totalorder %s560, %s563
      %p569 = scmp.eq.s32.totalorder %s41, 0
      %p570 = por %p568, %p569
      %p571 = scmp.ne.s32.totalorder %s560, %s563
      %p572 = scmp.eq.s32.totalorder %s46, 1
      %p573 = por %p571, %p572
      %p574 = scmp.ne.s32.totalorder %s563, %s564
      %p575 = scmp.eq.s32.totalorder %s46, 0
      %p576 = por %p574, %p575
      %p577 = scmp.ne.s32.totalorder %s563, %s564
      %p578 = scmp.eq.s32.totalorder %s47, 1
      %p579 = por %p577, %p578
      %p581 = scmp.ne.s32.totalorder %s564, %s580
      %p582 = scmp.eq.s32.totalorder %s47, 0
      %p583 = por %p581, %p582
      %p584 = scmp.le.s32.totalorder 1, %s41
      %p585 = scmp.lt.s32.totalorder %s41, 3
      %p586 = pnand %p584, %p585
      %p587 = pneg %p586
      // Predicated region
      $region9: #{model_forward.1} parent=5 // pred_check
        _
      $region10: #{model_forward.1} parent=5 // pred_check_branch
        %589 = sbr.rel (%p586) target = $region12
      $region11: #{model_forward.1} parent=5 // pred_region
        %s590 = ssub.s32 %s41, 1
        // Predicated region
        $region13: #{model_forward.1} parent=11 // pred_check
          %p591 = pneg %p88
        $region14: #{model_forward.1} parent=11 // pred_check_branch
          %593 = sbr.rel (%p591) target = $region16
        $region15: #{model_forward.1} parent=11 // pred_region
          _
        $region16: #{model_forward.1} parent=11 // pred_fallthru
          _
        // Predicated region
        $region17: #{model_forward.1} parent=11 // pred_check
          %p594 = pneg %p109
        $region18: #{model_forward.1} parent=11 // pred_check_branch
          %596 = sbr.rel (%p594) target = $region20
        $region19: #{model_forward.1} parent=11 // pred_region
          _
        $region20: #{model_forward.1} parent=11 // pred_fallthru
          _
        // Predicated region
        $region21: #{model_forward.1} parent=11 // pred_check
          %p597 = pneg %p130
        $region22: #{model_forward.1} parent=11 // pred_check_branch
          %599 = sbr.rel (%p597) target = $region24
        $region23: #{model_forward.1} parent=11 // pred_region
          _
        $region24: #{model_forward.1} parent=11 // pred_fallthru
          _
        // Predicated region
        $region25: #{model_forward.1} parent=11 // pred_check
          %p600 = pneg %p151
        $region26: #{model_forward.1} parent=11 // pred_check_branch
          %602 = sbr.rel (%p600) target = $region28
        $region27: #{model_forward.1} parent=11 // pred_region
          _
        $region28: #{model_forward.1} parent=11 // pred_fallthru
          _
        // Predicated region
        $region29: #{model_forward.1} parent=11 // pred_check
          %p603 = pneg %p172
        $region30: #{model_forward.1} parent=11 // pred_check_branch
          %605 = sbr.rel (%p603) target = $region32
        $region31: #{model_forward.1} parent=11 // pred_region
          %s607 = ssub.s32 16, 16
          %608 = vsyncadd [#allocation3], %s607
          %s610 = sshll.u32 [#allocation2], 4
          %s611 = int_to_ptr.vmem [resolvable:$true] %s610
          %613 = dma.hbm_to_vmem [thread:$0]  %s5, 16, %s611, [#allocation3]
        $region32: #{model_forward.1} parent=11 // pred_fallthru
          _
        // Predicated region
        $region33: #{model_forward.1} parent=11 // pred_check
          %p614 = pneg %p193
        $region34: #{model_forward.1} parent=11 // pred_check_branch
          %616 = sbr.rel (%p614) target = $region36
        $region35: #{model_forward.1} parent=11 // pred_region
          %s618 = ssub.s32 256, 256
          %619 = vsyncadd [#allocation6], %s618
          %s620 = sshll.u32 [#allocation5], 4
          %s621 = int_to_ptr.vmem [resolvable:$true] %s620
          %626 = dma.hbm_to_vmem [thread:$0]  %s6, 256, %s621, [#allocation6], 128, 128, 8
        $region36: #{model_forward.1} parent=11 // pred_fallthru
          _
        // Predicated region
        $region37: #{model_forward.1} parent=11 // pred_check
          %p627 = pneg %p214
        $region38: #{model_forward.1} parent=11 // pred_check_branch
          %629 = sbr.rel (%p627) target = $region40
        $region39: #{model_forward.1} parent=11 // pred_region
          %s631 = ssub.s32 16, 16
          %632 = vsyncadd [#allocation6], %s631
          %s634 = sshll.u32 [#allocation7], 4
          %s635 = int_to_ptr.vmem [resolvable:$true] %s634
          %637 = dma.hbm_to_vmem [thread:$0]  %s7, 16, %s635, [#allocation6]
        $region40: #{model_forward.1} parent=11 // pred_fallthru
          _
        // Predicated region
        $region41: #{model_forward.1} parent=11 // pred_check
          %p638 = pneg %p235
        $region42: #{model_forward.1} parent=11 // pred_check_branch
          %640 = sbr.rel (%p638) target = $region44
        $region43: #{model_forward.1} parent=11 // pred_region
          _
        $region44: #{model_forward.1} parent=11 // pred_fallthru
          _
        // Predicated region
        $region45: #{model_forward.1} parent=11 // pred_check
          %p641 = pneg %p256
        $region46: #{model_forward.1} parent=11 // pred_check_branch
          %643 = sbr.rel (%p641) target = $region48
        $region47: #{model_forward.1} parent=11 // pred_region
          %s645 = ssub.s32 16, 16
          %646 = vsyncadd [#allocation9], %s645
          %s648 = sshll.u32 [#allocation8], 4
          %s649 = int_to_ptr.vmem [resolvable:$true] %s648
          %651 = dma.hbm_to_vmem [thread:$0]  %s9, 16, %s649, [#allocation9]
        $region48: #{model_forward.1} parent=11 // pred_fallthru
          _
        // Predicated region
        $region49: #{model_forward.1} parent=11 // pred_check
          %p652 = pneg %p277
        $region50: #{model_forward.1} parent=11 // pred_check_branch
          %654 = sbr.rel (%p652) target = $region52
        $region51: #{model_forward.1} parent=11 // pred_region
          %s656 = ssub.s32 256, 256
          %657 = vsyncadd [#allocation9], %s656
          %s658 = sshll.u32 [#allocation10], 4
          %s659 = int_to_ptr.vmem [resolvable:$true] %s658
          %664 = dma.hbm_to_vmem [thread:$0]  %s10, 256, %s659, [#allocation9], 128, 128, 8
        $region52: #{model_forward.1} parent=11 // pred_fallthru
          _
        // Predicated region
        $region53: #{model_forward.1} parent=11 // pred_check
          %p665 = pneg %p298
        $region54: #{model_forward.1} parent=11 // pred_check_branch
          %667 = sbr.rel (%p665) target = $region56
        $region55: #{model_forward.1} parent=11 // pred_region
          %s669 = ssub.s32 16, 16
          %670 = vsyncadd [#allocation12], %s669
          %s672 = sshll.u32 [#allocation11], 4
          %s673 = int_to_ptr.vmem [resolvable:$true] %s672
          %675 = dma.hbm_to_vmem [thread:$0]  %s11, 16, %s673, [#allocation12]
        $region56: #{model_forward.1} parent=11 // pred_fallthru
          _
        // Predicated region
        $region57: #{model_forward.1} parent=11 // pred_check
          %p676 = pneg %p319
        $region58: #{model_forward.1} parent=11 // pred_check_branch
          %678 = sbr.rel (%p676) target = $region60
        $region59: #{model_forward.1} parent=11 // pred_region
          %s680 = ssub.s32 256, 256
          %681 = vsyncadd [#allocation12], %s680
          %s682 = sshll.u32 [#allocation13], 4
          %s683 = int_to_ptr.vmem [resolvable:$true] %s682
          %688 = dma.hbm_to_vmem [thread:$0]  %s12, 256, %s683, [#allocation12], 128, 128, 8
        $region60: #{model_forward.1} parent=11 // pred_fallthru
          _
        // Predicated region
        $region61: #{model_forward.1} parent=11 // pred_check
          %p689 = pneg %p340
        $region62: #{model_forward.1} parent=11 // pred_check_branch
          %691 = sbr.rel (%p689) target = $region64
        $region63: #{model_forward.1} parent=11 // pred_region
          %s693 = ssub.s32 16, 16
          %694 = vsyncadd [#allocation15], %s693
          %s696 = sshll.u32 [#allocation14], 4
          %s697 = int_to_ptr.vmem [resolvable:$true] %s696
          %699 = dma.hbm_to_vmem [thread:$0]  %s13, 16, %s697, [#allocation15]
        $region64: #{model_forward.1} parent=11 // pred_fallthru
          _
        // Predicated region
        $region65: #{model_forward.1} parent=11 // pred_check
          %p700 = pneg %p361
        $region66: #{model_forward.1} parent=11 // pred_check_branch
          %702 = sbr.rel (%p700) target = $region68
        $region67: #{model_forward.1} parent=11 // pred_region
          %s704 = ssub.s32 1024, 1024
          %705 = vsyncadd [#allocation15], %s704
          %s706 = sshll.u32 [#allocation16], 4
          %s707 = int_to_ptr.vmem [resolvable:$true] %s706
          %712 = dma.hbm_to_vmem [thread:$0]  %s14, 1024, %s707, [#allocation15], 128, 128, 8
        $region68: #{model_forward.1} parent=11 // pred_fallthru
          _
        // Predicated region
        $region69: #{model_forward.1} parent=11 // pred_check
          %p713 = pneg %p382
        $region70: #{model_forward.1} parent=11 // pred_check_branch
          %715 = sbr.rel (%p713) target = $region72
        $region71: #{model_forward.1} parent=11 // pred_region
          %s717 = ssub.s32 16, 16
          %718 = vsyncadd [#allocation18], %s717
          %s720 = sshll.u32 [#allocation17], 4
          %s721 = int_to_ptr.vmem [resolvable:$true] %s720
          %723 = dma.hbm_to_vmem [thread:$0]  %s15, 16, %s721, [#allocation18]
        $region72: #{model_forward.1} parent=11 // pred_fallthru
          _
        // Predicated region
        $region73: #{model_forward.1} parent=11 // pred_check
          %p724 = pneg %p403
        $region74: #{model_forward.1} parent=11 // pred_check_branch
          %726 = sbr.rel (%p724) target = $region76
        $region75: #{model_forward.1} parent=11 // pred_region
          _
        $region76: #{model_forward.1} parent=11 // pred_fallthru
          _
        // Predicated region
        $region77: #{model_forward.1} parent=11 // pred_check
          %p727 = pneg %p424
        $region78: #{model_forward.1} parent=11 // pred_check_branch
          %729 = sbr.rel (%p727) target = $region80
        $region79: #{model_forward.1} parent=11 // pred_region
          %s731 = ssub.s32 16, 16
          %732 = vsyncadd [#allocation18], %s731
          %s734 = sshll.u32 [#allocation19], 4
          %s735 = int_to_ptr.vmem [resolvable:$true] %s734
          %737 = dma.hbm_to_vmem [thread:$0]  %s17, 16, %s735, [#allocation18]
        $region80: #{model_forward.1} parent=11 // pred_fallthru
          _
        // Predicated region
        $region81: #{model_forward.1} parent=11 // pred_check
          %p738 = pneg %p445
        $region82: #{model_forward.1} parent=11 // pred_check_branch
          %740 = sbr.rel (%p738) target = $region84
        $region83: #{model_forward.1} parent=11 // pred_region
          _
        $region84: #{model_forward.1} parent=11 // pred_fallthru
          _
        // Predicated region
        $region85: #{model_forward.1} parent=11 // pred_check
          %p741 = pneg %p466
        $region86: #{model_forward.1} parent=11 // pred_check_branch
          %743 = sbr.rel (%p741) target = $region88
        $region87: #{model_forward.1} parent=11 // pred_region
          %s745 = ssub.s32 32, 32
          %746 = vsyncadd [#allocation21], %s745
          %s748 = sshll.u32 [#allocation20], 4
          %s749 = int_to_ptr.vmem [resolvable:$true] %s748
          %751 = dma.hbm_to_vmem [thread:$0]  %s19, 32, %s749, [#allocation21]
        $region88: #{model_forward.1} parent=11 // pred_fallthru
          _
        // Predicated region
        $region89: #{model_forward.1} parent=11 // pred_check
          %p752 = pneg %p487
        $region90: #{model_forward.1} parent=11 // pred_check_branch
          %754 = sbr.rel (%p752) target = $region92
        $region91: #{model_forward.1} parent=11 // pred_region
          %s756 = ssub.s32 2048, 2048
          %757 = vsyncadd [#allocation21], %s756
          %s758 = sshll.u32 [#allocation22], 4
          %s759 = int_to_ptr.vmem [resolvable:$true] %s758
          %764 = dma.hbm_to_vmem [thread:$0]  %s20, 2048, %s759, [#allocation21], 256, 256, 16
        $region92: #{model_forward.1} parent=11 // pred_fallthru
          _
        // Predicated region
        $region93: #{model_forward.1} parent=11 // pred_check
          %p765 = pneg %p508
        $region94: #{model_forward.1} parent=11 // pred_check_branch
          %767 = sbr.rel (%p765) target = $region96
        $region95: #{model_forward.1} parent=11 // pred_region
          _
        $region96: #{model_forward.1} parent=11 // pred_fallthru
          _
        // Predicated region
        $region97: #{model_forward.1} parent=11 // pred_check
          %p768 = pneg %p529
        $region98: #{model_forward.1} parent=11 // pred_check_branch
          %770 = sbr.rel (%p768) target = $region100
        $region99: #{model_forward.1} parent=11 // pred_region
          _
        $region100: #{model_forward.1} parent=11 // pred_fallthru
          _
        // Predicated region
        $region101: #{model_forward.1} parent=11 // pred_check
          %p771 = pneg %p550
        $region102: #{model_forward.1} parent=11 // pred_check_branch
          %773 = sbr.rel (%p771) target = $region104
        $region103: #{model_forward.1} parent=11 // pred_region
          %s775 = ssub.s32 16, 16
          %776 = vsyncadd [#allocation24], %s775
          %s778 = sshll.u32 [#allocation23], 4
          %s779 = int_to_ptr.vmem [resolvable:$true] %s778
          %781 = dma.hbm_to_vmem [thread:$0]  %s23, 16, %s779, [#allocation24]
        $region104: #{model_forward.1} parent=11 // pred_fallthru
          _
      $region12: #{model_forward.1} parent=5 // pred_fallthru
        _
      %p782 = scmp.lt.s32.totalorder %s41, 2
      // Predicated region
      $region105: #{model_forward.1} parent=5 // pred_check
        %p783 = pneg %p782
      $region106: #{model_forward.1} parent=5 // pred_check_branch
        %785 = sbr.rel (%p783) target = $region108
      $region107: #{model_forward.1} parent=5 // pred_region
        // Predicated region
        $region109: #{model_forward.1} parent=107 // pred_check
          %p786 = pneg %p61
        $region110: #{model_forward.1} parent=107 // pred_check_branch
          %788 = sbr.rel (%p786) target = $region112
        $region111: #{model_forward.1} parent=107 // pred_region
          %p789 = scmp.lt.s32.totalorder %s41, 1
          %s790 = scalar_select %p789, %s41, 1
          %s791 = smul.addr %s790, 16
          %s792 = smul.addr %s791, 8
          %s793 = scalar_lea.vmem %s0, %s792
        $region112: #{model_forward.1} parent=107 // pred_fallthru
          _
      $region108: #{model_forward.1} parent=5 // pred_fallthru
        _
      %p794 = scmp.le.s32.totalorder 1, %s41
      %p795 = scmp.lt.s32.totalorder %s41, 3
      %p796 = pnand %p794, %p795
      %p797 = pneg %p796
      // Predicated region
      $region113: #{model_forward.1} parent=5 // pred_check
        _
      $region114: #{model_forward.1} parent=5 // pred_check_branch
        %799 = sbr.rel (%p796) target = $region116
      $region115: #{model_forward.1} parent=5 // pred_region
        %s800 = ssub.s32 %s41, 1
        // Predicated region
        $region117: #{model_forward.1} parent=115 // pred_check
          %p801 = pneg %p172
        $region118: #{model_forward.1} parent=115 // pred_check_branch
          %803 = sbr.rel (%p801) target = $region120
        $region119: #{model_forward.1} parent=115 // pred_region
          %804 = dma.done [#allocation3], 16
        $region120: #{model_forward.1} parent=115 // pred_fallthru
          _
        // Predicated region
        $region121: #{model_forward.1} parent=115 // pred_check
          %p805 = pneg %p193
        $region122: #{model_forward.1} parent=115 // pred_check_branch
          %807 = sbr.rel (%p805) target = $region124
        $region123: #{model_forward.1} parent=115 // pred_region
          %808 = dma.done [#allocation6], 256
        $region124: #{model_forward.1} parent=115 // pred_fallthru
          _
        // Predicated region
        $region125: #{model_forward.1} parent=115 // pred_check
          %p809 = pneg %p214
        $region126: #{model_forward.1} parent=115 // pred_check_branch
          %811 = sbr.rel (%p809) target = $region128
        $region127: #{model_forward.1} parent=115 // pred_region
          %812 = dma.done [#allocation6], 16
        $region128: #{model_forward.1} parent=115 // pred_fallthru
          _
        // Predicated region
        $region129: #{model_forward.1} parent=115 // pred_check
          %p813 = pneg %p256
        $region130: #{model_forward.1} parent=115 // pred_check_branch
          %815 = sbr.rel (%p813) target = $region132
        $region131: #{model_forward.1} parent=115 // pred_region
          %816 = dma.done [#allocation9], 16
        $region132: #{model_forward.1} parent=115 // pred_fallthru
          _
        // Predicated region
        $region133: #{model_forward.1} parent=115 // pred_check
          %p817 = pneg %p277
        $region134: #{model_forward.1} parent=115 // pred_check_branch
          %819 = sbr.rel (%p817) target = $region136
        $region135: #{model_forward.1} parent=115 // pred_region
          %820 = dma.done [#allocation9], 256
        $region136: #{model_forward.1} parent=115 // pred_fallthru
          _
        // Predicated region
        $region137: #{model_forward.1} parent=115 // pred_check
          %p821 = pneg %p298
        $region138: #{model_forward.1} parent=115 // pred_check_branch
          %823 = sbr.rel (%p821) target = $region140
        $region139: #{model_forward.1} parent=115 // pred_region
          %824 = dma.done [#allocation12], 16
        $region140: #{model_forward.1} parent=115 // pred_fallthru
          _
        // Predicated region
        $region141: #{model_forward.1} parent=115 // pred_check
          %p825 = pneg %p319
        $region142: #{model_forward.1} parent=115 // pred_check_branch
          %827 = sbr.rel (%p825) target = $region144
        $region143: #{model_forward.1} parent=115 // pred_region
          %828 = dma.done [#allocation12], 256
        $region144: #{model_forward.1} parent=115 // pred_fallthru
          _
        // Predicated region
        $region145: #{model_forward.1} parent=115 // pred_check
          %p829 = pneg %p340
        $region146: #{model_forward.1} parent=115 // pred_check_branch
          %831 = sbr.rel (%p829) target = $region148
        $region147: #{model_forward.1} parent=115 // pred_region
          %832 = dma.done [#allocation15], 16
        $region148: #{model_forward.1} parent=115 // pred_fallthru
          _
        // Predicated region
        $region149: #{model_forward.1} parent=115 // pred_check
          %p833 = pneg %p361
        $region150: #{model_forward.1} parent=115 // pred_check_branch
          %835 = sbr.rel (%p833) target = $region152
        $region151: #{model_forward.1} parent=115 // pred_region
          %836 = dma.done [#allocation15], 1024
        $region152: #{model_forward.1} parent=115 // pred_fallthru
          _
        // Predicated region
        $region153: #{model_forward.1} parent=115 // pred_check
          %p837 = pneg %p382
        $region154: #{model_forward.1} parent=115 // pred_check_branch
          %839 = sbr.rel (%p837) target = $region156
        $region155: #{model_forward.1} parent=115 // pred_region
          %840 = dma.done [#allocation18], 16
        $region156: #{model_forward.1} parent=115 // pred_fallthru
          _
        // Predicated region
        $region157: #{model_forward.1} parent=115 // pred_check
          %p841 = pneg %p424
        $region158: #{model_forward.1} parent=115 // pred_check_branch
          %843 = sbr.rel (%p841) target = $region160
        $region159: #{model_forward.1} parent=115 // pred_region
          %844 = dma.done [#allocation18], 16
        $region160: #{model_forward.1} parent=115 // pred_fallthru
          _
        // Predicated region
        $region161: #{model_forward.1} parent=115 // pred_check
          %p845 = pneg %p466
        $region162: #{model_forward.1} parent=115 // pred_check_branch
          %847 = sbr.rel (%p845) target = $region164
        $region163: #{model_forward.1} parent=115 // pred_region
          %848 = dma.done [#allocation21], 32
        $region164: #{model_forward.1} parent=115 // pred_fallthru
          _
        // Predicated region
        $region165: #{model_forward.1} parent=115 // pred_check
          %p849 = pneg %p487
        $region166: #{model_forward.1} parent=115 // pred_check_branch
          %851 = sbr.rel (%p849) target = $region168
        $region167: #{model_forward.1} parent=115 // pred_region
          %852 = dma.done [#allocation21], 2048
        $region168: #{model_forward.1} parent=115 // pred_fallthru
          _
        // Predicated region
        $region169: #{model_forward.1} parent=115 // pred_check
          %p853 = pneg %p550
        $region170: #{model_forward.1} parent=115 // pred_check_branch
          %855 = sbr.rel (%p853) target = $region172
        $region171: #{model_forward.1} parent=115 // pred_region
          %856 = dma.done [#allocation24], 16
        $region172: #{model_forward.1} parent=115 // pred_fallthru
          _
        %p857 = scmp.lt.s32.totalorder %s46, 1
        %s858 = scalar_select %p857, %s46, 1
        %s859 = smul.addr %s858, 16
        %s860 = smul.addr %s859, 8
        %s861 = scalar_lea.vmem %s0, %s860
        %p862 = pneg %p67
        %p863 = pneg %p64
        %p864 = pneg %p88
        %p865 = pneg %p85
        %p866 = pneg %p109
        %p867 = pneg %p106
        %p868 = pneg %p130
        %p869 = pneg %p127
        %p870 = pneg %p151
        %p871 = pneg %p148
        %p872 = pneg %p172
        %p873 = pneg %p169
        %p874 = pneg %p193
        %p875 = pneg %p190
        %p876 = pneg %p214
        %p877 = pneg %p211
        %p878 = pneg %p235
        %p879 = pneg %p232
        %p880 = pneg %p256
        %p881 = pneg %p253
        %p882 = pneg %p277
        %p883 = pneg %p274
        %p884 = pneg %p298
        %p885 = pneg %p295
        %p886 = pneg %p319
        %p887 = pneg %p316
        %p888 = pneg %p340
        %p889 = pneg %p337
        %p890 = pneg %p361
        %p891 = pneg %p358
        %p892 = pneg %p382
        %p893 = pneg %p379
        %p894 = pneg %p403
        %p895 = pneg %p400
        %p896 = pneg %p424
        %p897 = pneg %p421
        %p898 = pneg %p445
        %p899 = pneg %p442
        %p900 = pneg %p466
        %p901 = pneg %p463
        %p902 = pneg %p487
        %p903 = pneg %p484
        %p904 = pneg %p508
        %p905 = pneg %p505
        %p906 = pneg %p529
        %p907 = pneg %p526
        %p908 = pneg %p550
        %p909 = pneg %p547
        %p910 = pneg %p576
        %p911 = pneg %p573
        %s912 = sand.u32 %s563, 1
        %s913 = scalar_lea.sflag [#allocation4], %s912
        %s914 = sand.u32 %s563, 1
        %s915 = scalar_lea.vmem [#allocation25], %s914
        %p916 = scmp.lt.s32.totalorder %s46, 1
        %s917 = scalar_select %p916, %s46, 1
        %s918 = smul.addr %s917, 16
        %s919 = smul.addr %s918, 8
        %s920 = scalar_lea.vmem %s0, %s919
        %v921 = vld [vmem:[%s920] sm:$0xff]
        %v922 = vld [vmem:[%s920 + $0x8] sm:$0xff]
        %v923 = vld [vmem:[%s920 + $0x10] sm:$0xff]
        %v924 = vld [vmem:[%s920 + $0x18] sm:$0xff]
        %v925 = vld [vmem:[%s920 + $0x20] sm:$0xff]
        %v926 = vld [vmem:[%s920 + $0x28] sm:$0xff]
        %v927 = vld [vmem:[%s920 + $0x30] sm:$0xff]
        %v928 = vld [vmem:[%s920 + $0x38] sm:$0xff]
        %v929 = vld [vmem:[%s920 + $0x40] sm:$0xff]
        %v930 = vld [vmem:[%s920 + $0x48] sm:$0xff]
        %v931 = vld [vmem:[%s920 + $0x50] sm:$0xff]
        %v932 = vld [vmem:[%s920 + $0x58] sm:$0xff]
        %v933 = vld [vmem:[%s920 + $0x60] sm:$0xff]
        %v934 = vld [vmem:[%s920 + $0x68] sm:$0xff]
        %v935 = vld [vmem:[%s920 + $0x70] sm:$0xff]
        %v936 = vld [vmem:[%s920 + $0x78] sm:$0xff]
        %v937 = vld [vmem:[%s1] sm:$0xff]
        %v938 = vld [vmem:[%s1 + $0x8] sm:$0xff]
        %v939 = vld [vmem:[%s1 + $0x10] sm:$0xff]
        %v940 = vld [vmem:[%s1 + $0x18] sm:$0xff]
        %v941 = vld [vmem:[%s1 + $0x20] sm:$0xff]
        %v942 = vld [vmem:[%s1 + $0x28] sm:$0xff]
        %v943 = vld [vmem:[%s1 + $0x30] sm:$0xff]
        %v944 = vld [vmem:[%s1 + $0x38] sm:$0xff]
        %v945 = vld [vmem:[%s1 + $0x40] sm:$0xff]
        %v946 = vld [vmem:[%s1 + $0x48] sm:$0xff]
        %v947 = vld [vmem:[%s1 + $0x50] sm:$0xff]
        %v948 = vld [vmem:[%s1 + $0x58] sm:$0xff]
        %v949 = vld [vmem:[%s1 + $0x60] sm:$0xff]
        %v950 = vld [vmem:[%s1 + $0x68] sm:$0xff]
        %v951 = vld [vmem:[%s1 + $0x70] sm:$0xff]
        %v952 = vld [vmem:[%s1 + $0x78] sm:$0xff]
        %v953 = vld [vmem:[%s1 + $0x80] sm:$0xff]
        %v954 = vld [vmem:[%s1 + $0x88] sm:$0xff]
        %v955 = vld [vmem:[%s1 + $0x90] sm:$0xff]
        %v956 = vld [vmem:[%s1 + $0x98] sm:$0xff]
        %v957 = vld [vmem:[%s1 + $0xa0] sm:$0xff]
        %v958 = vld [vmem:[%s1 + $0xa8] sm:$0xff]
        %v959 = vld [vmem:[%s1 + $0xb0] sm:$0xff]
        %v960 = vld [vmem:[%s1 + $0xb8] sm:$0xff]
        %v961 = vld [vmem:[%s1 + $0xc0] sm:$0xff]
        %v962 = vld [vmem:[%s1 + $0xc8] sm:$0xff]
        %v963 = vld [vmem:[%s1 + $0xd0] sm:$0xff]
        %v964 = vld [vmem:[%s1 + $0xd8] sm:$0xff]
        %v965 = vld [vmem:[%s1 + $0xe0] sm:$0xff]
        %v966 = vld [vmem:[%s1 + $0xe8] sm:$0xff]
        %v967 = vld [vmem:[%s1 + $0xf0] sm:$0xff]
        %v968 = vld [vmem:[%s1 + $0xf8] sm:$0xff]
        %v969 = vld [vmem:[%s1 + $0x100] sm:$0xff]
        %v970 = vld [vmem:[%s1 + $0x108] sm:$0xff]
        %v971 = vld [vmem:[%s1 + $0x110] sm:$0xff]
        %v972 = vld [vmem:[%s1 + $0x118] sm:$0xff]
        %v973 = vld [vmem:[%s1 + $0x120] sm:$0xff]
        %v974 = vld [vmem:[%s1 + $0x128] sm:$0xff]
        %v975 = vld [vmem:[%s1 + $0x130] sm:$0xff]
        %v976 = vld [vmem:[%s1 + $0x138] sm:$0xff]
        %v977 = vld [vmem:[%s1 + $0x140] sm:$0xff]
        %v978 = vld [vmem:[%s1 + $0x148] sm:$0xff]
        %v979 = vld [vmem:[%s1 + $0x150] sm:$0xff]
        %v980 = vld [vmem:[%s1 + $0x158] sm:$0xff]
        %v981 = vld [vmem:[%s1 + $0x160] sm:$0xff]
        %v982 = vld [vmem:[%s1 + $0x168] sm:$0xff]
        %v983 = vld [vmem:[%s1 + $0x170] sm:$0xff]
        %v984 = vld [vmem:[%s1 + $0x178] sm:$0xff]
        %985 = vmatprep.subr.mxu0 0.0
        %986 = vmatpush1.msra.mxu0 %v921
        %987 = vmatprep.subr.mxu0 0.0
        %988 = vmatpush1.msra.mxu0 %v922
        %989 = vmatprep.subr.mxu0 0.0
        %990 = vmatpush1.msra.mxu0 %v923
        %991 = vmatprep.subr.mxu0 0.0
        %992 = vmatpush1.msra.mxu0 %v924
        %993 = vmatprep.subr.mxu0 0.0
        %994 = vmatpush1.msra.mxu0 %v925
        %995 = vmatprep.subr.mxu0 0.0
        %996 = vmatpush1.msra.mxu0 %v926
        %997 = vmatprep.subr.mxu0 0.0
        %998 = vmatpush1.msra.mxu0 %v927
        %999 = vmatprep.subr.mxu0 0.0
        %1000 = vmatpush1.msra.mxu0 %v928
        %1001 = vmatprep.subr.mxu0 0.0
        %1002 = vmatpush1.msra.mxu0 %v929
        %1003 = vmatprep.subr.mxu0 0.0
        %1004 = vmatpush1.msra.mxu0 %v930
        %1005 = vmatprep.subr.mxu0 0.0
        %1006 = vmatpush1.msra.mxu0 %v931
        %1007 = vmatprep.subr.mxu0 0.0
        %1008 = vmatpush1.msra.mxu0 %v932
        %1009 = vmatprep.subr.mxu0 0.0
        %1010 = vmatpush1.msra.mxu0 %v933
        %1011 = vmatprep.subr.mxu0 0.0
        %1012 = vmatpush1.msra.mxu0 %v934
        %1013 = vmatprep.subr.mxu0 0.0
        %1014 = vmatpush1.msra.mxu0 %v935
        %1015 = vmatprep.subr.mxu0 0.0
        %1016 = vmatpush1.msra.mxu0 %v936
        %1017 = vmatprep.subr.mxu0 0.0
        %1018 = vmatpush1.msra.mxu0 0.0
        %1019 = vmatprep.subr.mxu0 0.0
        %1020 = vmatpush1.msra.mxu0 0.0
        %1021 = vmatprep.subr.mxu0 0.0
        %1022 = vmatpush1.msra.mxu0 0.0
        %1023 = vmatprep.subr.mxu0 0.0
        %1024 = vmatpush1.msra.mxu0 0.0
        %1025 = vmatprep.subr.mxu0 0.0
        %1026 = vmatpush1.msra.mxu0 0.0
        %1027 = vmatprep.subr.mxu0 0.0
        %1028 = vmatpush1.msra.mxu0 0.0
        %1029 = vmatprep.subr.mxu0 0.0
        %1030 = vmatpush1.msra.mxu0 0.0
        %1031 = vmatprep.subr.mxu0 0.0
        %1032 = vmatpush1.msra.mxu0 0.0
        %1033 = vmatprep.subr.mxu0 0.0
        %1034 = vmatpush1.msra.mxu0 0.0
        %1035 = vmatprep.subr.mxu0 0.0
        %1036 = vmatpush1.msra.mxu0 0.0
        %1037 = vmatprep.subr.mxu0 0.0
        %1038 = vmatpush1.msra.mxu0 0.0
        %1039 = vmatprep.subr.mxu0 0.0
        %1040 = vmatpush1.msra.mxu0 0.0
        %1041 = vmatprep.subr.mxu0 0.0
        %1042 = vmatpush1.msra.mxu0 0.0
        %1043 = vmatprep.subr.mxu0 0.0
        %1044 = vmatpush1.msra.mxu0 0.0
        %1045 = vmatprep.subr.mxu0 0.0
        %1046 = vmatpush1.msra.mxu0 0.0
        %1047 = vmatprep.subr.mxu0 0.0
        %1048 = vmatpush1.msra.mxu0 0.0
        %1049 = vmatprep.mubr.f32.mxu0 0.0
        %1050 = vmatmul.mubr.f32.gmra.mrb[0].mxu0 %v937
        %v1051 = vpop.f32.mrb[0].mxu0
        %v1052 = vadd.f32 0.0, %v1051
        %v1053 = vpop.f32.mrb[0].mxu0
        %1054 = vmatprep.mubr.f32.mxu0 0.0
        %1055 = vmatmul.mubr.f32.gmra.mrb[0].mxu0 %v938
        %v1056 = vpop.f32.mrb[0].mxu0
        %v1057 = vadd.f32 0.0, %v1056
        %v1058 = vpop.f32.mrb[0].mxu0
        %1059 = vmatprep.mubr.f32.mxu0 0.0
        %1060 = vmatmul.mubr.f32.gmra.mrb[0].mxu0 %v939
        %v1061 = vpop.f32.mrb[0].mxu0
        %v1062 = vadd.f32 0.0, %v1061
        %v1063 = vpop.f32.mrb[0].mxu0
        %1064 = vmatprep.mubr.f32.mxu0 0.0
        %1065 = vmatmul.mubr.f32.gmra.mrb[0].mxu0 %v940
        %v1066 = vpop.f32.mrb[0].mxu0
        %v1067 = vadd.f32 0.0, %v1066
        %v1068 = vpop.f32.mrb[0].mxu0
        %1069 = vmatprep.mubr.f32.mxu0 0.0
        %1070 = vmatmul.mubr.f32.gmra.mrb[0].mxu0 %v941
        %v1071 = vpop.f32.mrb[0].mxu0
        %v1072 = vpop.f32.mrb[0].mxu0
        %1073 = vmatprep.mubr.f32.mxu0 0.0
        %1074 = vmatmul.mubr.f32.gmra.mrb[0].mxu0 %v942
        %v1075 = vpop.f32.mrb[0].mxu0
        %v1076 = vpop.f32.mrb[0].mxu0
        %1077 = vmatprep.mubr.f32.mxu0 0.0
        %1078 = vmatmul.mubr.f32.gmra.mrb[0].mxu0 %v943
        %v1079 = vpop.f32.mrb[0].mxu0
        %v1080 = vpop.f32.mrb[0].mxu0
        %1081 = vmatprep.mubr.f32.mxu0 0.0
        %1082 = vmatmul.mubr.f32.gmra.mrb[0].mxu0 %v944
        %v1083 = vpop.f32.mrb[0].mxu0
        %v1084 = vpop.f32.mrb[0].mxu0
        %1085 = vmatprep.mubr.f32.mxu0 0.0
        %1086 = vmatmul.mubr.f32.gmra.mrb[0].mxu0 %v945
        %v1087 = vpop.f32.mrb[0].mxu0
        %v1088 = vpop.f32.mrb[0].mxu0
        %1089 = vmatprep.mubr.f32.mxu0 0.0
        %1090 = vmatmul.mubr.f32.gmra.mrb[0].mxu0 %v946
        %v1091 = vpop.f32.mrb[0].mxu0
        %v1092 = vpop.f32.mrb[0].mxu0
        %1093 = vmatprep.mubr.f32.mxu0 0.0
        %1094 = vmatmul.mubr.f32.gmra.mrb[0].mxu0 %v947
        %v1095 = vpop.f32.mrb[0].mxu0
        %v1096 = vpop.f32.mrb[0].mxu0
        %1097 = vmatprep.mubr.f32.mxu0 0.0
        %1098 = vmatmul.mubr.f32.gmra.mrb[0].mxu0 %v948
        %v1099 = vpop.f32.mrb[0].mxu0
        %v1100 = vpop.f32.mrb[0].mxu0
        %1101 = vmatprep.mubr.f32.mxu0 0.0
        %1102 = vmatmul.mubr.f32.gmra.mrb[0].mxu0 %v949
        %v1103 = vpop.f32.mrb[0].mxu0
        %v1104 = vpop.f32.mrb[0].mxu0
        %1105 = vmatprep.mubr.f32.mxu0 0.0
        %1106 = vmatmul.mubr.f32.gmra.mrb[0].mxu0 %v950
        %v1107 = vpop.f32.mrb[0].mxu0
        %v1108 = vpop.f32.mrb[0].mxu0
        %1109 = vmatprep.mubr.f32.mxu0 0.0
        %1110 = vmatmul.mubr.f32.gmra.mrb[0].mxu0 %v951
        %v1111 = vpop.f32.mrb[0].mxu0
        %v1112 = vpop.f32.mrb[0].mxu0
        %1113 = vmatprep.mubr.f32.mxu0 0.0
        %1114 = vmatmul.mubr.f32.gmra.mrb[0].mxu0 %v952
        %v1115 = vpop.f32.mrb[0].mxu0
        %v1116 = vpop.f32.mrb[0].mxu0
        %1117 = vmatprep.mubr.f32.mxu0 0.0
        %1118 = vmatmul.mubr.f32.gmra.mrb[0].mxu0 %v953
        %v1119 = vpop.f32.mrb[0].mxu0
        %v1120 = vadd.f32 0.0, %v1119
        %v1121 = vpop.f32.mrb[0].mxu0
        %1122 = vmatprep.mubr.f32.mxu0 0.0
        %1123 = vmatmul.mubr.f32.gmra.mrb[0].mxu0 %v954
        %v1124 = vpop.f32.mrb[0].mxu0
        %v1125 = vadd.f32 0.0, %v1124
        %v1126 = vpop.f32.mrb[0].mxu0
        %1127 = vmatprep.mubr.f32.mxu0 0.0
        %1128 = vmatmul.mubr.f32.gmra.mrb[0].mxu0 %v955
        %v1129 = vpop.f32.mrb[0].mxu0
        %v1130 = vadd.f32 0.0, %v1129
        %v1131 = vpop.f32.mrb[0].mxu0
        %1132 = vmatprep.mubr.f32.mxu0 0.0
        %1133 = vmatmul.mubr.f32.gmra.mrb[0].mxu0 %v956
        %v1134 = vpop.f32.mrb[0].mxu0
        %v1135 = vadd.f32 0.0, %v1134
        %v1136 = vpop.f32.mrb[0].mxu0
        %1137 = vmatprep.mubr.f32.mxu0 0.0
        %1138 = vmatmul.mubr.f32.gmra.mrb[0].mxu0 %v957
        %v1139 = vpop.f32.mrb[0].mxu0
        %v1140 = vpop.f32.mrb[0].mxu0
        %1141 = vmatprep.mubr.f32.mxu0 0.0
        %1142 = vmatmul.mubr.f32.gmra.mrb[0].mxu0 %v958
        %v1143 = vpop.f32.mrb[0].mxu0
        %v1144 = vpop.f32.mrb[0].mxu0
        %1145 = vmatprep.mubr.f32.mxu0 0.0
        %1146 = vmatmul.mubr.f32.gmra.mrb[0].mxu0 %v959
        %v1147 = vpop.f32.mrb[0].mxu0
        %v1148 = vpop.f32.mrb[0].mxu0
        %1149 = vmatprep.mubr.f32.mxu0 0.0
        %1150 = vmatmul.mubr.f32.gmra.mrb[0].mxu0 %v960
        %v1151 = vpop.f32.mrb[0].mxu0
        %v1152 = vpop.f32.mrb[0].mxu0
        %1153 = vmatprep.mubr.f32.mxu0 0.0
        %1154 = vmatmul.mubr.f32.gmra.mrb[0].mxu0 %v961
        %v1155 = vpop.f32.mrb[0].mxu0
        %v1156 = vpop.f32.mrb[0].mxu0
        %1157 = vmatprep.mubr.f32.mxu0 0.0
        %1158 = vmatmul.mubr.f32.gmra.mrb[0].mxu0 %v962
        %v1159 = vpop.f32.mrb[0].mxu0
        %v1160 = vpop.f32.mrb[0].mxu0
        %1161 = vmatprep.mubr.f32.mxu0 0.0
        %1162 = vmatmul.mubr.f32.gmra.mrb[0].mxu0 %v963
        %v1163 = vpop.f32.mrb[0].mxu0
        %v1164 = vpop.f32.mrb[0].mxu0
        %1165 = vmatprep.mubr.f32.mxu0 0.0
        %1166 = vmatmul.mubr.f32.gmra.mrb[0].mxu0 %v964
        %v1167 = vpop.f32.mrb[0].mxu0
        %v1168 = vpop.f32.mrb[0].mxu0
        %1169 = vmatprep.mubr.f32.mxu0 0.0
        %1170 = vmatmul.mubr.f32.gmra.mrb[0].mxu0 %v965
        %v1171 = vpop.f32.mrb[0].mxu0
        %v1172 = vpop.f32.mrb[0].mxu0
        %1173 = vmatprep.mubr.f32.mxu0 0.0
        %1174 = vmatmul.mubr.f32.gmra.mrb[0].mxu0 %v966
        %v1175 = vpop.f32.mrb[0].mxu0
        %v1176 = vpop.f32.mrb[0].mxu0
        %1177 = vmatprep.mubr.f32.mxu0 0.0
        %1178 = vmatmul.mubr.f32.gmra.mrb[0].mxu0 %v967
        %v1179 = vpop.f32.mrb[0].mxu0
        %v1180 = vpop.f32.mrb[0].mxu0
        %1181 = vmatprep.mubr.f32.mxu0 0.0
        %1182 = vmatmul.mubr.f32.gmra.mrb[0].mxu0 %v968
        %v1183 = vpop.f32.mrb[0].mxu0
        %v1184 = vpop.f32.mrb[0].mxu0
        %1185 = vmatprep.mubr.f32.mxu0 0.0
        %1186 = vmatmul.mubr.f32.gmra.mrb[0].mxu0 %v969
        %v1187 = vpop.f32.mrb[0].mxu0
        %v1188 = vadd.f32 0.0, %v1187
        %v1189 = vpop.f32.mrb[0].mxu0
        %1190 = vmatprep.mubr.f32.mxu0 0.0
        %1191 = vmatmul.mubr.f32.gmra.mrb[0].mxu0 %v970
        %v1192 = vpop.f32.mrb[0].mxu0
        %v1193 = vadd.f32 0.0, %v1192
        %v1194 = vpop.f32.mrb[0].mxu0
        %1195 = vmatprep.mubr.f32.mxu0 0.0
        %1196 = vmatmul.mubr.f32.gmra.mrb[0].mxu0 %v971
        %v1197 = vpop.f32.mrb[0].mxu0
        %v1198 = vadd.f32 0.0, %v1197
        %v1199 = vpop.f32.mrb[0].mxu0
        %1200 = vmatprep.mubr.f32.mxu0 0.0
        %1201 = vmatmul.mubr.f32.gmra.mrb[0].mxu0 %v972
        %v1202 = vpop.f32.mrb[0].mxu0
        %v1203 = vadd.f32 0.0, %v1202
        %v1204 = vpop.f32.mrb[0].mxu0
        %1205 = vmatprep.mubr.f32.mxu0 0.0
        %1206 = vmatmul.mubr.f32.gmra.mrb[0].mxu0 %v973
        %v1207 = vpop.f32.mrb[0].mxu0
        %v1208 = vpop.f32.mrb[0].mxu0
        %1209 = vmatprep.mubr.f32.mxu0 0.0
        %1210 = vmatmul.mubr.f32.gmra.mrb[0].mxu0 %v974
        %v1211 = vpop.f32.mrb[0].mxu0
        %v1212 = vpop.f32.mrb[0].mxu0
        %1213 = vmatprep.mubr.f32.mxu0 0.0
        %1214 = vmatmul.mubr.f32.gmra.mrb[0].mxu0 %v975
        %v1215 = vpop.f32.mrb[0].mxu0
        %v1216 = vpop.f32.mrb[0].mxu0
        %1217 = vmatprep.mubr.f32.mxu0 0.0
        %1218 = vmatmul.mubr.f32.gmra.mrb[0].mxu0 %v976
        %v1219 = vpop.f32.mrb[0].mxu0
        %v1220 = vpop.f32.mrb[0].mxu0
        %1221 = vmatprep.mubr.f32.mxu0 0.0
        %1222 = vmatmul.mubr.f32.gmra.mrb[0].mxu0 %v977
        %v1223 = vpop.f32.mrb[0].mxu0
        %v1224 = vpop.f32.mrb[0].mxu0
        %1225 = vmatprep.mubr.f32.mxu0 0.0
        %1226 = vmatmul.mubr.f32.gmra.mrb[0].mxu0 %v978
        %v1227 = vpop.f32.mrb[0].mxu0
        %v1228 = vpop.f32.mrb[0].mxu0
        %1229 = vmatprep.mubr.f32.mxu0 0.0
        %1230 = vmatmul.mubr.f32.gmra.mrb[0].mxu0 %v979
        %v1231 = vpop.f32.mrb[0].mxu0
        %v1232 = vpop.f32.mrb[0].mxu0
        %1233 = vmatprep.mubr.f32.mxu0 0.0
        %1234 = vmatmul.mubr.f32.gmra.mrb[0].mxu0 %v980
        %v1235 = vpop.f32.mrb[0].mxu0
        %v1236 = vpop.f32.mrb[0].mxu0
        %1237 = vmatprep.mubr.f32.mxu0 0.0
        %1238 = vmatmul.mubr.f32.gmra.mrb[0].mxu0 %v981
        %v1239 = vpop.f32.mrb[0].mxu0
        %v1240 = vpop.f32.mrb[0].mxu0
        %1241 = vmatprep.mubr.f32.mxu0 0.0
        %1242 = vmatmul.mubr.f32.gmra.mrb[0].mxu0 %v982
        %v1243 = vpop.f32.mrb[0].mxu0
        %v1244 = vpop.f32.mrb[0].mxu0
        %1245 = vmatprep.mubr.f32.mxu0 0.0
        %1246 = vmatmul.mubr.f32.gmra.mrb[0].mxu0 %v983
        %v1247 = vpop.f32.mrb[0].mxu0
        %v1248 = vpop.f32.mrb[0].mxu0
        %1249 = vmatprep.mubr.f32.mxu0 0.0
        %1250 = vmatmul.mubr.f32.gmra.mrb[0].mxu0 %v984
        %v1251 = vpop.f32.mrb[0].mxu0
        %v1252 = vpop.f32.mrb[0].mxu0
        %1253 = vdwg.mxu0
        %v1254 = vld [vmem:[%s4] sm:$0xf]
        %1256 = vset.pattern.permute.xlu0 0
        %1257 = vperm.xlu0 %1256, %v921
        %v1258 = vpop.permute.xlu0 %1257
        %1261 = vset.pattern.permute.xlu0 0
        %1262 = vperm.xlu0 %1261, %v922
        %v1263 = vpop.permute.xlu0 %1262
        %1266 = vset.pattern.permute.xlu0 0
        %1267 = vperm.xlu0 %1266, %v923
        %v1268 = vpop.permute.xlu0 %1267
        %1271 = vset.pattern.permute.xlu0 0
        %1272 = vperm.xlu0 %1271, %v924
        %v1273 = vpop.permute.xlu0 %1272
        %v1275 = vlaneseq
        %v1276 = vshrl.u32 %v1275, 7
        %v1277 = vsub.s32 0, %v1276
        %v1278 = vrot.slane %v1254, %v1277
        %v1279 = vmul.f32 %v1258, %v1278
        %v1280 = vmul.f32 %v1263, %v1278
        %v1281 = vmul.f32 %v1268, %v1278
        %v1282 = vmul.f32 %v1273, %v1278
        %1284 = vset.pattern.permute.xlu0 0
        %1285 = vperm.xlu0 %1284, %v1052
        %v1286 = vpop.permute.xlu0 %1285
        %1289 = vset.pattern.permute.xlu0 0
        %1290 = vperm.xlu0 %1289, %v1057
        %v1291 = vpop.permute.xlu0 %1290
        %1294 = vset.pattern.permute.xlu0 0
        %1295 = vperm.xlu0 %1294, %v1062
        %v1296 = vpop.permute.xlu0 %1295
        %1299 = vset.pattern.permute.xlu0 0
        %1300 = vperm.xlu0 %1299, %v1067
        %v1301 = vpop.permute.xlu0 %1300
        %v1303 = vlaneseq
        %v1304 = vshrl.u32 %v1303, 7
        %v1305 = vsub.s32 1, %v1304
        %v1306 = vrot.slane %v1254, %v1305
        %v1307 = vmul.f32 %v1286, %v1306
        %v1308 = vmul.f32 %v1291, %v1306
        %v1309 = vmul.f32 %v1296, %v1306
        %v1310 = vmul.f32 %v1301, %v1306
        %v1311 = vadd.f32 %v1279, %v1307
        %v1312 = vadd.f32 %v1280, %v1308
        %v1313 = vadd.f32 %v1281, %v1309
        %v1314 = vadd.f32 %v1282, %v1310
        %1316 = vset.pattern.permute.xlu0 0
        %1317 = vperm.xlu0 %1316, %v1120
        %v1318 = vpop.permute.xlu0 %1317
        %1321 = vset.pattern.permute.xlu0 0
        %1322 = vperm.xlu0 %1321, %v1125
        %v1323 = vpop.permute.xlu0 %1322
        %1326 = vset.pattern.permute.xlu0 0
        %1327 = vperm.xlu0 %1326, %v1130
        %v1328 = vpop.permute.xlu0 %1327
        %1331 = vset.pattern.permute.xlu0 0
        %1332 = vperm.xlu0 %1331, %v1135
        %v1333 = vpop.permute.xlu0 %1332
        %v1335 = vlaneseq
        %v1336 = vshrl.u32 %v1335, 7
        %v1337 = vsub.s32 2, %v1336
        %v1338 = vrot.slane %v1254, %v1337
        %v1339 = vmul.f32 %v1318, %v1338
        %v1340 = vmul.f32 %v1323, %v1338
        %v1341 = vmul.f32 %v1328, %v1338
        %v1342 = vmul.f32 %v1333, %v1338
        %v1343 = vadd.f32 %v1311, %v1339
        %v1344 = vadd.f32 %v1312, %v1340
        %v1345 = vadd.f32 %v1313, %v1341
        %v1346 = vadd.f32 %v1314, %v1342
        %1348 = vset.pattern.permute.xlu0 0
        %1349 = vperm.xlu0 %1348, %v1188
        %v1350 = vpop.permute.xlu0 %1349
        %1353 = vset.pattern.permute.xlu0 0
        %1354 = vperm.xlu0 %1353, %v1193
        %v1355 = vpop.permute.xlu0 %1354
        %1358 = vset.pattern.permute.xlu0 0
        %1359 = vperm.xlu0 %1358, %v1198
        %v1360 = vpop.permute.xlu0 %1359
        %1363 = vset.pattern.permute.xlu0 0
        %1364 = vperm.xlu0 %1363, %v1203
        %v1365 = vpop.permute.xlu0 %1364
        %v1367 = vlaneseq
        %v1368 = vshrl.u32 %v1367, 7
        %v1369 = vsub.s32 3, %v1368
        %v1370 = vrot.slane %v1254, %v1369
        %v1371 = vmul.f32 %v1350, %v1370
        %v1372 = vmul.f32 %v1355, %v1370
        %v1373 = vmul.f32 %v1360, %v1370
        %v1374 = vmul.f32 %v1365, %v1370
        %v1375 = vadd.f32 %v1343, %v1371
        %v1376 = vadd.f32 %v1344, %v1372
        %v1377 = vadd.f32 %v1345, %v1373
        %v1378 = vadd.f32 %v1346, %v1374
        %v1379 = vld [vmem:[#allocation2] sm:$0x1]
        %v1381 = vlaneseq
        %v1382 = vshrl.u32 %v1381, 7
        %v1383 = vsub.s32 0, %v1382
        %v1384 = vrot.slane %v1379, %v1383
        %v1386 = vadd.f32 %v1375, %v1384
        %v1387 = vadd.f32 %v1376, %v1384
        %v1388 = vadd.f32 %v1377, %v1384
        %v1389 = vadd.f32 %v1378, %v1384
        %v1390 = vmax.f32 %v1386, 0.0
        %v1391 = vmax.f32 %v1387, 0.0
        %v1392 = vmax.f32 %v1388, 0.0
        %v1393 = vmax.f32 %v1389, 0.0
        %v1394 = vld [vmem:[#allocation13] sm:$0xff]
        %v1395 = vld [vmem:[#allocation13 + $0x8] sm:$0xff]
        %v1396 = vld [vmem:[#allocation14] sm:$0x1]
        %v1398 = vlaneseq
        %v1399 = vshrl.u32 %v1398, 7
        %v1400 = vsub.s32 0, %v1399
        %v1401 = vrot.slane %v1396, %v1400
        %vm1403 = vcmask 130048
        %v1405 = vsel %vm1403, %v1390, 0
        %v1408 = vsel %vm1403, %v1391, 0
        %v1411 = vsel %vm1403, %v1392, 0
        %v1414 = vsel %vm1403, %v1393, 0
        %1416 = vmatprep.subr.mxu0 0.0
        %1417 = vmatpush1.msra.mxu0 %v1394
        %1418 = vmatprep.subr.mxu0 0.0
        %1419 = vmatpush1.msra.mxu0 %v1395
        %1420 = vmatprep.subr.mxu0 0.0
        %1421 = vmatpush1.msra.mxu0 0.0
        %1422 = vmatprep.subr.mxu0 0.0
        %1423 = vmatpush1.msra.mxu0 0.0
        %1424 = vmatprep.subr.mxu0 0.0
        %1425 = vmatpush1.msra.mxu0 0.0
        %1426 = vmatprep.subr.mxu0 0.0
        %1427 = vmatpush1.msra.mxu0 0.0
        %1428 = vmatprep.subr.mxu0 0.0
        %1429 = vmatpush1.msra.mxu0 0.0
        %1430 = vmatprep.subr.mxu0 0.0
        %1431 = vmatpush1.msra.mxu0 0.0
        %1432 = vmatprep.subr.mxu0 0.0
        %1433 = vmatpush1.msra.mxu0 0.0
        %1434 = vmatprep.subr.mxu0 0.0
        %1435 = vmatpush1.msra.mxu0 0.0
        %1436 = vmatprep.subr.mxu0 0.0
        %1437 = vmatpush1.msra.mxu0 0.0
        %1438 = vmatprep.subr.mxu0 0.0
        %1439 = vmatpush1.msra.mxu0 0.0
        %1440 = vmatprep.subr.mxu0 0.0
        %1441 = vmatpush1.msra.mxu0 0.0
        %1442 = vmatprep.subr.mxu0 0.0
        %1443 = vmatpush1.msra.mxu0 0.0
        %1444 = vmatprep.subr.mxu0 0.0
        %1445 = vmatpush1.msra.mxu0 0.0
        %1446 = vmatprep.subr.mxu0 0.0
        %1447 = vmatpush1.msra.mxu0 0.0
        %1448 = vmatprep.subr.mxu0 0.0
        %1449 = vmatpush1.msra.mxu0 0.0
        %1450 = vmatprep.subr.mxu0 0.0
        %1451 = vmatpush1.msra.mxu0 0.0
        %1452 = vmatprep.subr.mxu0 0.0
        %1453 = vmatpush1.msra.mxu0 0.0
        %1454 = vmatprep.subr.mxu0 0.0
        %1455 = vmatpush1.msra.mxu0 0.0
        %1456 = vmatprep.subr.mxu0 0.0
        %1457 = vmatpush1.msra.mxu0 0.0
        %1458 = vmatprep.subr.mxu0 0.0
        %1459 = vmatpush1.msra.mxu0 0.0
        %1460 = vmatprep.subr.mxu0 0.0
        %1461 = vmatpush1.msra.mxu0 0.0
        %1462 = vmatprep.subr.mxu0 0.0
        %1463 = vmatpush1.msra.mxu0 0.0
        %1464 = vmatprep.subr.mxu0 0.0
        %1465 = vmatpush1.msra.mxu0 0.0
        %1466 = vmatprep.subr.mxu0 0.0
        %1467 = vmatpush1.msra.mxu0 0.0
        %1468 = vmatprep.subr.mxu0 0.0
        %1469 = vmatpush1.msra.mxu0 0.0
        %1470 = vmatprep.subr.mxu0 0.0
        %1471 = vmatpush1.msra.mxu0 0.0
        %1472 = vmatprep.subr.mxu0 0.0
        %1473 = vmatpush1.msra.mxu0 0.0
        %1474 = vmatprep.subr.mxu0 0.0
        %1475 = vmatpush1.msra.mxu0 0.0
        %1476 = vmatprep.subr.mxu0 0.0
        %1477 = vmatpush1.msra.mxu0 0.0
        %1478 = vmatprep.subr.mxu0 0.0
        %1479 = vmatpush1.msra.mxu0 0.0
        %1480 = vmatprep.mubr.f32.mxu0 0.0
        %1481 = vmatmul.mubr.f32.gmra.mrb[0].mxu0 %v1405
        %v1482 = vpop.f32.mrb[0].mxu0
        %v1483 = vadd.f32 %v1401, %v1482
        %v1484 = vpop.f32.mrb[0].mxu0
        %1485 = vmatprep.mubr.f32.mxu0 0.0
        %1486 = vmatmul.mubr.f32.gmra.mrb[0].mxu0 %v1408
        %v1487 = vpop.f32.mrb[0].mxu0
        %v1488 = vpop.f32.mrb[0].mxu0
        %1489 = vmatprep.mubr.f32.mxu0 0.0
        %1490 = vmatmul.mubr.f32.gmra.mrb[0].mxu0 %v1411
        %v1491 = vpop.f32.mrb[0].mxu0
        %v1492 = vpop.f32.mrb[0].mxu0
        %1493 = vmatprep.mubr.f32.mxu0 0.0
        %1494 = vmatmul.mubr.f32.gmra.mrb[0].mxu0 %v1414
        %v1495 = vpop.f32.mrb[0].mxu0
        %v1496 = vpop.f32.mrb[0].mxu0
        %1497 = vdwg.mxu0
        %v1498 = vld [vmem:[#allocation5] sm:$0xff]
        %v1499 = vld [vmem:[#allocation5 + $0x8] sm:$0xff]
        %v1500 = vld [vmem:[#allocation7] sm:$0x1]
        %v1502 = vlaneseq
        %v1503 = vshrl.u32 %v1502, 7
        %v1504 = vsub.s32 0, %v1503
        %v1505 = vrot.slane %v1500, %v1504
        %1507 = vmatprep.subr.mxu0 0.0
        %1508 = vmatpush1.msra.mxu0 %v1498
        %1509 = vmatprep.subr.mxu0 0.0
        %1510 = vmatpush1.msra.mxu0 %v1499
        %1511 = vmatprep.subr.mxu0 0.0
        %1512 = vmatpush1.msra.mxu0 0.0
        %1513 = vmatprep.subr.mxu0 0.0
        %1514 = vmatpush1.msra.mxu0 0.0
        %1515 = vmatprep.subr.mxu0 0.0
        %1516 = vmatpush1.msra.mxu0 0.0
        %1517 = vmatprep.subr.mxu0 0.0
        %1518 = vmatpush1.msra.mxu0 0.0
        %1519 = vmatprep.subr.mxu0 0.0
        %1520 = vmatpush1.msra.mxu0 0.0
        %1521 = vmatprep.subr.mxu0 0.0
        %1522 = vmatpush1.msra.mxu0 0.0
        %1523 = vmatprep.subr.mxu0 0.0
        %1524 = vmatpush1.msra.mxu0 0.0
        %1525 = vmatprep.subr.mxu0 0.0
        %1526 = vmatpush1.msra.mxu0 0.0
        %1527 = vmatprep.subr.mxu0 0.0
        %1528 = vmatpush1.msra.mxu0 0.0
        %1529 = vmatprep.subr.mxu0 0.0
        %1530 = vmatpush1.msra.mxu0 0.0
        %1531 = vmatprep.subr.mxu0 0.0
        %1532 = vmatpush1.msra.mxu0 0.0
        %1533 = vmatprep.subr.mxu0 0.0
        %1534 = vmatpush1.msra.mxu0 0.0
        %1535 = vmatprep.subr.mxu0 0.0
        %1536 = vmatpush1.msra.mxu0 0.0
        %1537 = vmatprep.subr.mxu0 0.0
        %1538 = vmatpush1.msra.mxu0 0.0
        %1539 = vmatprep.subr.mxu0 0.0
        %1540 = vmatpush1.msra.mxu0 0.0
        %1541 = vmatprep.subr.mxu0 0.0
        %1542 = vmatpush1.msra.mxu0 0.0
        %1543 = vmatprep.subr.mxu0 0.0
        %1544 = vmatpush1.msra.mxu0 0.0
        %1545 = vmatprep.subr.mxu0 0.0
        %1546 = vmatpush1.msra.mxu0 0.0
        %1547 = vmatprep.subr.mxu0 0.0
        %1548 = vmatpush1.msra.mxu0 0.0
        %1549 = vmatprep.subr.mxu0 0.0
        %1550 = vmatpush1.msra.mxu0 0.0
        %1551 = vmatprep.subr.mxu0 0.0
        %1552 = vmatpush1.msra.mxu0 0.0
        %1553 = vmatprep.subr.mxu0 0.0
        %1554 = vmatpush1.msra.mxu0 0.0
        %1555 = vmatprep.subr.mxu0 0.0
        %1556 = vmatpush1.msra.mxu0 0.0
        %1557 = vmatprep.subr.mxu0 0.0
        %1558 = vmatpush1.msra.mxu0 0.0
        %1559 = vmatprep.subr.mxu0 0.0
        %1560 = vmatpush1.msra.mxu0 0.0
        %1561 = vmatprep.subr.mxu0 0.0
        %1562 = vmatpush1.msra.mxu0 0.0
        %1563 = vmatprep.subr.mxu0 0.0
        %1564 = vmatpush1.msra.mxu0 0.0
        %1565 = vmatprep.subr.mxu0 0.0
        %1566 = vmatpush1.msra.mxu0 0.0
        %1567 = vmatprep.subr.mxu0 0.0
        %1568 = vmatpush1.msra.mxu0 0.0
        %1569 = vmatprep.subr.mxu0 0.0
        %1570 = vmatpush1.msra.mxu0 0.0
        %1571 = vmatprep.mubr.f32.mxu0 0.0
        %1572 = vmatmul.mubr.f32.gmra.mrb[0].mxu0 %v1405
        %v1573 = vpop.f32.mrb[0].mxu0
        %v1574 = vadd.f32 %v1505, %v1573
        %v1575 = vpop.f32.mrb[0].mxu0
        %1576 = vmatprep.mubr.f32.mxu0 0.0
        %1577 = vmatmul.mubr.f32.gmra.mrb[0].mxu0 %v1408
        %v1578 = vpop.f32.mrb[0].mxu0
        %v1579 = vadd.f32 %v1505, %v1578
        %v1580 = vpop.f32.mrb[0].mxu0
        %1581 = vmatprep.mubr.f32.mxu0 0.0
        %1582 = vmatmul.mubr.f32.gmra.mrb[0].mxu0 %v1411
        %v1583 = vpop.f32.mrb[0].mxu0
        %v1584 = vadd.f32 %v1505, %v1583
        %v1585 = vpop.f32.mrb[0].mxu0
        %1586 = vmatprep.mubr.f32.mxu0 0.0
        %1587 = vmatmul.mubr.f32.gmra.mrb[0].mxu0 %v1414
        %v1588 = vpop.f32.mrb[0].mxu0
        %v1589 = vadd.f32 %v1505, %v1588
        %v1590 = vpop.f32.mrb[0].mxu0
        %1591 = vdwg.mxu0
        %v1592 = vmax.f32 %v1574, 0.0
        %v1593 = vmax.f32 %v1579, 0.0
        %v1594 = vmax.f32 %v1584, 0.0
        %v1595 = vmax.f32 %v1589, 0.0
        %v1596 = vld [vmem:[%s2] sm:$0xff]
        %v1597 = vld [vmem:[%s2 + $0x8] sm:$0xff]
        %v1598 = vld [vmem:[%s2 + $0x10] sm:$0xff]
        %v1599 = vld [vmem:[%s2 + $0x18] sm:$0xff]
        %v1600 = vld [vmem:[%s2 + $0x20] sm:$0xff]
        %v1601 = vld [vmem:[%s2 + $0x28] sm:$0xff]
        %v1602 = vld [vmem:[%s2 + $0x30] sm:$0xff]
        %v1603 = vld [vmem:[%s2 + $0x38] sm:$0xff]
        %v1604 = vld [vmem:[%s2 + $0x40] sm:$0xff]
        %v1605 = vld [vmem:[%s2 + $0x48] sm:$0xff]
        %v1606 = vld [vmem:[%s2 + $0x50] sm:$0xff]
        %v1607 = vld [vmem:[%s2 + $0x58] sm:$0xff]
        %vm1608 = vcmask 261120
        %v1610 = vsel %vm1608, %v1596, 0
        %v1613 = vsel %vm1608, %v1597, 0
        %v1616 = vsel %vm1608, %v1598, 0
        %v1619 = vsel %vm1608, %v1599, 0
        %v1622 = vsel %vm1608, %v1600, 0
        %v1625 = vsel %vm1608, %v1601, 0
        %v1628 = vsel %vm1608, %v1602, 0
        %v1631 = vsel %vm1608, %v1603, 0
        %v1634 = vsel %vm1608, %v1604, 0
        %v1637 = vsel %vm1608, %v1605, 0
        %v1640 = vsel %vm1608, %v1606, 0
        %v1643 = vsel %vm1608, %v1607, 0
        %1645 = vmatprep.subr.mxu0 0.0
        %1646 = vmatpush1.msra.mxu0 %v1592
        %1647 = vmatprep.subr.mxu0 0.0
        %1648 = vmatpush1.msra.mxu0 %v1593
        %1649 = vmatprep.subr.mxu0 0.0
        %1650 = vmatpush1.msra.mxu0 %v1594
        %1651 = vmatprep.subr.mxu0 0.0
        %1652 = vmatpush1.msra.mxu0 %v1595
        %1653 = vmatprep.subr.mxu0 0.0
        %1654 = vmatpush1.msra.mxu0 0.0
        %1655 = vmatprep.subr.mxu0 0.0
        %1656 = vmatpush1.msra.mxu0 0.0
        %1657 = vmatprep.subr.mxu0 0.0
        %1658 = vmatpush1.msra.mxu0 0.0
        %1659 = vmatprep.subr.mxu0 0.0
        %1660 = vmatpush1.msra.mxu0 0.0
        %1661 = vmatprep.subr.mxu0 0.0
        %1662 = vmatpush1.msra.mxu0 0.0
        %1663 = vmatprep.subr.mxu0 0.0
        %1664 = vmatpush1.msra.mxu0 0.0
        %1665 = vmatprep.subr.mxu0 0.0
        %1666 = vmatpush1.msra.mxu0 0.0
        %1667 = vmatprep.subr.mxu0 0.0
        %1668 = vmatpush1.msra.mxu0 0.0
        %1669 = vmatprep.subr.mxu0 0.0
        %1670 = vmatpush1.msra.mxu0 0.0
        %1671 = vmatprep.subr.mxu0 0.0
        %1672 = vmatpush1.msra.mxu0 0.0
        %1673 = vmatprep.subr.mxu0 0.0
        %1674 = vmatpush1.msra.mxu0 0.0
        %1675 = vmatprep.subr.mxu0 0.0
        %1676 = vmatpush1.msra.mxu0 0.0
        %1677 = vmatprep.subr.mxu0 0.0
        %1678 = vmatpush1.msra.mxu0 0.0
        %1679 = vmatprep.subr.mxu0 0.0
        %1680 = vmatpush1.msra.mxu0 0.0
        %1681 = vmatprep.subr.mxu0 0.0
        %1682 = vmatpush1.msra.mxu0 0.0
        %1683 = vmatprep.subr.mxu0 0.0
        %1684 = vmatpush1.msra.mxu0 0.0
        %1685 = vmatprep.subr.mxu0 0.0
        %1686 = vmatpush1.msra.mxu0 0.0
        %1687 = vmatprep.subr.mxu0 0.0
        %1688 = vmatpush1.msra.mxu0 0.0
        %1689 = vmatprep.subr.mxu0 0.0
        %1690 = vmatpush1.msra.mxu0 0.0
        %1691 = vmatprep.subr.mxu0 0.0
        %1692 = vmatpush1.msra.mxu0 0.0
        %1693 = vmatprep.subr.mxu0 0.0
        %1694 = vmatpush1.msra.mxu0 0.0
        %1695 = vmatprep.subr.mxu0 0.0
        %1696 = vmatpush1.msra.mxu0 0.0
        %1697 = vmatprep.subr.mxu0 0.0
        %1698 = vmatpush1.msra.mxu0 0.0
        %1699 = vmatprep.subr.mxu0 0.0
        %1700 = vmatpush1.msra.mxu0 0.0
        %1701 = vmatprep.subr.mxu0 0.0
        %1702 = vmatpush1.msra.mxu0 0.0
        %1703 = vmatprep.subr.mxu0 0.0
        %1704 = vmatpush1.msra.mxu0 0.0
        %1705 = vmatprep.subr.mxu0 0.0
        %1706 = vmatpush1.msra.mxu0 0.0
        %1707 = vmatprep.subr.mxu0 0.0
        %1708 = vmatpush1.msra.mxu0 0.0
        %1709 = vmatprep.mubr.f32.mxu0 0.0
        %1710 = vmatmul.mubr.f32.gmra.mrb[0].mxu0 %v1610
        %v1711 = vpop.f32.mrb[0].mxu0
        %v1712 = vadd.f32 0.0, %v1711
        %v1713 = vpop.f32.mrb[0].mxu0
        %1714 = vmatprep.mubr.f32.mxu0 0.0
        %1715 = vmatmul.mubr.f32.gmra.mrb[0].mxu0 %v1613
        %v1716 = vpop.f32.mrb[0].mxu0
        %v1717 = vadd.f32 0.0, %v1716
        %v1718 = vpop.f32.mrb[0].mxu0
        %1719 = vmatprep.mubr.f32.mxu0 0.0
        %1720 = vmatmul.mubr.f32.gmra.mrb[0].mxu0 %v1616
        %v1721 = vpop.f32.mrb[0].mxu0
        %v1722 = vadd.f32 0.0, %v1721
        %v1723 = vpop.f32.mrb[0].mxu0
        %1724 = vmatprep.mubr.f32.mxu0 0.0
        %1725 = vmatmul.mubr.f32.gmra.mrb[0].mxu0 %v1619
        %v1726 = vpop.f32.mrb[0].mxu0
        %v1727 = vadd.f32 0.0, %v1726
        %v1728 = vpop.f32.mrb[0].mxu0
        %1729 = vmatprep.mubr.f32.mxu0 0.0
        %1730 = vmatmul.mubr.f32.gmra.mrb[0].mxu0 %v1622
        %v1731 = vpop.f32.mrb[0].mxu0
        %v1732 = vadd.f32 0.0, %v1731
        %v1733 = vpop.f32.mrb[0].mxu0
        %1734 = vmatprep.mubr.f32.mxu0 0.0
        %1735 = vmatmul.mubr.f32.gmra.mrb[0].mxu0 %v1625
        %v1736 = vpop.f32.mrb[0].mxu0
        %v1737 = vadd.f32 0.0, %v1736
        %v1738 = vpop.f32.mrb[0].mxu0
        %1739 = vmatprep.mubr.f32.mxu0 0.0
        %1740 = vmatmul.mubr.f32.gmra.mrb[0].mxu0 %v1628
        %v1741 = vpop.f32.mrb[0].mxu0
        %v1742 = vadd.f32 0.0, %v1741
        %v1743 = vpop.f32.mrb[0].mxu0
        %1744 = vmatprep.mubr.f32.mxu0 0.0
        %1745 = vmatmul.mubr.f32.gmra.mrb[0].mxu0 %v1631
        %v1746 = vpop.f32.mrb[0].mxu0
        %v1747 = vadd.f32 0.0, %v1746
        %v1748 = vpop.f32.mrb[0].mxu0
        %1749 = vmatprep.mubr.f32.mxu0 0.0
        %1750 = vmatmul.mubr.f32.gmra.mrb[0].mxu0 %v1634
        %v1751 = vpop.f32.mrb[0].mxu0
        %v1752 = vadd.f32 0.0, %v1751
        %v1753 = vpop.f32.mrb[0].mxu0
        %1754 = vmatprep.mubr.f32.mxu0 0.0
        %1755 = vmatmul.mubr.f32.gmra.mrb[0].mxu0 %v1637
        %v1756 = vpop.f32.mrb[0].mxu0
        %v1757 = vadd.f32 0.0, %v1756
        %v1758 = vpop.f32.mrb[0].mxu0
        %1759 = vmatprep.mubr.f32.mxu0 0.0
        %1760 = vmatmul.mubr.f32.gmra.mrb[0].mxu0 %v1640
        %v1761 = vpop.f32.mrb[0].mxu0
        %v1762 = vadd.f32 0.0, %v1761
        %v1763 = vpop.f32.mrb[0].mxu0
        %1764 = vmatprep.mubr.f32.mxu0 0.0
        %1765 = vmatmul.mubr.f32.gmra.mrb[0].mxu0 %v1643
        %v1766 = vpop.f32.mrb[0].mxu0
        %v1767 = vadd.f32 0.0, %v1766
        %v1768 = vpop.f32.mrb[0].mxu0
        %1769 = vdwg.mxu0
        %v1770 = vld [vmem:[%s8] sm:$0xff]
        %v1771 = vld [vmem:[%s8 + $0x8] sm:$0xff]
        %v1772 = vld [vmem:[%s8 + $0x10] sm:$0xff]
        %v1773 = vld [vmem:[%s8 + $0x18] sm:$0xff]
        %v1775 = vsel %vm1403, %v1712, 0
        %v1778 = vsel %vm1403, %v1717, 0
        %v1781 = vsel %vm1403, %v1722, 0
        %v1784 = vsel %vm1403, %v1727, 0
        %1786 = vmatprep.subr.mxu0 0.0
        %1787 = vmatpush1.msra.mxu0 %v1772
        %1788 = vmatprep.subr.mxu0 0.0
        %1789 = vmatpush1.msra.mxu0 %v1773
        %1790 = vmatprep.subr.mxu0 0.0
        %1791 = vmatpush1.msra.mxu0 0.0
        %1792 = vmatprep.subr.mxu0 0.0
        %1793 = vmatpush1.msra.mxu0 0.0
        %1794 = vmatprep.subr.mxu0 0.0
        %1795 = vmatpush1.msra.mxu0 0.0
        %1796 = vmatprep.subr.mxu0 0.0
        %1797 = vmatpush1.msra.mxu0 0.0
        %1798 = vmatprep.subr.mxu0 0.0
        %1799 = vmatpush1.msra.mxu0 0.0
        %1800 = vmatprep.subr.mxu0 0.0
        %1801 = vmatpush1.msra.mxu0 0.0
        %1802 = vmatprep.subr.mxu0 0.0
        %1803 = vmatpush1.msra.mxu0 0.0
        %1804 = vmatprep.subr.mxu0 0.0
        %1805 = vmatpush1.msra.mxu0 0.0
        %1806 = vmatprep.subr.mxu0 0.0
        %1807 = vmatpush1.msra.mxu0 0.0
        %1808 = vmatprep.subr.mxu0 0.0
        %1809 = vmatpush1.msra.mxu0 0.0
        %1810 = vmatprep.subr.mxu0 0.0
        %1811 = vmatpush1.msra.mxu0 0.0
        %1812 = vmatprep.subr.mxu0 0.0
        %1813 = vmatpush1.msra.mxu0 0.0
        %1814 = vmatprep.subr.mxu0 0.0
        %1815 = vmatpush1.msra.mxu0 0.0
        %1816 = vmatprep.subr.mxu0 0.0
        %1817 = vmatpush1.msra.mxu0 0.0
        %1818 = vmatprep.subr.mxu0 0.0
        %1819 = vmatpush1.msra.mxu0 0.0
        %1820 = vmatprep.subr.mxu0 0.0
        %1821 = vmatpush1.msra.mxu0 0.0
        %1822 = vmatprep.subr.mxu0 0.0
        %1823 = vmatpush1.msra.mxu0 0.0
        %1824 = vmatprep.subr.mxu0 0.0
        %1825 = vmatpush1.msra.mxu0 0.0
        %1826 = vmatprep.subr.mxu0 0.0
        %1827 = vmatpush1.msra.mxu0 0.0
        %1828 = vmatprep.subr.mxu0 0.0
        %1829 = vmatpush1.msra.mxu0 0.0
        %1830 = vmatprep.subr.mxu0 0.0
        %1831 = vmatpush1.msra.mxu0 0.0
        %1832 = vmatprep.subr.mxu0 0.0
        %1833 = vmatpush1.msra.mxu0 0.0
        %1834 = vmatprep.subr.mxu0 0.0
        %1835 = vmatpush1.msra.mxu0 0.0
        %1836 = vmatprep.subr.mxu0 0.0
        %1837 = vmatpush1.msra.mxu0 0.0
        %1838 = vmatprep.subr.mxu0 0.0
        %1839 = vmatpush1.msra.mxu0 0.0
        %1840 = vmatprep.subr.mxu0 0.0
        %1841 = vmatpush1.msra.mxu0 0.0
        %1842 = vmatprep.subr.mxu0 0.0
        %1843 = vmatpush1.msra.mxu0 0.0
        %1844 = vmatprep.subr.mxu0 0.0
        %1845 = vmatpush1.msra.mxu0 0.0
        %1846 = vmatprep.subr.mxu0 0.0
        %1847 = vmatpush1.msra.mxu0 0.0
        %1848 = vmatprep.subr.mxu0 0.0
        %1849 = vmatpush1.msra.mxu0 0.0
        %1850 = vmatprep.mubr.f32.mxu0 0.0
        %1851 = vmatmul.mubr.f32.gmra.mrb[0].mxu0 %v1775
        %v1852 = vpop.f32.mrb[0].mxu0
        %v1853 = vadd.f32 0.0, %v1852
        %v1854 = vpop.f32.mrb[0].mxu0
        %1855 = vmatprep.mubr.f32.mxu0 0.0
        %1856 = vmatmul.mubr.f32.gmra.mrb[0].mxu0 %v1778
        %v1857 = vpop.f32.mrb[0].mxu0
        %v1858 = vadd.f32 0.0, %v1857
        %v1859 = vpop.f32.mrb[0].mxu0
        %1860 = vmatprep.mubr.f32.mxu0 0.0
        %1861 = vmatmul.mubr.f32.gmra.mrb[0].mxu0 %v1781
        %v1862 = vpop.f32.mrb[0].mxu0
        %v1863 = vadd.f32 0.0, %v1862
        %v1864 = vpop.f32.mrb[0].mxu0
        %1865 = vmatprep.mubr.f32.mxu0 0.0
        %1866 = vmatmul.mubr.f32.gmra.mrb[0].mxu0 %v1784
        %v1867 = vpop.f32.mrb[0].mxu0
        %v1868 = vadd.f32 0.0, %v1867
        %v1869 = vpop.f32.mrb[0].mxu0
        %1870 = vdwg.mxu0
        %v1872 = vsel %vm1403, %v1592, 0
        %v1875 = vsel %vm1403, %v1593, 0
        %v1878 = vsel %vm1403, %v1594, 0
        %v1881 = vsel %vm1403, %v1595, 0
        %1883 = vmatprep.subr.mxu0 0.0
        %1884 = vmatpush1.msra.mxu0 %v1770
        %1885 = vmatprep.subr.mxu0 0.0
        %1886 = vmatpush1.msra.mxu0 %v1771
        %1887 = vmatprep.subr.mxu0 0.0
        %1888 = vmatpush1.msra.mxu0 0.0
        %1889 = vmatprep.subr.mxu0 0.0
        %1890 = vmatpush1.msra.mxu0 0.0
        %1891 = vmatprep.subr.mxu0 0.0
        %1892 = vmatpush1.msra.mxu0 0.0
        %1893 = vmatprep.subr.mxu0 0.0
        %1894 = vmatpush1.msra.mxu0 0.0
        %1895 = vmatprep.subr.mxu0 0.0
        %1896 = vmatpush1.msra.mxu0 0.0
        %1897 = vmatprep.subr.mxu0 0.0
        %1898 = vmatpush1.msra.mxu0 0.0
        %1899 = vmatprep.subr.mxu0 0.0
        %1900 = vmatpush1.msra.mxu0 0.0
        %1901 = vmatprep.subr.mxu0 0.0
        %1902 = vmatpush1.msra.mxu0 0.0
        %1903 = vmatprep.subr.mxu0 0.0
        %1904 = vmatpush1.msra.mxu0 0.0
        %1905 = vmatprep.subr.mxu0 0.0
        %1906 = vmatpush1.msra.mxu0 0.0
        %1907 = vmatprep.subr.mxu0 0.0
        %1908 = vmatpush1.msra.mxu0 0.0
        %1909 = vmatprep.subr.mxu0 0.0
        %1910 = vmatpush1.msra.mxu0 0.0
        %1911 = vmatprep.subr.mxu0 0.0
        %1912 = vmatpush1.msra.mxu0 0.0
        %1913 = vmatprep.subr.mxu0 0.0
        %1914 = vmatpush1.msra.mxu0 0.0
        %1915 = vmatprep.subr.mxu0 0.0
        %1916 = vmatpush1.msra.mxu0 0.0
        %1917 = vmatprep.subr.mxu0 0.0
        %1918 = vmatpush1.msra.mxu0 0.0
        %1919 = vmatprep.subr.mxu0 0.0
        %1920 = vmatpush1.msra.mxu0 0.0
        %1921 = vmatprep.subr.mxu0 0.0
        %1922 = vmatpush1.msra.mxu0 0.0
        %1923 = vmatprep.subr.mxu0 0.0
        %1924 = vmatpush1.msra.mxu0 0.0
        %1925 = vmatprep.subr.mxu0 0.0
        %1926 = vmatpush1.msra.mxu0 0.0
        %1927 = vmatprep.subr.mxu0 0.0
        %1928 = vmatpush1.msra.mxu0 0.0
        %1929 = vmatprep.subr.mxu0 0.0
        %1930 = vmatpush1.msra.mxu0 0.0
        %1931 = vmatprep.subr.mxu0 0.0
        %1932 = vmatpush1.msra.mxu0 0.0
        %1933 = vmatprep.subr.mxu0 0.0
        %1934 = vmatpush1.msra.mxu0 0.0
        %1935 = vmatprep.subr.mxu0 0.0
        %1936 = vmatpush1.msra.mxu0 0.0
        %1937 = vmatprep.subr.mxu0 0.0
        %1938 = vmatpush1.msra.mxu0 0.0
        %1939 = vmatprep.subr.mxu0 0.0
        %1940 = vmatpush1.msra.mxu0 0.0
        %1941 = vmatprep.subr.mxu0 0.0
        %1942 = vmatpush1.msra.mxu0 0.0
        %1943 = vmatprep.subr.mxu0 0.0
        %1944 = vmatpush1.msra.mxu0 0.0
        %1945 = vmatprep.subr.mxu0 0.0
        %1946 = vmatpush1.msra.mxu0 0.0
        %1947 = vmatprep.mubr.f32.mxu0 0.0
        %1948 = vmatmul.mubr.f32.gmra.mrb[0].mxu0 %v1872
        %v1949 = vpop.f32.mrb[0].mxu0
        %v1950 = vadd.f32 %v1853, %v1949
        %v1951 = vpop.f32.mrb[0].mxu0
        %1952 = vmatprep.mubr.f32.mxu0 0.0
        %1953 = vmatmul.mubr.f32.gmra.mrb[0].mxu0 %v1875
        %v1954 = vpop.f32.mrb[0].mxu0
        %v1955 = vadd.f32 %v1858, %v1954
        %v1956 = vpop.f32.mrb[0].mxu0
        %1957 = vmatprep.mubr.f32.mxu0 0.0
        %1958 = vmatmul.mubr.f32.gmra.mrb[0].mxu0 %v1878
        %v1959 = vpop.f32.mrb[0].mxu0
        %v1960 = vadd.f32 %v1863, %v1959
        %v1961 = vpop.f32.mrb[0].mxu0
        %1962 = vmatprep.mubr.f32.mxu0 0.0
        %1963 = vmatmul.mubr.f32.gmra.mrb[0].mxu0 %v1881
        %v1964 = vpop.f32.mrb[0].mxu0
        %v1965 = vadd.f32 %v1868, %v1964
        %v1966 = vpop.f32.mrb[0].mxu0
        %1967 = vdwg.mxu0
        %v1968 = vld [vmem:[%s8 + $0x20] sm:$0xff]
        %v1969 = vld [vmem:[%s8 + $0x28] sm:$0xff]
        %v1971 = vsel %vm1403, %v1732, 0
        %v1974 = vsel %vm1403, %v1737, 0
        %v1977 = vsel %vm1403, %v1742, 0
        %v1980 = vsel %vm1403, %v1747, 0
        %1982 = vmatprep.subr.mxu0 0.0
        %1983 = vmatpush1.msra.mxu0 %v1968
        %1984 = vmatprep.subr.mxu0 0.0
        %1985 = vmatpush1.msra.mxu0 %v1969
        %1986 = vmatprep.subr.mxu0 0.0
        %1987 = vmatpush1.msra.mxu0 0.0
        %1988 = vmatprep.subr.mxu0 0.0
        %1989 = vmatpush1.msra.mxu0 0.0
        %1990 = vmatprep.subr.mxu0 0.0
        %1991 = vmatpush1.msra.mxu0 0.0
        %1992 = vmatprep.subr.mxu0 0.0
        %1993 = vmatpush1.msra.mxu0 0.0
        %1994 = vmatprep.subr.mxu0 0.0
        %1995 = vmatpush1.msra.mxu0 0.0
        %1996 = vmatprep.subr.mxu0 0.0
        %1997 = vmatpush1.msra.mxu0 0.0
        %1998 = vmatprep.subr.mxu0 0.0
        %1999 = vmatpush1.msra.mxu0 0.0
        %2000 = vmatprep.subr.mxu0 0.0
        %2001 = vmatpush1.msra.mxu0 0.0
        %2002 = vmatprep.subr.mxu0 0.0
        %2003 = vmatpush1.msra.mxu0 0.0
        %2004 = vmatprep.subr.mxu0 0.0
        %2005 = vmatpush1.msra.mxu0 0.0
        %2006 = vmatprep.subr.mxu0 0.0
        %2007 = vmatpush1.msra.mxu0 0.0
        %2008 = vmatprep.subr.mxu0 0.0
        %2009 = vmatpush1.msra.mxu0 0.0
        %2010 = vmatprep.subr.mxu0 0.0
        %2011 = vmatpush1.msra.mxu0 0.0
        %2012 = vmatprep.subr.mxu0 0.0
        %2013 = vmatpush1.msra.mxu0 0.0
        %2014 = vmatprep.subr.mxu0 0.0
        %2015 = vmatpush1.msra.mxu0 0.0
        %2016 = vmatprep.subr.mxu0 0.0
        %2017 = vmatpush1.msra.mxu0 0.0
        %2018 = vmatprep.subr.mxu0 0.0
        %2019 = vmatpush1.msra.mxu0 0.0
        %2020 = vmatprep.subr.mxu0 0.0
        %2021 = vmatpush1.msra.mxu0 0.0
        %2022 = vmatprep.subr.mxu0 0.0
        %2023 = vmatpush1.msra.mxu0 0.0
        %2024 = vmatprep.subr.mxu0 0.0
        %2025 = vmatpush1.msra.mxu0 0.0
        %2026 = vmatprep.subr.mxu0 0.0
        %2027 = vmatpush1.msra.mxu0 0.0
        %2028 = vmatprep.subr.mxu0 0.0
        %2029 = vmatpush1.msra.mxu0 0.0
        %2030 = vmatprep.subr.mxu0 0.0
        %2031 = vmatpush1.msra.mxu0 0.0
        %2032 = vmatprep.subr.mxu0 0.0
        %2033 = vmatpush1.msra.mxu0 0.0
        %2034 = vmatprep.subr.mxu0 0.0
        %2035 = vmatpush1.msra.mxu0 0.0
        %2036 = vmatprep.subr.mxu0 0.0
        %2037 = vmatpush1.msra.mxu0 0.0
        %2038 = vmatprep.subr.mxu0 0.0
        %2039 = vmatpush1.msra.mxu0 0.0
        %2040 = vmatprep.subr.mxu0 0.0
        %2041 = vmatpush1.msra.mxu0 0.0
        %2042 = vmatprep.subr.mxu0 0.0
        %2043 = vmatpush1.msra.mxu0 0.0
        %2044 = vmatprep.subr.mxu0 0.0
        %2045 = vmatpush1.msra.mxu0 0.0
        %2046 = vmatprep.mubr.f32.mxu0 0.0
        %2047 = vmatmul.mubr.f32.gmra.mrb[0].mxu0 %v1971
        %v2048 = vpop.f32.mrb[0].mxu0
        %v2049 = vadd.f32 0.0, %v2048
        %v2050 = vpop.f32.mrb[0].mxu0
        %2051 = vmatprep.mubr.f32.mxu0 0.0
        %2052 = vmatmul.mubr.f32.gmra.mrb[0].mxu0 %v1974
        %v2053 = vpop.f32.mrb[0].mxu0
        %v2054 = vadd.f32 0.0, %v2053
        %v2055 = vpop.f32.mrb[0].mxu0
        %2056 = vmatprep.mubr.f32.mxu0 0.0
        %2057 = vmatmul.mubr.f32.gmra.mrb[0].mxu0 %v1977
        %v2058 = vpop.f32.mrb[0].mxu0
        %v2059 = vadd.f32 0.0, %v2058
        %v2060 = vpop.f32.mrb[0].mxu0
        %2061 = vmatprep.mubr.f32.mxu0 0.0
        %2062 = vmatmul.mubr.f32.gmra.mrb[0].mxu0 %v1980
        %v2063 = vpop.f32.mrb[0].mxu0
        %v2064 = vadd.f32 0.0, %v2063
        %v2065 = vpop.f32.mrb[0].mxu0
        %2066 = vdwg.mxu0
        %v2067 = vadd.f32 %v1950, %v2049
        %v2068 = vadd.f32 %v1955, %v2054
        %v2069 = vadd.f32 %v1960, %v2059
        %v2070 = vadd.f32 %v1965, %v2064
        %v2071 = vld [vmem:[%s8 + $0x30] sm:$0xff]
        %v2072 = vld [vmem:[%s8 + $0x38] sm:$0xff]
        %v2074 = vsel %vm1403, %v1752, 0
        %v2077 = vsel %vm1403, %v1757, 0
        %v2080 = vsel %vm1403, %v1762, 0
        %v2083 = vsel %vm1403, %v1767, 0
        %2085 = vmatprep.subr.mxu0 0.0
        %2086 = vmatpush1.msra.mxu0 %v2071
        %2087 = vmatprep.subr.mxu0 0.0
        %2088 = vmatpush1.msra.mxu0 %v2072
        %2089 = vmatprep.subr.mxu0 0.0
        %2090 = vmatpush1.msra.mxu0 0.0
        %2091 = vmatprep.subr.mxu0 0.0
        %2092 = vmatpush1.msra.mxu0 0.0
        %2093 = vmatprep.subr.mxu0 0.0
        %2094 = vmatpush1.msra.mxu0 0.0
        %2095 = vmatprep.subr.mxu0 0.0
        %2096 = vmatpush1.msra.mxu0 0.0
        %2097 = vmatprep.subr.mxu0 0.0
        %2098 = vmatpush1.msra.mxu0 0.0
        %2099 = vmatprep.subr.mxu0 0.0
        %2100 = vmatpush1.msra.mxu0 0.0
        %2101 = vmatprep.subr.mxu0 0.0
        %2102 = vmatpush1.msra.mxu0 0.0
        %2103 = vmatprep.subr.mxu0 0.0
        %2104 = vmatpush1.msra.mxu0 0.0
        %2105 = vmatprep.subr.mxu0 0.0
        %2106 = vmatpush1.msra.mxu0 0.0
        %2107 = vmatprep.subr.mxu0 0.0
        %2108 = vmatpush1.msra.mxu0 0.0
        %2109 = vmatprep.subr.mxu0 0.0
        %2110 = vmatpush1.msra.mxu0 0.0
        %2111 = vmatprep.subr.mxu0 0.0
        %2112 = vmatpush1.msra.mxu0 0.0
        %2113 = vmatprep.subr.mxu0 0.0
        %2114 = vmatpush1.msra.mxu0 0.0
        %2115 = vmatprep.subr.mxu0 0.0
        %2116 = vmatpush1.msra.mxu0 0.0
        %2117 = vmatprep.subr.mxu0 0.0
        %2118 = vmatpush1.msra.mxu0 0.0
        %2119 = vmatprep.subr.mxu0 0.0
        %2120 = vmatpush1.msra.mxu0 0.0
        %2121 = vmatprep.subr.mxu0 0.0
        %2122 = vmatpush1.msra.mxu0 0.0
        %2123 = vmatprep.subr.mxu0 0.0
        %2124 = vmatpush1.msra.mxu0 0.0
        %2125 = vmatprep.subr.mxu0 0.0
        %2126 = vmatpush1.msra.mxu0 0.0
        %2127 = vmatprep.subr.mxu0 0.0
        %2128 = vmatpush1.msra.mxu0 0.0
        %2129 = vmatprep.subr.mxu0 0.0
        %2130 = vmatpush1.msra.mxu0 0.0
        %2131 = vmatprep.subr.mxu0 0.0
        %2132 = vmatpush1.msra.mxu0 0.0
        %2133 = vmatprep.subr.mxu0 0.0
        %2134 = vmatpush1.msra.mxu0 0.0
        %2135 = vmatprep.subr.mxu0 0.0
        %2136 = vmatpush1.msra.mxu0 0.0
        %2137 = vmatprep.subr.mxu0 0.0
        %2138 = vmatpush1.msra.mxu0 0.0
        %2139 = vmatprep.subr.mxu0 0.0
        %2140 = vmatpush1.msra.mxu0 0.0
        %2141 = vmatprep.subr.mxu0 0.0
        %2142 = vmatpush1.msra.mxu0 0.0
        %2143 = vmatprep.subr.mxu0 0.0
        %2144 = vmatpush1.msra.mxu0 0.0
        %2145 = vmatprep.subr.mxu0 0.0
        %2146 = vmatpush1.msra.mxu0 0.0
        %2147 = vmatprep.subr.mxu0 0.0
        %2148 = vmatpush1.msra.mxu0 0.0
        %2149 = vmatprep.mubr.f32.mxu0 0.0
        %2150 = vmatmul.mubr.f32.gmra.mrb[0].mxu0 %v2074
        %v2151 = vpop.f32.mrb[0].mxu0
        %v2152 = vadd.f32 0.0, %v2151
        %v2153 = vpop.f32.mrb[0].mxu0
        %2154 = vmatprep.mubr.f32.mxu0 0.0
        %2155 = vmatmul.mubr.f32.gmra.mrb[0].mxu0 %v2077
        %v2156 = vpop.f32.mrb[0].mxu0
        %v2157 = vadd.f32 0.0, %v2156
        %v2158 = vpop.f32.mrb[0].mxu0
        %2159 = vmatprep.mubr.f32.mxu0 0.0
        %2160 = vmatmul.mubr.f32.gmra.mrb[0].mxu0 %v2080
        %v2161 = vpop.f32.mrb[0].mxu0
        %v2162 = vadd.f32 0.0, %v2161
        %v2163 = vpop.f32.mrb[0].mxu0
        %2164 = vmatprep.mubr.f32.mxu0 0.0
        %2165 = vmatmul.mubr.f32.gmra.mrb[0].mxu0 %v2083
        %v2166 = vpop.f32.mrb[0].mxu0
        %v2167 = vadd.f32 0.0, %v2166
        %v2168 = vpop.f32.mrb[0].mxu0
        %2169 = vdwg.mxu0
        %v2170 = vadd.f32 %v2067, %v2152
        %v2171 = vadd.f32 %v2068, %v2157
        %v2172 = vadd.f32 %v2069, %v2162
        %v2173 = vadd.f32 %v2070, %v2167
        %v2174 = vld [vmem:[#allocation8] sm:$0x1]
        %v2176 = vlaneseq
        %v2177 = vshrl.u32 %v2176, 7
        %v2178 = vsub.s32 0, %v2177
        %v2179 = vrot.slane %v2174, %v2178
        %v2181 = vadd.f32 %v2170, %v2179
        %v2182 = vadd.f32 %v2171, %v2179
        %v2183 = vadd.f32 %v2172, %v2179
        %v2184 = vadd.f32 %v2173, %v2179
        %v2185 = vmax.f32 %v2181, 0.0
        %v2186 = vmax.f32 %v2182, 0.0
        %v2187 = vmax.f32 %v2183, 0.0
        %v2188 = vmax.f32 %v2184, 0.0
        %v2189 = vld [vmem:[#allocation10] sm:$0xff]
        %v2190 = vld [vmem:[#allocation10 + $0x8] sm:$0xff]
        %v2191 = vld [vmem:[#allocation11] sm:$0x1]
        %v2193 = vlaneseq
        %v2194 = vshrl.u32 %v2193, 7
        %v2195 = vsub.s32 0, %v2194
        %v2196 = vrot.slane %v2191, %v2195
        %v2199 = vsel %vm1403, %v2185, 0
        %v2202 = vsel %vm1403, %v2186, 0
        %v2205 = vsel %vm1403, %v2187, 0
        %v2208 = vsel %vm1403, %v2188, 0
        %2210 = vmatprep.subr.mxu0 0.0
        %2211 = vmatpush1.msra.mxu0 %v2189
        %2212 = vmatprep.subr.mxu0 0.0
        %2213 = vmatpush1.msra.mxu0 %v2190
        %2214 = vmatprep.subr.mxu0 0.0
        %2215 = vmatpush1.msra.mxu0 0.0
        %2216 = vmatprep.subr.mxu0 0.0
        %2217 = vmatpush1.msra.mxu0 0.0
        %2218 = vmatprep.subr.mxu0 0.0
        %2219 = vmatpush1.msra.mxu0 0.0
        %2220 = vmatprep.subr.mxu0 0.0
        %2221 = vmatpush1.msra.mxu0 0.0
        %2222 = vmatprep.subr.mxu0 0.0
        %2223 = vmatpush1.msra.mxu0 0.0
        %2224 = vmatprep.subr.mxu0 0.0
        %2225 = vmatpush1.msra.mxu0 0.0
        %2226 = vmatprep.subr.mxu0 0.0
        %2227 = vmatpush1.msra.mxu0 0.0
        %2228 = vmatprep.subr.mxu0 0.0
        %2229 = vmatpush1.msra.mxu0 0.0
        %2230 = vmatprep.subr.mxu0 0.0
        %2231 = vmatpush1.msra.mxu0 0.0
        %2232 = vmatprep.subr.mxu0 0.0
        %2233 = vmatpush1.msra.mxu0 0.0
        %2234 = vmatprep.subr.mxu0 0.0
        %2235 = vmatpush1.msra.mxu0 0.0
        %2236 = vmatprep.subr.mxu0 0.0
        %2237 = vmatpush1.msra.mxu0 0.0
        %2238 = vmatprep.subr.mxu0 0.0
        %2239 = vmatpush1.msra.mxu0 0.0
        %2240 = vmatprep.subr.mxu0 0.0
        %2241 = vmatpush1.msra.mxu0 0.0
        %2242 = vmatprep.subr.mxu0 0.0
        %2243 = vmatpush1.msra.mxu0 0.0
        %2244 = vmatprep.subr.mxu0 0.0
        %2245 = vmatpush1.msra.mxu0 0.0
        %2246 = vmatprep.subr.mxu0 0.0
        %2247 = vmatpush1.msra.mxu0 0.0
        %2248 = vmatprep.subr.mxu0 0.0
        %2249 = vmatpush1.msra.mxu0 0.0
        %2250 = vmatprep.subr.mxu0 0.0
        %2251 = vmatpush1.msra.mxu0 0.0
        %2252 = vmatprep.subr.mxu0 0.0
        %2253 = vmatpush1.msra.mxu0 0.0
        %2254 = vmatprep.subr.mxu0 0.0
        %2255 = vmatpush1.msra.mxu0 0.0
        %2256 = vmatprep.subr.mxu0 0.0
        %2257 = vmatpush1.msra.mxu0 0.0
        %2258 = vmatprep.subr.mxu0 0.0
        %2259 = vmatpush1.msra.mxu0 0.0
        %2260 = vmatprep.subr.mxu0 0.0
        %2261 = vmatpush1.msra.mxu0 0.0
        %2262 = vmatprep.subr.mxu0 0.0
        %2263 = vmatpush1.msra.mxu0 0.0
        %2264 = vmatprep.subr.mxu0 0.0
        %2265 = vmatpush1.msra.mxu0 0.0
        %2266 = vmatprep.subr.mxu0 0.0
        %2267 = vmatpush1.msra.mxu0 0.0
        %2268 = vmatprep.subr.mxu0 0.0
        %2269 = vmatpush1.msra.mxu0 0.0
        %2270 = vmatprep.subr.mxu0 0.0
        %2271 = vmatpush1.msra.mxu0 0.0
        %2272 = vmatprep.subr.mxu0 0.0
        %2273 = vmatpush1.msra.mxu0 0.0
        %2274 = vmatprep.mubr.f32.mxu0 0.0
        %2275 = vmatmul.mubr.f32.gmra.mrb[0].mxu0 %v2199
        %v2276 = vpop.f32.mrb[0].mxu0
        %v2277 = vadd.f32 %v2196, %v2276
        %v2278 = vpop.f32.mrb[0].mxu0
        %2279 = vmatprep.mubr.f32.mxu0 0.0
        %2280 = vmatmul.mubr.f32.gmra.mrb[0].mxu0 %v2202
        %v2281 = vpop.f32.mrb[0].mxu0
        %v2282 = vpop.f32.mrb[0].mxu0
        %2283 = vmatprep.mubr.f32.mxu0 0.0
        %2284 = vmatmul.mubr.f32.gmra.mrb[0].mxu0 %v2205
        %v2285 = vpop.f32.mrb[0].mxu0
        %v2286 = vpop.f32.mrb[0].mxu0
        %2287 = vmatprep.mubr.f32.mxu0 0.0
        %2288 = vmatmul.mubr.f32.gmra.mrb[0].mxu0 %v2208
        %v2289 = vpop.f32.mrb[0].mxu0
        %v2290 = vpop.f32.mrb[0].mxu0
        %2291 = vdwg.mxu0
        %v2292 = vadd.f32 %v2277, %v1483
        %v2293 = vmax.f32 %v2292, 0.0
        %v2294 = vld [vmem:[#allocation22] sm:$0xff]
        %v2295 = vld [vmem:[#allocation22 + $0x8] sm:$0xff]
        %v2296 = vld [vmem:[#allocation22 + $0x10] sm:$0xff]
        %v2297 = vld [vmem:[#allocation22 + $0x18] sm:$0xff]
        %v2298 = vld [vmem:[#allocation22 + $0x20] sm:$0xff]
        %v2299 = vld [vmem:[#allocation22 + $0x28] sm:$0xff]
        %v2300 = vld [vmem:[#allocation22 + $0x30] sm:$0xff]
        %v2301 = vld [vmem:[#allocation22 + $0x38] sm:$0xff]
        %v2302 = vld [vmem:[#allocation22 + $0x40] sm:$0xff]
        %v2303 = vld [vmem:[#allocation22 + $0x48] sm:$0xff]
        %v2304 = vld [vmem:[#allocation22 + $0x50] sm:$0xff]
        %v2305 = vld [vmem:[#allocation22 + $0x58] sm:$0xff]
        %v2306 = vld [vmem:[#allocation22 + $0x60] sm:$0xff]
        %v2307 = vld [vmem:[#allocation22 + $0x68] sm:$0xff]
        %v2308 = vld [vmem:[#allocation22 + $0x70] sm:$0xff]
        %v2309 = vld [vmem:[#allocation22 + $0x78] sm:$0xff]
        %v2310 = vld [vmem:[%s21] sm:$0x3]
        %v2312 = vlaneseq
        %v2313 = vshrl.u32 %v2312, 7
        %v2314 = vsub.s32 0, %v2313
        %v2315 = vrot.slane %v2310, %v2314
        %v2316 = vlaneseq
        %v2317 = vshrl.u32 %v2316, 7
        %v2318 = vsub.s32 1, %v2317
        %v2319 = vrot.slane %v2310, %v2318
        %vm2322 = vcmask 523264
        %v2324 = vsel %vm2322, %v2293, 0
        %2326 = vmatprep.subr.mxu0 %v2295
        %2327 = vmatpush1.msra.mxu0 %v2294
        %2328 = vmatprep.subr.mxu0 %v2297
        %2329 = vmatpush1.msra.mxu0 %v2296
        %2330 = vmatprep.subr.mxu0 %v2299
        %2331 = vmatpush1.msra.mxu0 %v2298
        %2332 = vmatprep.subr.mxu0 %v2301
        %2333 = vmatpush1.msra.mxu0 %v2300
        %2334 = vmatprep.subr.mxu0 %v2303
        %2335 = vmatpush1.msra.mxu0 %v2302
        %2336 = vmatprep.subr.mxu0 %v2305
        %2337 = vmatpush1.msra.mxu0 %v2304
        %2338 = vmatprep.subr.mxu0 %v2307
        %2339 = vmatpush1.msra.mxu0 %v2306
        %2340 = vmatprep.subr.mxu0 %v2309
        %2341 = vmatpush1.msra.mxu0 %v2308
        %2342 = vmatprep.subr.mxu0 0.0
        %2343 = vmatpush1.msra.mxu0 0.0
        %2344 = vmatprep.subr.mxu0 0.0
        %2345 = vmatpush1.msra.mxu0 0.0
        %2346 = vmatprep.subr.mxu0 0.0
        %2347 = vmatpush1.msra.mxu0 0.0
        %2348 = vmatprep.subr.mxu0 0.0
        %2349 = vmatpush1.msra.mxu0 0.0
        %2350 = vmatprep.subr.mxu0 0.0
        %2351 = vmatpush1.msra.mxu0 0.0
        %2352 = vmatprep.subr.mxu0 0.0
        %2353 = vmatpush1.msra.mxu0 0.0
        %2354 = vmatprep.subr.mxu0 0.0
        %2355 = vmatpush1.msra.mxu0 0.0
        %2356 = vmatprep.subr.mxu0 0.0
        %2357 = vmatpush1.msra.mxu0 0.0
        %2358 = vmatprep.subr.mxu0 0.0
        %2359 = vmatpush1.msra.mxu0 0.0
        %2360 = vmatprep.subr.mxu0 0.0
        %2361 = vmatpush1.msra.mxu0 0.0
        %2362 = vmatprep.subr.mxu0 0.0
        %2363 = vmatpush1.msra.mxu0 0.0
        %2364 = vmatprep.subr.mxu0 0.0
        %2365 = vmatpush1.msra.mxu0 0.0
        %2366 = vmatprep.subr.mxu0 0.0
        %2367 = vmatpush1.msra.mxu0 0.0
        %2368 = vmatprep.subr.mxu0 0.0
        %2369 = vmatpush1.msra.mxu0 0.0
        %2370 = vmatprep.subr.mxu0 0.0
        %2371 = vmatpush1.msra.mxu0 0.0
        %2372 = vmatprep.subr.mxu0 0.0
        %2373 = vmatpush1.msra.mxu0 0.0
        %2374 = vmatprep.subr.mxu0 0.0
        %2375 = vmatpush1.msra.mxu0 0.0
        %2376 = vmatprep.subr.mxu0 0.0
        %2377 = vmatpush1.msra.mxu0 0.0
        %2378 = vmatprep.subr.mxu0 0.0
        %2379 = vmatpush1.msra.mxu0 0.0
        %2380 = vmatprep.subr.mxu0 0.0
        %2381 = vmatpush1.msra.mxu0 0.0
        %2382 = vmatprep.subr.mxu0 0.0
        %2383 = vmatpush1.msra.mxu0 0.0
        %2384 = vmatprep.subr.mxu0 0.0
        %2385 = vmatpush1.msra.mxu0 0.0
        %2386 = vmatprep.subr.mxu0 0.0
        %2387 = vmatpush1.msra.mxu0 0.0
        %2388 = vmatprep.subr.mxu0 0.0
        %2389 = vmatpush1.msra.mxu0 0.0
        %2390 = vmatprep.mubr.f32.mxu0 0.0
        %2391 = vmatmul.mubr.f32.gmra.mrb[0].mxu0 %v2324
        %v2392 = vpop.f32.mrb[0].mxu0
        %v2393 = vadd.f32 %v2315, %v2392
        %v2394 = vpop.f32.mrb[0].mxu0
        %v2395 = vadd.f32 %v2319, %v2394
        %2396 = vdwg.mxu0
        %v2397 = vld [vmem:[#allocation16] sm:$0xff]
        %v2398 = vld [vmem:[#allocation16 + $0x8] sm:$0xff]
        %v2399 = vld [vmem:[#allocation16 + $0x10] sm:$0xff]
        %v2400 = vld [vmem:[#allocation16 + $0x18] sm:$0xff]
        %v2401 = vld [vmem:[#allocation16 + $0x20] sm:$0xff]
        %v2402 = vld [vmem:[#allocation16 + $0x28] sm:$0xff]
        %v2403 = vld [vmem:[#allocation16 + $0x30] sm:$0xff]
        %v2404 = vld [vmem:[#allocation16 + $0x38] sm:$0xff]
        %v2405 = vld [vmem:[#allocation17] sm:$0x1]
        %v2407 = vlaneseq
        %v2408 = vshrl.u32 %v2407, 7
        %v2409 = vsub.s32 0, %v2408
        %v2410 = vrot.slane %v2405, %v2409
        %2412 = vmatprep.subr.mxu0 0.0
        %2413 = vmatpush1.msra.mxu0 %v2397
        %2414 = vmatprep.subr.mxu0 0.0
        %2415 = vmatpush1.msra.mxu0 %v2398
        %2416 = vmatprep.subr.mxu0 0.0
        %2417 = vmatpush1.msra.mxu0 %v2399
        %2418 = vmatprep.subr.mxu0 0.0
        %2419 = vmatpush1.msra.mxu0 %v2400
        %2420 = vmatprep.subr.mxu0 0.0
        %2421 = vmatpush1.msra.mxu0 %v2401
        %2422 = vmatprep.subr.mxu0 0.0
        %2423 = vmatpush1.msra.mxu0 %v2402
        %2424 = vmatprep.subr.mxu0 0.0
        %2425 = vmatpush1.msra.mxu0 %v2403
        %2426 = vmatprep.subr.mxu0 0.0
        %2427 = vmatpush1.msra.mxu0 %v2404
        %2428 = vmatprep.subr.mxu0 0.0
        %2429 = vmatpush1.msra.mxu0 0.0
        %2430 = vmatprep.subr.mxu0 0.0
        %2431 = vmatpush1.msra.mxu0 0.0
        %2432 = vmatprep.subr.mxu0 0.0
        %2433 = vmatpush1.msra.mxu0 0.0
        %2434 = vmatprep.subr.mxu0 0.0
        %2435 = vmatpush1.msra.mxu0 0.0
        %2436 = vmatprep.subr.mxu0 0.0
        %2437 = vmatpush1.msra.mxu0 0.0
        %2438 = vmatprep.subr.mxu0 0.0
        %2439 = vmatpush1.msra.mxu0 0.0
        %2440 = vmatprep.subr.mxu0 0.0
        %2441 = vmatpush1.msra.mxu0 0.0
        %2442 = vmatprep.subr.mxu0 0.0
        %2443 = vmatpush1.msra.mxu0 0.0
        %2444 = vmatprep.subr.mxu0 0.0
        %2445 = vmatpush1.msra.mxu0 0.0
        %2446 = vmatprep.subr.mxu0 0.0
        %2447 = vmatpush1.msra.mxu0 0.0
        %2448 = vmatprep.subr.mxu0 0.0
        %2449 = vmatpush1.msra.mxu0 0.0
        %2450 = vmatprep.subr.mxu0 0.0
        %2451 = vmatpush1.msra.mxu0 0.0
        %2452 = vmatprep.subr.mxu0 0.0
        %2453 = vmatpush1.msra.mxu0 0.0
        %2454 = vmatprep.subr.mxu0 0.0
        %2455 = vmatpush1.msra.mxu0 0.0
        %2456 = vmatprep.subr.mxu0 0.0
        %2457 = vmatpush1.msra.mxu0 0.0
        %2458 = vmatprep.subr.mxu0 0.0
        %2459 = vmatpush1.msra.mxu0 0.0
        %2460 = vmatprep.subr.mxu0 0.0
        %2461 = vmatpush1.msra.mxu0 0.0
        %2462 = vmatprep.subr.mxu0 0.0
        %2463 = vmatpush1.msra.mxu0 0.0
        %2464 = vmatprep.subr.mxu0 0.0
        %2465 = vmatpush1.msra.mxu0 0.0
        %2466 = vmatprep.subr.mxu0 0.0
        %2467 = vmatpush1.msra.mxu0 0.0
        %2468 = vmatprep.subr.mxu0 0.0
        %2469 = vmatpush1.msra.mxu0 0.0
        %2470 = vmatprep.subr.mxu0 0.0
        %2471 = vmatpush1.msra.mxu0 0.0
        %2472 = vmatprep.subr.mxu0 0.0
        %2473 = vmatpush1.msra.mxu0 0.0
        %2474 = vmatprep.subr.mxu0 0.0
        %2475 = vmatpush1.msra.mxu0 0.0
        %2476 = vmatprep.mubr.f32.mxu0 0.0
        %2477 = vmatmul.mubr.f32.gmra.mrb[0].mxu0 %v2324
        %v2478 = vpop.f32.mrb[0].mxu0
        %v2479 = vadd.f32 %v2410, %v2478
        %v2480 = vpop.f32.mrb[0].mxu0
        %2481 = vdwg.mxu0
        %v2482 = vmax.f32 %v2479, 0.0
        %v2483 = vld [vmem:[%s3] sm:$0xff]
        %v2484 = vld [vmem:[%s3 + $0x8] sm:$0xff]
        %v2485 = vld [vmem:[%s3 + $0x10] sm:$0xff]
        %vm2486 = vcmask 64512
        %v2488 = vsel %vm2486, %v2483, 0
        %v2491 = vsel %vm2486, %v2484, 0
        %v2494 = vsel %vm2486, %v2485, 0
        %2496 = vmatprep.subr.mxu0 0.0
        %2497 = vmatpush1.msra.mxu0 %v2482
        %2498 = vmatprep.subr.mxu0 0.0
        %2499 = vmatpush1.msra.mxu0 0.0
        %2500 = vmatprep.subr.mxu0 0.0
        %2501 = vmatpush1.msra.mxu0 0.0
        %2502 = vmatprep.subr.mxu0 0.0
        %2503 = vmatpush1.msra.mxu0 0.0
        %2504 = vmatprep.subr.mxu0 0.0
        %2505 = vmatpush1.msra.mxu0 0.0
        %2506 = vmatprep.subr.mxu0 0.0
        %2507 = vmatpush1.msra.mxu0 0.0
        %2508 = vmatprep.subr.mxu0 0.0
        %2509 = vmatpush1.msra.mxu0 0.0
        %2510 = vmatprep.subr.mxu0 0.0
        %2511 = vmatpush1.msra.mxu0 0.0
        %2512 = vmatprep.subr.mxu0 0.0
        %2513 = vmatpush1.msra.mxu0 0.0
        %2514 = vmatprep.subr.mxu0 0.0
        %2515 = vmatpush1.msra.mxu0 0.0
        %2516 = vmatprep.subr.mxu0 0.0
        %2517 = vmatpush1.msra.mxu0 0.0
        %2518 = vmatprep.subr.mxu0 0.0
        %2519 = vmatpush1.msra.mxu0 0.0
        %2520 = vmatprep.subr.mxu0 0.0
        %2521 = vmatpush1.msra.mxu0 0.0
        %2522 = vmatprep.subr.mxu0 0.0
        %2523 = vmatpush1.msra.mxu0 0.0
        %2524 = vmatprep.subr.mxu0 0.0
        %2525 = vmatpush1.msra.mxu0 0.0
        %2526 = vmatprep.subr.mxu0 0.0
        %2527 = vmatpush1.msra.mxu0 0.0
        %2528 = vmatprep.subr.mxu0 0.0
        %2529 = vmatpush1.msra.mxu0 0.0
        %2530 = vmatprep.subr.mxu0 0.0
        %2531 = vmatpush1.msra.mxu0 0.0
        %2532 = vmatprep.subr.mxu0 0.0
        %2533 = vmatpush1.msra.mxu0 0.0
        %2534 = vmatprep.subr.mxu0 0.0
        %2535 = vmatpush1.msra.mxu0 0.0
        %2536 = vmatprep.subr.mxu0 0.0
        %2537 = vmatpush1.msra.mxu0 0.0
        %2538 = vmatprep.subr.mxu0 0.0
        %2539 = vmatpush1.msra.mxu0 0.0
        %2540 = vmatprep.subr.mxu0 0.0
        %2541 = vmatpush1.msra.mxu0 0.0
        %2542 = vmatprep.subr.mxu0 0.0
        %2543 = vmatpush1.msra.mxu0 0.0
        %2544 = vmatprep.subr.mxu0 0.0
        %2545 = vmatpush1.msra.mxu0 0.0
        %2546 = vmatprep.subr.mxu0 0.0
        %2547 = vmatpush1.msra.mxu0 0.0
        %2548 = vmatprep.subr.mxu0 0.0
        %2549 = vmatpush1.msra.mxu0 0.0
        %2550 = vmatprep.subr.mxu0 0.0
        %2551 = vmatpush1.msra.mxu0 0.0
        %2552 = vmatprep.subr.mxu0 0.0
        %2553 = vmatpush1.msra.mxu0 0.0
        %2554 = vmatprep.subr.mxu0 0.0
        %2555 = vmatpush1.msra.mxu0 0.0
        %2556 = vmatprep.subr.mxu0 0.0
        %2557 = vmatpush1.msra.mxu0 0.0
        %2558 = vmatprep.subr.mxu0 0.0
        %2559 = vmatpush1.msra.mxu0 0.0
        %2560 = vmatprep.mubr.f32.mxu0 0.0
        %2561 = vmatmul.mubr.f32.gmra.mrb[0].mxu0 %v2488
        %v2562 = vpop.f32.mrb[0].mxu0
        %v2563 = vadd.f32 0.0, %v2562
        %v2564 = vpop.f32.mrb[0].mxu0
        %2565 = vmatprep.mubr.f32.mxu0 0.0
        %2566 = vmatmul.mubr.f32.gmra.mrb[0].mxu0 %v2491
        %v2567 = vpop.f32.mrb[0].mxu0
        %v2568 = vadd.f32 0.0, %v2567
        %v2569 = vpop.f32.mrb[0].mxu0
        %2570 = vmatprep.mubr.f32.mxu0 0.0
        %2571 = vmatmul.mubr.f32.gmra.mrb[0].mxu0 %v2494
        %v2572 = vpop.f32.mrb[0].mxu0
        %v2573 = vadd.f32 0.0, %v2572
        %v2574 = vpop.f32.mrb[0].mxu0
        %2575 = vdwg.mxu0
        %v2576 = vld [vmem:[%s16] sm:$0xff]
        %v2577 = vld [vmem:[%s16 + $0x8] sm:$0xff]
        %v2578 = vld [vmem:[%s16 + $0x10] sm:$0xff]
        %v2579 = vld [vmem:[%s16 + $0x18] sm:$0xff]
        %v2580 = vld [vmem:[%s16 + $0x20] sm:$0xff]
        %v2581 = vld [vmem:[%s16 + $0x28] sm:$0xff]
        %v2582 = vld [vmem:[%s16 + $0x30] sm:$0xff]
        %v2583 = vld [vmem:[%s16 + $0x38] sm:$0xff]
        %v2584 = vld [vmem:[%s16 + $0x40] sm:$0xff]
        %v2585 = vld [vmem:[%s16 + $0x48] sm:$0xff]
        %v2586 = vld [vmem:[%s16 + $0x50] sm:$0xff]
        %v2587 = vld [vmem:[%s16 + $0x58] sm:$0xff]
        %v2588 = vld [vmem:[%s16 + $0x60] sm:$0xff]
        %v2589 = vld [vmem:[%s16 + $0x68] sm:$0xff]
        %v2590 = vld [vmem:[%s16 + $0x70] sm:$0xff]
        %v2591 = vld [vmem:[%s16 + $0x78] sm:$0xff]
        %v2593 = vsel %vm2322, %v2563, 0
        %2595 = vmatprep.subr.mxu0 0.0
        %2596 = vmatpush1.msra.mxu0 %v2584
        %2597 = vmatprep.subr.mxu0 0.0
        %2598 = vmatpush1.msra.mxu0 %v2585
        %2599 = vmatprep.subr.mxu0 0.0
        %2600 = vmatpush1.msra.mxu0 %v2586
        %2601 = vmatprep.subr.mxu0 0.0
        %2602 = vmatpush1.msra.mxu0 %v2587
        %2603 = vmatprep.subr.mxu0 0.0
        %2604 = vmatpush1.msra.mxu0 %v2588
        %2605 = vmatprep.subr.mxu0 0.0
        %2606 = vmatpush1.msra.mxu0 %v2589
        %2607 = vmatprep.subr.mxu0 0.0
        %2608 = vmatpush1.msra.mxu0 %v2590
        %2609 = vmatprep.subr.mxu0 0.0
        %2610 = vmatpush1.msra.mxu0 %v2591
        %2611 = vmatprep.subr.mxu0 0.0
        %2612 = vmatpush1.msra.mxu0 0.0
        %2613 = vmatprep.subr.mxu0 0.0
        %2614 = vmatpush1.msra.mxu0 0.0
        %2615 = vmatprep.subr.mxu0 0.0
        %2616 = vmatpush1.msra.mxu0 0.0
        %2617 = vmatprep.subr.mxu0 0.0
        %2618 = vmatpush1.msra.mxu0 0.0
        %2619 = vmatprep.subr.mxu0 0.0
        %2620 = vmatpush1.msra.mxu0 0.0
        %2621 = vmatprep.subr.mxu0 0.0
        %2622 = vmatpush1.msra.mxu0 0.0
        %2623 = vmatprep.subr.mxu0 0.0
        %2624 = vmatpush1.msra.mxu0 0.0
        %2625 = vmatprep.subr.mxu0 0.0
        %2626 = vmatpush1.msra.mxu0 0.0
        %2627 = vmatprep.subr.mxu0 0.0
        %2628 = vmatpush1.msra.mxu0 0.0
        %2629 = vmatprep.subr.mxu0 0.0
        %2630 = vmatpush1.msra.mxu0 0.0
        %2631 = vmatprep.subr.mxu0 0.0
        %2632 = vmatpush1.msra.mxu0 0.0
        %2633 = vmatprep.subr.mxu0 0.0
        %2634 = vmatpush1.msra.mxu0 0.0
        %2635 = vmatprep.subr.mxu0 0.0
        %2636 = vmatpush1.msra.mxu0 0.0
        %2637 = vmatprep.subr.mxu0 0.0
        %2638 = vmatpush1.msra.mxu0 0.0
        %2639 = vmatprep.subr.mxu0 0.0
        %2640 = vmatpush1.msra.mxu0 0.0
        %2641 = vmatprep.subr.mxu0 0.0
        %2642 = vmatpush1.msra.mxu0 0.0
        %2643 = vmatprep.subr.mxu0 0.0
        %2644 = vmatpush1.msra.mxu0 0.0
        %2645 = vmatprep.subr.mxu0 0.0
        %2646 = vmatpush1.msra.mxu0 0.0
        %2647 = vmatprep.subr.mxu0 0.0
        %2648 = vmatpush1.msra.mxu0 0.0
        %2649 = vmatprep.subr.mxu0 0.0
        %2650 = vmatpush1.msra.mxu0 0.0
        %2651 = vmatprep.subr.mxu0 0.0
        %2652 = vmatpush1.msra.mxu0 0.0
        %2653 = vmatprep.subr.mxu0 0.0
        %2654 = vmatpush1.msra.mxu0 0.0
        %2655 = vmatprep.subr.mxu0 0.0
        %2656 = vmatpush1.msra.mxu0 0.0
        %2657 = vmatprep.subr.mxu0 0.0
        %2658 = vmatpush1.msra.mxu0 0.0
        %2659 = vmatprep.mubr.f32.mxu0 0.0
        %2660 = vmatmul.mubr.f32.gmra.mrb[0].mxu0 %v2593
        %v2661 = vpop.f32.mrb[0].mxu0
        %v2662 = vadd.f32 0.0, %v2661
        %v2663 = vpop.f32.mrb[0].mxu0
        %2664 = vdwg.mxu0
        %v2666 = vsel %vm2322, %v2482, 0
        %2668 = vmatprep.subr.mxu0 0.0
        %2669 = vmatpush1.msra.mxu0 %v2576
        %2670 = vmatprep.subr.mxu0 0.0
        %2671 = vmatpush1.msra.mxu0 %v2577
        %2672 = vmatprep.subr.mxu0 0.0
        %2673 = vmatpush1.msra.mxu0 %v2578
        %2674 = vmatprep.subr.mxu0 0.0
        %2675 = vmatpush1.msra.mxu0 %v2579
        %2676 = vmatprep.subr.mxu0 0.0
        %2677 = vmatpush1.msra.mxu0 %v2580
        %2678 = vmatprep.subr.mxu0 0.0
        %2679 = vmatpush1.msra.mxu0 %v2581
        %2680 = vmatprep.subr.mxu0 0.0
        %2681 = vmatpush1.msra.mxu0 %v2582
        %2682 = vmatprep.subr.mxu0 0.0
        %2683 = vmatpush1.msra.mxu0 %v2583
        %2684 = vmatprep.subr.mxu0 0.0
        %2685 = vmatpush1.msra.mxu0 0.0
        %2686 = vmatprep.subr.mxu0 0.0
        %2687 = vmatpush1.msra.mxu0 0.0
        %2688 = vmatprep.subr.mxu0 0.0
        %2689 = vmatpush1.msra.mxu0 0.0
        %2690 = vmatprep.subr.mxu0 0.0
        %2691 = vmatpush1.msra.mxu0 0.0
        %2692 = vmatprep.subr.mxu0 0.0
        %2693 = vmatpush1.msra.mxu0 0.0
        %2694 = vmatprep.subr.mxu0 0.0
        %2695 = vmatpush1.msra.mxu0 0.0
        %2696 = vmatprep.subr.mxu0 0.0
        %2697 = vmatpush1.msra.mxu0 0.0
        %2698 = vmatprep.subr.mxu0 0.0
        %2699 = vmatpush1.msra.mxu0 0.0
        %2700 = vmatprep.subr.mxu0 0.0
        %2701 = vmatpush1.msra.mxu0 0.0
        %2702 = vmatprep.subr.mxu0 0.0
        %2703 = vmatpush1.msra.mxu0 0.0
        %2704 = vmatprep.subr.mxu0 0.0
        %2705 = vmatpush1.msra.mxu0 0.0
        %2706 = vmatprep.subr.mxu0 0.0
        %2707 = vmatpush1.msra.mxu0 0.0
        %2708 = vmatprep.subr.mxu0 0.0
        %2709 = vmatpush1.msra.mxu0 0.0
        %2710 = vmatprep.subr.mxu0 0.0
        %2711 = vmatpush1.msra.mxu0 0.0
        %2712 = vmatprep.subr.mxu0 0.0
        %2713 = vmatpush1.msra.mxu0 0.0
        %2714 = vmatprep.subr.mxu0 0.0
        %2715 = vmatpush1.msra.mxu0 0.0
        %2716 = vmatprep.subr.mxu0 0.0
        %2717 = vmatpush1.msra.mxu0 0.0
        %2718 = vmatprep.subr.mxu0 0.0
        %2719 = vmatpush1.msra.mxu0 0.0
        %2720 = vmatprep.subr.mxu0 0.0
        %2721 = vmatpush1.msra.mxu0 0.0
        %2722 = vmatprep.subr.mxu0 0.0
        %2723 = vmatpush1.msra.mxu0 0.0
        %2724 = vmatprep.subr.mxu0 0.0
        %2725 = vmatpush1.msra.mxu0 0.0
        %2726 = vmatprep.subr.mxu0 0.0
        %2727 = vmatpush1.msra.mxu0 0.0
        %2728 = vmatprep.subr.mxu0 0.0
        %2729 = vmatpush1.msra.mxu0 0.0
        %2730 = vmatprep.subr.mxu0 0.0
        %2731 = vmatpush1.msra.mxu0 0.0
        %2732 = vmatprep.mubr.f32.mxu0 0.0
        %2733 = vmatmul.mubr.f32.gmra.mrb[0].mxu0 %v2666
        %v2734 = vpop.f32.mrb[0].mxu0
        %v2735 = vadd.f32 %v2662, %v2734
        %v2736 = vpop.f32.mrb[0].mxu0
        %2737 = vdwg.mxu0
        %v2738 = vld [vmem:[%s16 + $0x80] sm:$0xff]
        %v2739 = vld [vmem:[%s16 + $0x88] sm:$0xff]
        %v2740 = vld [vmem:[%s16 + $0x90] sm:$0xff]
        %v2741 = vld [vmem:[%s16 + $0x98] sm:$0xff]
        %v2742 = vld [vmem:[%s16 + $0xa0] sm:$0xff]
        %v2743 = vld [vmem:[%s16 + $0xa8] sm:$0xff]
        %v2744 = vld [vmem:[%s16 + $0xb0] sm:$0xff]
        %v2745 = vld [vmem:[%s16 + $0xb8] sm:$0xff]
        %v2747 = vsel %vm2322, %v2568, 0
        %2749 = vmatprep.subr.mxu0 0.0
        %2750 = vmatpush1.msra.mxu0 %v2738
        %2751 = vmatprep.subr.mxu0 0.0
        %2752 = vmatpush1.msra.mxu0 %v2739
        %2753 = vmatprep.subr.mxu0 0.0
        %2754 = vmatpush1.msra.mxu0 %v2740
        %2755 = vmatprep.subr.mxu0 0.0
        %2756 = vmatpush1.msra.mxu0 %v2741
        %2757 = vmatprep.subr.mxu0 0.0
        %2758 = vmatpush1.msra.mxu0 %v2742
        %2759 = vmatprep.subr.mxu0 0.0
        %2760 = vmatpush1.msra.mxu0 %v2743
        %2761 = vmatprep.subr.mxu0 0.0
        %2762 = vmatpush1.msra.mxu0 %v2744
        %2763 = vmatprep.subr.mxu0 0.0
        %2764 = vmatpush1.msra.mxu0 %v2745
        %2765 = vmatprep.subr.mxu0 0.0
        %2766 = vmatpush1.msra.mxu0 0.0
        %2767 = vmatprep.subr.mxu0 0.0
        %2768 = vmatpush1.msra.mxu0 0.0
        %2769 = vmatprep.subr.mxu0 0.0
        %2770 = vmatpush1.msra.mxu0 0.0
        %2771 = vmatprep.subr.mxu0 0.0
        %2772 = vmatpush1.msra.mxu0 0.0
        %2773 = vmatprep.subr.mxu0 0.0
        %2774 = vmatpush1.msra.mxu0 0.0
        %2775 = vmatprep.subr.mxu0 0.0
        %2776 = vmatpush1.msra.mxu0 0.0
        %2777 = vmatprep.subr.mxu0 0.0
        %2778 = vmatpush1.msra.mxu0 0.0
        %2779 = vmatprep.subr.mxu0 0.0
        %2780 = vmatpush1.msra.mxu0 0.0
        %2781 = vmatprep.subr.mxu0 0.0
        %2782 = vmatpush1.msra.mxu0 0.0
        %2783 = vmatprep.subr.mxu0 0.0
        %2784 = vmatpush1.msra.mxu0 0.0
        %2785 = vmatprep.subr.mxu0 0.0
        %2786 = vmatpush1.msra.mxu0 0.0
        %2787 = vmatprep.subr.mxu0 0.0
        %2788 = vmatpush1.msra.mxu0 0.0
        %2789 = vmatprep.subr.mxu0 0.0
        %2790 = vmatpush1.msra.mxu0 0.0
        %2791 = vmatprep.subr.mxu0 0.0
        %2792 = vmatpush1.msra.mxu0 0.0
        %2793 = vmatprep.subr.mxu0 0.0
        %2794 = vmatpush1.msra.mxu0 0.0
        %2795 = vmatprep.subr.mxu0 0.0
        %2796 = vmatpush1.msra.mxu0 0.0
        %2797 = vmatprep.subr.mxu0 0.0
        %2798 = vmatpush1.msra.mxu0 0.0
        %2799 = vmatprep.subr.mxu0 0.0
        %2800 = vmatpush1.msra.mxu0 0.0
        %2801 = vmatprep.subr.mxu0 0.0
        %2802 = vmatpush1.msra.mxu0 0.0
        %2803 = vmatprep.subr.mxu0 0.0
        %2804 = vmatpush1.msra.mxu0 0.0
        %2805 = vmatprep.subr.mxu0 0.0
        %2806 = vmatpush1.msra.mxu0 0.0
        %2807 = vmatprep.subr.mxu0 0.0
        %2808 = vmatpush1.msra.mxu0 0.0
        %2809 = vmatprep.subr.mxu0 0.0
        %2810 = vmatpush1.msra.mxu0 0.0
        %2811 = vmatprep.subr.mxu0 0.0
        %2812 = vmatpush1.msra.mxu0 0.0
        %2813 = vmatprep.mubr.f32.mxu0 0.0
        %2814 = vmatmul.mubr.f32.gmra.mrb[0].mxu0 %v2747
        %v2815 = vpop.f32.mrb[0].mxu0
        %v2816 = vadd.f32 0.0, %v2815
        %v2817 = vpop.f32.mrb[0].mxu0
        %2818 = vdwg.mxu0
        %v2819 = vadd.f32 %v2735, %v2816
        %v2820 = vld [vmem:[%s16 + $0xc0] sm:$0xff]
        %v2821 = vld [vmem:[%s16 + $0xc8] sm:$0xff]
        %v2822 = vld [vmem:[%s16 + $0xd0] sm:$0xff]
        %v2823 = vld [vmem:[%s16 + $0xd8] sm:$0xff]
        %v2824 = vld [vmem:[%s16 + $0xe0] sm:$0xff]
        %v2825 = vld [vmem:[%s16 + $0xe8] sm:$0xff]
        %v2826 = vld [vmem:[%s16 + $0xf0] sm:$0xff]
        %v2827 = vld [vmem:[%s16 + $0xf8] sm:$0xff]
        %v2829 = vsel %vm2322, %v2573, 0
        %2831 = vmatprep.subr.mxu0 0.0
        %2832 = vmatpush1.msra.mxu0 %v2820
        %2833 = vmatprep.subr.mxu0 0.0
        %2834 = vmatpush1.msra.mxu0 %v2821
        %2835 = vmatprep.subr.mxu0 0.0
        %2836 = vmatpush1.msra.mxu0 %v2822
        %2837 = vmatprep.subr.mxu0 0.0
        %2838 = vmatpush1.msra.mxu0 %v2823
        %2839 = vmatprep.subr.mxu0 0.0
        %2840 = vmatpush1.msra.mxu0 %v2824
        %2841 = vmatprep.subr.mxu0 0.0
        %2842 = vmatpush1.msra.mxu0 %v2825
        %2843 = vmatprep.subr.mxu0 0.0
        %2844 = vmatpush1.msra.mxu0 %v2826
        %2845 = vmatprep.subr.mxu0 0.0
        %2846 = vmatpush1.msra.mxu0 %v2827
        %2847 = vmatprep.subr.mxu0 0.0
        %2848 = vmatpush1.msra.mxu0 0.0
        %2849 = vmatprep.subr.mxu0 0.0
        %2850 = vmatpush1.msra.mxu0 0.0
        %2851 = vmatprep.subr.mxu0 0.0
        %2852 = vmatpush1.msra.mxu0 0.0
        %2853 = vmatprep.subr.mxu0 0.0
        %2854 = vmatpush1.msra.mxu0 0.0
        %2855 = vmatprep.subr.mxu0 0.0
        %2856 = vmatpush1.msra.mxu0 0.0
        %2857 = vmatprep.subr.mxu0 0.0
        %2858 = vmatpush1.msra.mxu0 0.0
        %2859 = vmatprep.subr.mxu0 0.0
        %2860 = vmatpush1.msra.mxu0 0.0
        %2861 = vmatprep.subr.mxu0 0.0
        %2862 = vmatpush1.msra.mxu0 0.0
        %2863 = vmatprep.subr.mxu0 0.0
        %2864 = vmatpush1.msra.mxu0 0.0
        %2865 = vmatprep.subr.mxu0 0.0
        %2866 = vmatpush1.msra.mxu0 0.0
        %2867 = vmatprep.subr.mxu0 0.0
        %2868 = vmatpush1.msra.mxu0 0.0
        %2869 = vmatprep.subr.mxu0 0.0
        %2870 = vmatpush1.msra.mxu0 0.0
        %2871 = vmatprep.subr.mxu0 0.0
        %2872 = vmatpush1.msra.mxu0 0.0
        %2873 = vmatprep.subr.mxu0 0.0
        %2874 = vmatpush1.msra.mxu0 0.0
        %2875 = vmatprep.subr.mxu0 0.0
        %2876 = vmatpush1.msra.mxu0 0.0
        %2877 = vmatprep.subr.mxu0 0.0
        %2878 = vmatpush1.msra.mxu0 0.0
        %2879 = vmatprep.subr.mxu0 0.0
        %2880 = vmatpush1.msra.mxu0 0.0
        %2881 = vmatprep.subr.mxu0 0.0
        %2882 = vmatpush1.msra.mxu0 0.0
        %2883 = vmatprep.subr.mxu0 0.0
        %2884 = vmatpush1.msra.mxu0 0.0
        %2885 = vmatprep.subr.mxu0 0.0
        %2886 = vmatpush1.msra.mxu0 0.0
        %2887 = vmatprep.subr.mxu0 0.0
        %2888 = vmatpush1.msra.mxu0 0.0
        %2889 = vmatprep.subr.mxu0 0.0
        %2890 = vmatpush1.msra.mxu0 0.0
        %2891 = vmatprep.subr.mxu0 0.0
        %2892 = vmatpush1.msra.mxu0 0.0
        %2893 = vmatprep.subr.mxu0 0.0
        %2894 = vmatpush1.msra.mxu0 0.0
        %2895 = vmatprep.mubr.f32.mxu0 0.0
        %2896 = vmatmul.mubr.f32.gmra.mrb[0].mxu0 %v2829
        %v2897 = vpop.f32.mrb[0].mxu0
        %v2898 = vadd.f32 0.0, %v2897
        %v2899 = vpop.f32.mrb[0].mxu0
        %2900 = vdwg.mxu0
        %v2901 = vadd.f32 %v2819, %v2898
        %v2902 = vld [vmem:[#allocation19] sm:$0x1]
        %v2904 = vlaneseq
        %v2905 = vshrl.u32 %v2904, 7
        %v2906 = vsub.s32 0, %v2905
        %v2907 = vrot.slane %v2902, %v2906
        %v2909 = vadd.f32 %v2901, %v2907
        %v2910 = vmax.f32 %v2909, 0.0
        %v2911 = vld [vmem:[%s18] sm:$0xff]
        %v2912 = vld [vmem:[%s18 + $0x8] sm:$0xff]
        %v2913 = vld [vmem:[%s18 + $0x10] sm:$0xff]
        %v2914 = vld [vmem:[%s18 + $0x18] sm:$0xff]
        %v2915 = vld [vmem:[%s18 + $0x20] sm:$0xff]
        %v2916 = vld [vmem:[%s18 + $0x28] sm:$0xff]
        %v2917 = vld [vmem:[%s18 + $0x30] sm:$0xff]
        %v2918 = vld [vmem:[%s18 + $0x38] sm:$0xff]
        %v2919 = vld [vmem:[%s18 + $0x40] sm:$0xff]
        %v2920 = vld [vmem:[%s18 + $0x48] sm:$0xff]
        %v2921 = vld [vmem:[%s18 + $0x50] sm:$0xff]
        %v2922 = vld [vmem:[%s18 + $0x58] sm:$0xff]
        %v2923 = vld [vmem:[%s18 + $0x60] sm:$0xff]
        %v2924 = vld [vmem:[%s18 + $0x68] sm:$0xff]
        %v2925 = vld [vmem:[%s18 + $0x70] sm:$0xff]
        %v2926 = vld [vmem:[%s18 + $0x78] sm:$0xff]
        %v2927 = vld [vmem:[#allocation20] sm:$0x3]
        %v2929 = vlaneseq
        %v2930 = vshrl.u32 %v2929, 7
        %v2931 = vsub.s32 0, %v2930
        %v2932 = vrot.slane %v2927, %v2931
        %v2933 = vlaneseq
        %v2934 = vshrl.u32 %v2933, 7
        %v2935 = vsub.s32 1, %v2934
        %v2936 = vrot.slane %v2927, %v2935
        %v2940 = vsel %vm2322, %v2910, 0
        %2942 = vmatprep.subr.mxu0 %v2912
        %2943 = vmatpush1.msra.mxu0 %v2911
        %2944 = vmatprep.subr.mxu0 %v2914
        %2945 = vmatpush1.msra.mxu0 %v2913
        %2946 = vmatprep.subr.mxu0 %v2916
        %2947 = vmatpush1.msra.mxu0 %v2915
        %2948 = vmatprep.subr.mxu0 %v2918
        %2949 = vmatpush1.msra.mxu0 %v2917
        %2950 = vmatprep.subr.mxu0 %v2920
        %2951 = vmatpush1.msra.mxu0 %v2919
        %2952 = vmatprep.subr.mxu0 %v2922
        %2953 = vmatpush1.msra.mxu0 %v2921
        %2954 = vmatprep.subr.mxu0 %v2924
        %2955 = vmatpush1.msra.mxu0 %v2923
        %2956 = vmatprep.subr.mxu0 %v2926
        %2957 = vmatpush1.msra.mxu0 %v2925
        %2958 = vmatprep.subr.mxu0 0.0
        %2959 = vmatpush1.msra.mxu0 0.0
        %2960 = vmatprep.subr.mxu0 0.0
        %2961 = vmatpush1.msra.mxu0 0.0
        %2962 = vmatprep.subr.mxu0 0.0
        %2963 = vmatpush1.msra.mxu0 0.0
        %2964 = vmatprep.subr.mxu0 0.0
        %2965 = vmatpush1.msra.mxu0 0.0
        %2966 = vmatprep.subr.mxu0 0.0
        %2967 = vmatpush1.msra.mxu0 0.0
        %2968 = vmatprep.subr.mxu0 0.0
        %2969 = vmatpush1.msra.mxu0 0.0
        %2970 = vmatprep.subr.mxu0 0.0
        %2971 = vmatpush1.msra.mxu0 0.0
        %2972 = vmatprep.subr.mxu0 0.0
        %2973 = vmatpush1.msra.mxu0 0.0
        %2974 = vmatprep.subr.mxu0 0.0
        %2975 = vmatpush1.msra.mxu0 0.0
        %2976 = vmatprep.subr.mxu0 0.0
        %2977 = vmatpush1.msra.mxu0 0.0
        %2978 = vmatprep.subr.mxu0 0.0
        %2979 = vmatpush1.msra.mxu0 0.0
        %2980 = vmatprep.subr.mxu0 0.0
        %2981 = vmatpush1.msra.mxu0 0.0
        %2982 = vmatprep.subr.mxu0 0.0
        %2983 = vmatpush1.msra.mxu0 0.0
        %2984 = vmatprep.subr.mxu0 0.0
        %2985 = vmatpush1.msra.mxu0 0.0
        %2986 = vmatprep.subr.mxu0 0.0
        %2987 = vmatpush1.msra.mxu0 0.0
        %2988 = vmatprep.subr.mxu0 0.0
        %2989 = vmatpush1.msra.mxu0 0.0
        %2990 = vmatprep.subr.mxu0 0.0
        %2991 = vmatpush1.msra.mxu0 0.0
        %2992 = vmatprep.subr.mxu0 0.0
        %2993 = vmatpush1.msra.mxu0 0.0
        %2994 = vmatprep.subr.mxu0 0.0
        %2995 = vmatpush1.msra.mxu0 0.0
        %2996 = vmatprep.subr.mxu0 0.0
        %2997 = vmatpush1.msra.mxu0 0.0
        %2998 = vmatprep.subr.mxu0 0.0
        %2999 = vmatpush1.msra.mxu0 0.0
        %3000 = vmatprep.subr.mxu0 0.0
        %3001 = vmatpush1.msra.mxu0 0.0
        %3002 = vmatprep.subr.mxu0 0.0
        %3003 = vmatpush1.msra.mxu0 0.0
        %3004 = vmatprep.subr.mxu0 0.0
        %3005 = vmatpush1.msra.mxu0 0.0
        %3006 = vmatprep.mubr.f32.mxu0 0.0
        %3007 = vmatmul.mubr.f32.gmra.mrb[0].mxu0 %v2940
        %v3008 = vpop.f32.mrb[0].mxu0
        %v3009 = vadd.f32 %v2932, %v3008
        %v3010 = vpop.f32.mrb[0].mxu0
        %v3011 = vadd.f32 %v2936, %v3010
        %3012 = vdwg.mxu0
        %v3013 = vadd.f32 %v3009, %v2393
        %v3014 = vadd.f32 %v3011, %v2395
        %v3015 = vmax.f32 %v3013, 0.0
        %v3016 = vmax.f32 %v3014, 0.0
        %v3018 = vsel %vm2486, 1.0, 0
        %3020 = vmatprep.subr.mxu0 %v3016
        %3021 = vmatpush1.msra.mxu0 %v3015
        %3022 = vmatprep.subr.mxu0 0.0
        %3023 = vmatpush1.msra.mxu0 0.0
        %3024 = vmatprep.subr.mxu0 0.0
        %3025 = vmatpush1.msra.mxu0 0.0
        %3026 = vmatprep.subr.mxu0 0.0
        %3027 = vmatpush1.msra.mxu0 0.0
        %3028 = vmatprep.subr.mxu0 0.0
        %3029 = vmatpush1.msra.mxu0 0.0
        %3030 = vmatprep.subr.mxu0 0.0
        %3031 = vmatpush1.msra.mxu0 0.0
        %3032 = vmatprep.subr.mxu0 0.0
        %3033 = vmatpush1.msra.mxu0 0.0
        %3034 = vmatprep.subr.mxu0 0.0
        %3035 = vmatpush1.msra.mxu0 0.0
        %3036 = vmatprep.subr.mxu0 0.0
        %3037 = vmatpush1.msra.mxu0 0.0
        %3038 = vmatprep.subr.mxu0 0.0
        %3039 = vmatpush1.msra.mxu0 0.0
        %3040 = vmatprep.subr.mxu0 0.0
        %3041 = vmatpush1.msra.mxu0 0.0
        %3042 = vmatprep.subr.mxu0 0.0
        %3043 = vmatpush1.msra.mxu0 0.0
        %3044 = vmatprep.subr.mxu0 0.0
        %3045 = vmatpush1.msra.mxu0 0.0
        %3046 = vmatprep.subr.mxu0 0.0
        %3047 = vmatpush1.msra.mxu0 0.0
        %3048 = vmatprep.subr.mxu0 0.0
        %3049 = vmatpush1.msra.mxu0 0.0
        %3050 = vmatprep.subr.mxu0 0.0
        %3051 = vmatpush1.msra.mxu0 0.0
        %3052 = vmatprep.subr.mxu0 0.0
        %3053 = vmatpush1.msra.mxu0 0.0
        %3054 = vmatprep.subr.mxu0 0.0
        %3055 = vmatpush1.msra.mxu0 0.0
        %3056 = vmatprep.subr.mxu0 0.0
        %3057 = vmatpush1.msra.mxu0 0.0
        %3058 = vmatprep.subr.mxu0 0.0
        %3059 = vmatpush1.msra.mxu0 0.0
        %3060 = vmatprep.subr.mxu0 0.0
        %3061 = vmatpush1.msra.mxu0 0.0
        %3062 = vmatprep.subr.mxu0 0.0
        %3063 = vmatpush1.msra.mxu0 0.0
        %3064 = vmatprep.subr.mxu0 0.0
        %3065 = vmatpush1.msra.mxu0 0.0
        %3066 = vmatprep.subr.mxu0 0.0
        %3067 = vmatpush1.msra.mxu0 0.0
        %3068 = vmatprep.subr.mxu0 0.0
        %3069 = vmatpush1.msra.mxu0 0.0
        %3070 = vmatprep.subr.mxu0 0.0
        %3071 = vmatpush1.msra.mxu0 0.0
        %3072 = vmatprep.subr.mxu0 0.0
        %3073 = vmatpush1.msra.mxu0 0.0
        %3074 = vmatprep.subr.mxu0 0.0
        %3075 = vmatpush1.msra.mxu0 0.0
        %3076 = vmatprep.subr.mxu0 0.0
        %3077 = vmatpush1.msra.mxu0 0.0
        %3078 = vmatprep.subr.mxu0 0.0
        %3079 = vmatpush1.msra.mxu0 0.0
        %3080 = vmatprep.subr.mxu0 0.0
        %3081 = vmatpush1.msra.mxu0 0.0
        %3082 = vmatprep.subr.mxu0 0.0
        %3083 = vmatpush1.msra.mxu0 0.0
        %3084 = vmatprep.mubr.f32.mxu0 0.0
        %3085 = vmatmul.mubr.f32.gmra.mrb[0].mxu0 %v3018
        %v3086 = vpop.f32.mrb[0].mxu0
        %v3087 = vadd.f32 0.0, %v3086
        %v3088 = vpop.f32.mrb[0].mxu0
        %v3089 = vadd.f32 0.0, %v3088
        %3090 = vdwg.mxu0
        %v3091 = vld [vmem:[%s22] sm:$0xff]
        %v3092 = vld [vmem:[%s22 + $0x8] sm:$0xff]
        %v3093 = vld [vmem:[%s22 + $0x10] sm:$0xff]
        %v3094 = vld [vmem:[%s22 + $0x18] sm:$0xff]
        %v3095 = vld [vmem:[%s22 + $0x20] sm:$0xff]
        %v3096 = vld [vmem:[%s22 + $0x28] sm:$0xff]
        %v3097 = vld [vmem:[%s22 + $0x30] sm:$0xff]
        %v3098 = vld [vmem:[%s22 + $0x38] sm:$0xff]
        %v3099 = vld [vmem:[%s22 + $0x40] sm:$0xff]
        %v3100 = vld [vmem:[%s22 + $0x48] sm:$0xff]
        %v3101 = vld [vmem:[%s22 + $0x50] sm:$0xff]
        %v3102 = vld [vmem:[%s22 + $0x58] sm:$0xff]
        %v3103 = vld [vmem:[%s22 + $0x60] sm:$0xff]
        %v3104 = vld [vmem:[%s22 + $0x68] sm:$0xff]
        %v3105 = vld [vmem:[%s22 + $0x70] sm:$0xff]
        %v3106 = vld [vmem:[%s22 + $0x78] sm:$0xff]
        %v3107 = vld [vmem:[%s22 + $0x80] sm:$0xff]
        %v3108 = vld [vmem:[%s22 + $0x88] sm:$0xff]
        %v3109 = vld [vmem:[%s22 + $0x90] sm:$0xff]
        %v3110 = vld [vmem:[%s22 + $0x98] sm:$0xff]
        %v3111 = vld [vmem:[%s22 + $0xa0] sm:$0xff]
        %v3112 = vld [vmem:[%s22 + $0xa8] sm:$0xff]
        %v3113 = vld [vmem:[%s22 + $0xb0] sm:$0xff]
        %v3114 = vld [vmem:[%s22 + $0xb8] sm:$0xff]
        %v3115 = vld [vmem:[%s22 + $0xc0] sm:$0xff]
        %v3116 = vld [vmem:[%s22 + $0xc8] sm:$0xff]
        %v3117 = vld [vmem:[%s22 + $0xd0] sm:$0xff]
        %v3118 = vld [vmem:[%s22 + $0xd8] sm:$0xff]
        %v3119 = vld [vmem:[%s22 + $0xe0] sm:$0xff]
        %v3120 = vld [vmem:[%s22 + $0xe8] sm:$0xff]
        %v3121 = vld [vmem:[%s22 + $0xf0] sm:$0xff]
        %v3122 = vld [vmem:[%s22 + $0xf8] sm:$0xff]
        %v3123 = vld [vmem:[#allocation23] sm:$0x1]
        %3124 = vmatprep.subr.mxu0 0.0
        %3125 = vmatpush1.msra.mxu0 %v3091
        %3126 = vmatprep.subr.mxu0 0.0
        %3127 = vmatpush1.msra.mxu0 %v3092
        %3128 = vmatprep.subr.mxu0 0.0
        %3129 = vmatpush1.msra.mxu0 %v3093
        %3130 = vmatprep.subr.mxu0 0.0
        %3131 = vmatpush1.msra.mxu0 %v3094
        %3132 = vmatprep.subr.mxu0 0.0
        %3133 = vmatpush1.msra.mxu0 %v3095
        %3134 = vmatprep.subr.mxu0 0.0
        %3135 = vmatpush1.msra.mxu0 %v3096
        %3136 = vmatprep.subr.mxu0 0.0
        %3137 = vmatpush1.msra.mxu0 %v3097
        %3138 = vmatprep.subr.mxu0 0.0
        %3139 = vmatpush1.msra.mxu0 %v3098
        %3140 = vmatprep.subr.mxu0 0.0
        %3141 = vmatpush1.msra.mxu0 %v3099
        %3142 = vmatprep.subr.mxu0 0.0
        %3143 = vmatpush1.msra.mxu0 %v3100
        %3144 = vmatprep.subr.mxu0 0.0
        %3145 = vmatpush1.msra.mxu0 %v3101
        %3146 = vmatprep.subr.mxu0 0.0
        %3147 = vmatpush1.msra.mxu0 %v3102
        %3148 = vmatprep.subr.mxu0 0.0
        %3149 = vmatpush1.msra.mxu0 %v3103
        %3150 = vmatprep.subr.mxu0 0.0
        %3151 = vmatpush1.msra.mxu0 %v3104
        %3152 = vmatprep.subr.mxu0 0.0
        %3153 = vmatpush1.msra.mxu0 %v3105
        %3154 = vmatprep.subr.mxu0 0.0
        %3155 = vmatpush1.msra.mxu0 %v3106
        %3156 = vmatprep.subr.mxu0 0.0
        %3157 = vmatpush1.msra.mxu0 %v3107
        %3158 = vmatprep.subr.mxu0 0.0
        %3159 = vmatpush1.msra.mxu0 %v3108
        %3160 = vmatprep.subr.mxu0 0.0
        %3161 = vmatpush1.msra.mxu0 %v3109
        %3162 = vmatprep.subr.mxu0 0.0
        %3163 = vmatpush1.msra.mxu0 %v3110
        %3164 = vmatprep.subr.mxu0 0.0
        %3165 = vmatpush1.msra.mxu0 %v3111
        %3166 = vmatprep.subr.mxu0 0.0
        %3167 = vmatpush1.msra.mxu0 %v3112
        %3168 = vmatprep.subr.mxu0 0.0
        %3169 = vmatpush1.msra.mxu0 %v3113
        %3170 = vmatprep.subr.mxu0 0.0
        %3171 = vmatpush1.msra.mxu0 %v3114
        %3172 = vmatprep.subr.mxu0 0.0
        %3173 = vmatpush1.msra.mxu0 %v3115
        %3174 = vmatprep.subr.mxu0 0.0
        %3175 = vmatpush1.msra.mxu0 %v3116
        %3176 = vmatprep.subr.mxu0 0.0
        %3177 = vmatpush1.msra.mxu0 %v3117
        %3178 = vmatprep.subr.mxu0 0.0
        %3179 = vmatpush1.msra.mxu0 %v3118
        %3180 = vmatprep.subr.mxu0 0.0
        %3181 = vmatpush1.msra.mxu0 %v3119
        %3182 = vmatprep.subr.mxu0 0.0
        %3183 = vmatpush1.msra.mxu0 %v3120
        %3184 = vmatprep.subr.mxu0 0.0
        %3185 = vmatpush1.msra.mxu0 %v3121
        %3186 = vmatprep.subr.mxu0 0.0
        %3187 = vmatpush1.msra.mxu0 %v3122
        %3188 = vmatprep.mubr.f32.mxu0 %v3089
        %3189 = vmatmul.mubr.f32.gmra.mrb[0].mxu0 %v3087
        %v3190 = vpop.f32.mrb[0].mxu0
        %v3191 = vadd.f32 %v3123, %v3190
        %v3192 = vpop.f32.mrb[0].mxu0
        %3193 = vdwg.mxu0
        %vm3194 = vcmask 1040384
        %v3195 = vsel %vm3194, %v3191, -inf
        %3196 = vmax.xlane.f32.xlu0 %v3195
        %v3197 = vpop.xlane.xlu0 %3196
        %v3198 = vsub.f32 %v3191, %v3197
        %v3199 = vmul.f32 %v3198, 1.442695
        %v3200 = vpow.pop %v3199
        %v3201 = vsel %vm3194, %v3200, 0.0
        %3202 = vadd.xlane.f32.xlu0 %v3201
        %v3203 = vpop.xlane.xlu0 %3202
        %v3204 = vlog2.pop %v3203
        %v3205 = vmul.f32 %v3204, 0.6931472
        %v3206 = vsub.f32 %v3198, %v3205
        %3207 = vst [vmem:[%s915] sm:$0x1] %v3206
        %s3208 = sand.u32 %s563, 1
        %s3209 = scalar_lea.sflag [#allocation4], %s3208
        %s3210 = sand.u32 %s563, 1
        %s3211 = scalar_lea.vmem [#allocation25], %s3210
        // Predicated region
        $region173: #{model_forward.1} parent=115 // pred_check
          %p3212 = pneg %p573
        $region174: #{model_forward.1} parent=115 // pred_check_branch
          %3214 = sbr.rel (%p3212) target = $region176
        $region175: #{model_forward.1} parent=115 // pred_region
          %s3216 = ssub.s32 16, 16
          %3217 = vsyncadd %s3209, %s3216
          %s3218 = smul.addr %s46, 16
          %s3219 = scalar_lea.hbm %s24, %s3218
          %s3221 = sshll.u32 %s3211, 4
          %s3222 = int_to_ptr.vmem [resolvable:$true] %s3221
          %3224 = dma.vmem_to_hbm [thread:$0]  %s3222, 16, %s3219, %s3209
        $region176: #{model_forward.1} parent=115 // pred_fallthru
          _
      $region116: #{model_forward.1} parent=5 // pred_fallthru
        _
      %p3225 = scmp.le.s32.totalorder 2, %s41
      // Predicated region
      $region177: #{model_forward.1} parent=5 // pred_check
        %p3226 = pneg %p3225
      $region178: #{model_forward.1} parent=5 // pred_check_branch
        %3228 = sbr.rel (%p3226) target = $region180
      $region179: #{model_forward.1} parent=5 // pred_region
        %s3229 = ssub.s32 %s41, 2
        // Predicated region
        $region181: #{model_forward.1} parent=179 // pred_check
          %p3230 = pneg %p579
        $region182: #{model_forward.1} parent=179 // pred_check_branch
          %3232 = sbr.rel (%p3230) target = $region184
        $region183: #{model_forward.1} parent=179 // pred_region
          %s3233 = sand.u32 %s564, 1
          %s3234 = scalar_lea.sflag [#allocation4], %s3233
          %s3235 = sand.u32 %s564, 1
          %s3236 = scalar_lea.vmem [#allocation25], %s3235
          %3237 = dma.done %s3234, 16
        $region184: #{model_forward.1} parent=179 // pred_fallthru
          _
      $region180: #{model_forward.1} parent=5 // pred_fallthru
        _
    $region6: #{model_forward.1} parent=1 // loop_footer
      %s45 = sadd.s32 1, %s41
    $region7: #{model_forward.1} parent=1 // loop_footer_branch
      %40 = sbr.rel target = $region3
    $region8: #{model_forward.1} parent=1 // loop_exit
      _
    %3238 = vsyncpa [#allocation3], 1
    %s3239 = scalar_lea.sflag [#allocation3], 1
    %3240 = vsyncpa %s3239, 1
    %3241 = vsyncpa [#allocation6], 1
    %3242 = vsyncpa [#allocation9], 1
    %3243 = vsyncpa [#allocation12], 1
    %3244 = vsyncpa [#allocation15], 1
    %3245 = vsyncpa [#allocation18], 1
    %3246 = vsyncpa [#allocation21], 1
    %3247 = vsyncpa [#allocation24], 1
    %3248 = vsyncpa [#allocation4], 1
    %s3249 = scalar_lea.sflag [#allocation4], 1
    %3250 = vsyncpa %s3249, 1

</llo_original>
